<compile_context>
chip_gen: v7x
topology: tpu7x:2x2x1
jax: 0.10.0
libtpu: 0.0.40
codegen_flags: <defaults>
</compile_context>

<pallas_src>
import functools

import jax
import jax.numpy as jnp
from jax.experimental import pallas as pl
from jax.experimental.pallas import tpu as pltpu


def _leaky_relu(x, slope=0.2):
    return jnp.where(x > 0, x, slope * x)


def _round_up(n, m):
    return (n + m - 1) // m * m


def generator_kernel(x_ref,
                     w1_ref, b1_ref,
                     w2_ref, b2_ref,
                     w3_ref, b3_ref,
                     w4_ref, b4_ref,
                     o_ref):
    f32 = jnp.float32
    # fc1 + leaky_relu(0.2)   (weights are bf16 in HBM/VMEM, math in f32)
    h = jnp.dot(x_ref[...], w1_ref[...].astype(f32), preferred_element_type=f32)
    h = _leaky_relu(h + b1_ref[...])
    # fc2 + leaky_relu(0.2)
    h = jnp.dot(h, w2_ref[...].astype(f32), preferred_element_type=f32)
    h = _leaky_relu(h + b2_ref[...])
    # fc3 + leaky_relu(0.2)
    h = jnp.dot(h, w3_ref[...].astype(f32), preferred_element_type=f32)
    h = _leaky_relu(h + b3_ref[...])
    # fc4 + tanh
    h = jnp.dot(h, w4_ref[...].astype(f32), preferred_element_type=f32)
    o_ref[...] = jnp.tanh(h + b4_ref[...])


def prepare_generator_params(params):
    """Cast weights to bf16 and zero-pad latent/output feature dims to 128-multiples."""
    (w1, b1), (w2, b2), (w3, b3), (w4, b4) = params
    latent, _ = w1.shape
    _, out_dim = w4.shape
    latent_p = _round_up(latent, 128)
    out_p = _round_up(out_dim, 128)

    w1p = jnp.pad(w1.astype(jnp.bfloat16), ((0, latent_p - latent), (0, 0)))
    w4p = jnp.pad(w4.astype(jnp.bfloat16), ((0, 0), (0, out_p - out_dim)))
    b4p = jnp.pad(b4.astype(jnp.float32), ((0, 0), (0, out_p - out_dim)))

    prepared = ((w1p, b1.astype(jnp.float32)),
                (w2.astype(jnp.bfloat16), b2.astype(jnp.float32)),
                (w3.astype(jnp.bfloat16), b3.astype(jnp.float32)),
                (w4p, b4p))
    return prepared, out_dim


@functools.partial(jax.jit, static_argnames=("out_dim", "block_b"))
def generator_forward(x, prepared, out_dim, block_b=256):
    """x: (B, 100) float32. Returns (B, out_dim) float32 in [-1, 1]."""
    (w1, b1), (w2, b2), (w3, b3), (w4, b4) = prepared
    B, latent = x.shape
    latent_p = w1.shape[0]
    d1, d2, d3 = w1.shape[1], w2.shape[1], w3.shape[1]
    out_p = w4.shape[1]

    # Batch blocking: pad B to a multiple of the block size (>= 8 sublanes).
    bb = min(block_b, _round_up(B, 8))
    Bp = _round_up(B, bb)
    grid = Bp // bb

    x_p = jnp.pad(x.astype(jnp.float32),
                  ((0, Bp - B), (0, latent_p - latent)))

    flops = 2 * Bp * (latent_p * d1 + d1 * d2 + d2 * d3 + d3 * out_p)
    bytes_accessed = (
        x_p.size * 4 + Bp * out_p * 4                      # activations in/out
        + (w1.size + w2.size + w3.size + w4.size) * 2      # bf16 weights
        + (b1.size + b2.size + b3.size + b4.size) * 4)     # f32 biases
    cost = pl.CostEstimate(flops=int(flops),
                           transcendentals=int(Bp * out_p),
                           bytes_accessed=int(bytes_accessed))

    def resident(shape):
        # Full-array block with a constant index map: DMA'd once, stays in VMEM
        # across all batch-block grid steps.
        return pl.BlockSpec(shape, lambda i: (0, 0))

    out = pl.pallas_call(
        generator_kernel,
        out_shape=jax.ShapeDtypeStruct((Bp, out_p), jnp.float32),
        grid=(grid,),
        in_specs=[
            pl.BlockSpec((bb, latent_p), lambda i: (i, 0)),   # x: one batch block / step
            resident(w1.shape), resident(b1.shape),
            resident(w2.shape), resident(b2.shape),
            resident(w3.shape), resident(b3.shape),
            resident(w4.shape), resident(b4.shape),
        ],
        out_specs=pl.BlockSpec((bb, out_p), lambda i: (i, 0)),
        compiler_params=pltpu.CompilerParams(
            dimension_semantics=("parallel",),
            vmem_limit_bytes=32 * 1024 * 1024,
        ),
        cost_estimate=cost,
    )(x_p, w1, b1, w2, b2, w3, b3, w4, b4)

    return out[:B, :out_dim]


def init_linear(key, fan_in, fan_out):
    # PyTorch nn.Linear default init: U(-1/sqrt(fan_in), +1/sqrt(fan_in)).
    kw, kb = jax.random.split(key)
    bound = 1.0 / jnp.sqrt(fan_in)
    w = jax.random.uniform(kw, (fan_in, fan_out), jnp.float32, -bound, bound)
    b = jax.random.uniform(kb, (1, fan_out), jnp.float32, -bound, bound)
    return w, b


def init_generator_params(key, g_output_dim=784, dim_latent=100):
    k1, k2, k3, k4 = jax.random.split(key, 4)
    p1 = init_linear(k1, dim_latent, 256)
    p2 = init_linear(k2, 256, 512)
    p3 = init_linear(k3, 512, 1024)
    p4 = init_linear(k4, 1024, g_output_dim)
    return (p1, p2, p3, p4)


def reference_forward(x, prepared, out_dim):
    # Pure-JAX reference using the same bf16-quantized weights (upcast to f32).
    (w1, b1), (w2, b2), (w3, b3), (w4, b4) = prepared
    latent_p = w1.shape[0]
    xf = jnp.pad(x.astype(jnp.float32), ((0, 0), (0, latent_p - x.shape[1])))
    h = _leaky_relu(xf @ w1.astype(jnp.float32) + b1)
    h = _leaky_relu(h @ w2.astype(jnp.float32) + b2)
    h = _leaky_relu(h @ w3.astype(jnp.float32) + b3)
    y = jnp.tanh(h @ w4.astype(jnp.float32) + b4)
    return y[:, :out_dim]


if __name__ == "__main__":
    key = jax.random.PRNGKey(0)
    k_params, k_x = jax.random.split(key)

    params = init_generator_params(k_params, g_output_dim=784, dim_latent=100)
    prepared, out_dim = prepare_generator_params(params)

    batch = 8
    x = jax.random.normal(k_x, (batch, 100), dtype=jnp.float32)

    out = generator_forward(x, prepared, out_dim)
    out = jax.block_until_ready(out)

    ref = reference_forward(x, prepared, out_dim)
    assert out.shape == (batch, 784), out.shape
    assert jnp.allclose(out, ref, atol=1e-4, rtol=1e-4), "mismatch vs reference"

    print("KERNEL_OK")
</pallas_src>

<mosaic_0001>
module attributes {stable_mosaic.version = 11 : i64} {
  func.func @generator_kernel(%arg0: i32, %arg1: memref<8x128xf32, #tpu.memory_space<vmem>>, %arg2: memref<128x256xbf16, #tpu.memory_space<vmem>>, %arg3: memref<1x256xf32, #tpu.memory_space<vmem>>, %arg4: memref<256x512xbf16, #tpu.memory_space<vmem>>, %arg5: memref<1x512xf32, #tpu.memory_space<vmem>>, %arg6: memref<512x1024xbf16, #tpu.memory_space<vmem>>, %arg7: memref<1x1024xf32, #tpu.memory_space<vmem>>, %arg8: memref<1024x896xbf16, #tpu.memory_space<vmem>>, %arg9: memref<1x896xf32, #tpu.memory_space<vmem>>, %arg10: memref<8x896xf32, #tpu.memory_space<vmem>>) attributes {dimension_semantics = [#tpu.dimension_semantics<parallel>], iteration_bounds = array<i64: 1>, scalar_prefetch = 0 : i64, scratch_operands = 0 : i64, tpu.core_type = #tpu.core_type<tc>, window_params = [{transform_indices = @transform_0, window_bounds = array<i64: 8, 128>}, {pipeline_mode = #tpu.pipeline_mode<synchronous>, transform_indices = @transform_1, window_bounds = array<i64: 128, 256>}, {pipeline_mode = #tpu.pipeline_mode<synchronous>, transform_indices = @transform_2, window_bounds = array<i64: 1, 256>}, {pipeline_mode = #tpu.pipeline_mode<synchronous>, transform_indices = @transform_3, window_bounds = array<i64: 256, 512>}, {pipeline_mode = #tpu.pipeline_mode<synchronous>, transform_indices = @transform_4, window_bounds = array<i64: 1, 512>}, {pipeline_mode = #tpu.pipeline_mode<synchronous>, transform_indices = @transform_5, window_bounds = array<i64: 512, 1024>}, {pipeline_mode = #tpu.pipeline_mode<synchronous>, transform_indices = @transform_6, window_bounds = array<i64: 1, 1024>}, {pipeline_mode = #tpu.pipeline_mode<synchronous>, transform_indices = @transform_7, window_bounds = array<i64: 1024, 896>}, {pipeline_mode = #tpu.pipeline_mode<synchronous>, transform_indices = @transform_8, window_bounds = array<i64: 1, 896>}, {transform_indices = @transform_9, window_bounds = array<i64: 8, 896>}]} {
    %c0 = arith.constant 0 : index
    %c0_0 = arith.constant 0 : index
    %0 = vector.load %arg1[%c0, %c0_0] : memref<8x128xf32, #tpu.memory_space<vmem>>, vector<8x128xf32>
    %c0_1 = arith.constant 0 : index
    %c0_2 = arith.constant 0 : index
    %1 = vector.load %arg2[%c0_1, %c0_2] : memref<128x256xbf16, #tpu.memory_space<vmem>>, vector<128x256xbf16>
    %2 = arith.extf %1 : vector<128x256xbf16> to vector<128x256xf32>
    %cst = arith.constant dense<0.000000e+00> : vector<8x256xf32>
    %3 = tpu.matmul %0, %2, %cst {dimension_numbers = #tpu.dot_dimension_numbers<[1], [0], [0], [1], [0, 0, 1, 1], [], []>} : vector<8x128xf32>, vector<128x256xf32>, vector<8x256xf32> -> vector<8x256xf32>
    %c0_3 = arith.constant 0 : index
    %c0_4 = arith.constant 0 : index
    %4 = vector.load %arg3[%c0_3, %c0_4] : memref<1x256xf32, #tpu.memory_space<vmem>>, vector<1x256xf32>
    %5 = vector.broadcast %4 : vector<1x256xf32> to vector<8x256xf32>
    %6 = arith.addf %3, %5 : vector<8x256xf32>
    %cst_5 = arith.constant 0.000000e+00 : f32
    %7 = vector.broadcast %cst_5 : f32 to vector<8x256xf32>
    %8 = arith.cmpf ogt, %6, %7 : vector<8x256xf32>
    %cst_6 = arith.constant 2.000000e-01 : f32
    %9 = vector.broadcast %cst_6 : f32 to vector<8x256xf32>
    %10 = arith.mulf %9, %6 : vector<8x256xf32>
    %11 = arith.select %8, %6, %10 : vector<8x256xi1>, vector<8x256xf32>
    %c0_7 = arith.constant 0 : index
    %c0_8 = arith.constant 0 : index
    %12 = vector.load %arg4[%c0_7, %c0_8] : memref<256x512xbf16, #tpu.memory_space<vmem>>, vector<256x512xbf16>
    %13 = arith.extf %12 : vector<256x512xbf16> to vector<256x512xf32>
    %cst_9 = arith.constant dense<0.000000e+00> : vector<8x512xf32>
    %14 = tpu.matmul %11, %13, %cst_9 {dimension_numbers = #tpu.dot_dimension_numbers<[1], [0], [0], [1], [0, 0, 1, 1], [], []>} : vector<8x256xf32>, vector<256x512xf32>, vector<8x512xf32> -> vector<8x512xf32>
    %c0_10 = arith.constant 0 : index
    %c0_11 = arith.constant 0 : index
    %15 = vector.load %arg5[%c0_10, %c0_11] : memref<1x512xf32, #tpu.memory_space<vmem>>, vector<1x512xf32>
    %16 = vector.broadcast %15 : vector<1x512xf32> to vector<8x512xf32>
    %17 = arith.addf %14, %16 : vector<8x512xf32>
    %cst_12 = arith.constant 0.000000e+00 : f32
    %18 = vector.broadcast %cst_12 : f32 to vector<8x512xf32>
    %19 = arith.cmpf ogt, %17, %18 : vector<8x512xf32>
    %cst_13 = arith.constant 2.000000e-01 : f32
    %20 = vector.broadcast %cst_13 : f32 to vector<8x512xf32>
    %21 = arith.mulf %20, %17 : vector<8x512xf32>
    %22 = arith.select %19, %17, %21 : vector<8x512xi1>, vector<8x512xf32>
    %c0_14 = arith.constant 0 : index
    %c0_15 = arith.constant 0 : index
    %23 = vector.load %arg6[%c0_14, %c0_15] : memref<512x1024xbf16, #tpu.memory_space<vmem>>, vector<512x1024xbf16>
    %24 = arith.extf %23 : vector<512x1024xbf16> to vector<512x1024xf32>
    %cst_16 = arith.constant dense<0.000000e+00> : vector<8x1024xf32>
    %25 = tpu.matmul %22, %24, %cst_16 {dimension_numbers = #tpu.dot_dimension_numbers<[1], [0], [0], [1], [0, 0, 1, 1], [], []>} : vector<8x512xf32>, vector<512x1024xf32>, vector<8x1024xf32> -> vector<8x1024xf32>
    %c0_17 = arith.constant 0 : index
    %c0_18 = arith.constant 0 : index
    %26 = vector.load %arg7[%c0_17, %c0_18] : memref<1x1024xf32, #tpu.memory_space<vmem>>, vector<1x1024xf32>
    %27 = vector.broadcast %26 : vector<1x1024xf32> to vector<8x1024xf32>
    %28 = arith.addf %25, %27 : vector<8x1024xf32>
    %cst_19 = arith.constant 0.000000e+00 : f32
    %29 = vector.broadcast %cst_19 : f32 to vector<8x1024xf32>
    %30 = arith.cmpf ogt, %28, %29 : vector<8x1024xf32>
    %cst_20 = arith.constant 2.000000e-01 : f32
    %31 = vector.broadcast %cst_20 : f32 to vector<8x1024xf32>
    %32 = arith.mulf %31, %28 : vector<8x1024xf32>
    %33 = arith.select %30, %28, %32 : vector<8x1024xi1>, vector<8x1024xf32>
    %c0_21 = arith.constant 0 : index
    %c0_22 = arith.constant 0 : index
    %34 = vector.load %arg8[%c0_21, %c0_22] : memref<1024x896xbf16, #tpu.memory_space<vmem>>, vector<1024x896xbf16>
    %35 = arith.extf %34 : vector<1024x896xbf16> to vector<1024x896xf32>
    %cst_23 = arith.constant dense<0.000000e+00> : vector<8x896xf32>
    %36 = tpu.matmul %33, %35, %cst_23 {dimension_numbers = #tpu.dot_dimension_numbers<[1], [0], [0], [1], [0, 0, 1, 1], [], []>} : vector<8x1024xf32>, vector<1024x896xf32>, vector<8x896xf32> -> vector<8x896xf32>
    %c0_24 = arith.constant 0 : index
    %c0_25 = arith.constant 0 : index
    %37 = vector.load %arg9[%c0_24, %c0_25] : memref<1x896xf32, #tpu.memory_space<vmem>>, vector<1x896xf32>
    %38 = vector.broadcast %37 : vector<1x896xf32> to vector<8x896xf32>
    %39 = arith.addf %36, %38 : vector<8x896xf32>
    %40 = math.tanh %39 : vector<8x896xf32>
    %c0_26 = arith.constant 0 : index
    %c0_27 = arith.constant 0 : index
    %41 = vector.load %arg10[%c0_26, %c0_27] : memref<8x896xf32, #tpu.memory_space<vmem>>, vector<8x896xf32>
    tpu.vector_store %arg10[%c0_26, %c0_27], %40 {strides = array<i32>} : memref<8x896xf32, #tpu.memory_space<vmem>>, vector<8x896xf32>,
    return
  }
  func.func @transform_0(%arg0: i32) -> (i32, i32) {
    %c0_i32 = arith.constant 0 : i32
    %c0_i32_0 = arith.constant 0 : i32
    return %arg0, %c0_i32 : i32, i32
  }
  func.func @transform_1(%arg0: i32) -> (i32, i32) {
    %c0_i32 = arith.constant 0 : i32
    %c0_i32_0 = arith.constant 0 : i32
    %c0_i32_1 = arith.constant 0 : i32
    return %c0_i32, %c0_i32_0 : i32, i32
  }
  func.func @transform_2(%arg0: i32) -> (i32, i32) {
    %c0_i32 = arith.constant 0 : i32
    %c0_i32_0 = arith.constant 0 : i32
    %c0_i32_1 = arith.constant 0 : i32
    return %c0_i32, %c0_i32_0 : i32, i32
  }
  func.func @transform_3(%arg0: i32) -> (i32, i32) {
    %c0_i32 = arith.constant 0 : i32
    %c0_i32_0 = arith.constant 0 : i32
    %c0_i32_1 = arith.constant 0 : i32
    return %c0_i32, %c0_i32_0 : i32, i32
  }
  func.func @transform_4(%arg0: i32) -> (i32, i32) {
    %c0_i32 = arith.constant 0 : i32
    %c0_i32_0 = arith.constant 0 : i32
    %c0_i32_1 = arith.constant 0 : i32
    return %c0_i32, %c0_i32_0 : i32, i32
  }
  func.func @transform_5(%arg0: i32) -> (i32, i32) {
    %c0_i32 = arith.constant 0 : i32
    %c0_i32_0 = arith.constant 0 : i32
    %c0_i32_1 = arith.constant 0 : i32
    return %c0_i32, %c0_i32_0 : i32, i32
  }
  func.func @transform_6(%arg0: i32) -> (i32, i32) {
    %c0_i32 = arith.constant 0 : i32
    %c0_i32_0 = arith.constant 0 : i32
    %c0_i32_1 = arith.constant 0 : i32
    return %c0_i32, %c0_i32_0 : i32, i32
  }
  func.func @transform_7(%arg0: i32) -> (i32, i32) {
    %c0_i32 = arith.constant 0 : i32
    %c0_i32_0 = arith.constant 0 : i32
    %c0_i32_1 = arith.constant 0 : i32
    return %c0_i32, %c0_i32_0 : i32, i32
  }
  func.func @transform_8(%arg0: i32) -> (i32, i32) {
    %c0_i32 = arith.constant 0 : i32
    %c0_i32_0 = arith.constant 0 : i32
    %c0_i32_1 = arith.constant 0 : i32
    return %c0_i32, %c0_i32_0 : i32, i32
  }
  func.func @transform_9(%arg0: i32) -> (i32, i32) {
    %c0_i32 = arith.constant 0 : i32
    %c0_i32_0 = arith.constant 0 : i32
    return %arg0, %c0_i32 : i32, i32
  }
}

</mosaic_0001>

<llo_original>
// kernel: generator_forward.1
$region0: #{generator_forward.1}
  #allocation0 [shape = 'u32[]', space=smem, size = 0x4, offset = 0x4, fixed_abs, tag = 'smem constant byte address 0x4 - core index']
  #allocation1 [shape = 'u32[144,128]{1,0:T(1,128)}', space=vmem, size = 0x12000, scoped, tag = 'internal scratch']
  %s0 = inlined_call_operand.vmem [shape: f32[8,128], index: 0, kind: input, shape index: {}]
  %s1 = inlined_call_operand.hbm [shape: bf16[128,256], index: 1, kind: input, shape index: {}]
  %s2 = inlined_call_operand.hbm [shape: f32[1,256], index: 2, kind: input, shape index: {}]
  %s3 = inlined_call_operand.hbm [shape: bf16[256,512], index: 3, kind: input, shape index: {}]
  %s4 = inlined_call_operand.hbm [shape: f32[1,512], index: 4, kind: input, shape index: {}]
  %s5 = inlined_call_operand.hbm [shape: bf16[512,1024], index: 5, kind: input, shape index: {}]
  %s6 = inlined_call_operand.hbm [shape: f32[1,1024], index: 6, kind: input, shape index: {}]
  %s7 = inlined_call_operand.hbm [shape: bf16[1024,896], index: 7, kind: input, shape index: {}]
  %s8 = inlined_call_operand.hbm [shape: f32[1,896], index: 8, kind: input, shape index: {}]
  %s9 = inlined_call_operand.hbm [shape: f32[8,896], index: 9, kind: output, shape index: {}]
  %s10 = sld [smem:[#allocation0]]
  $region78: #{generator_forward.1} parent=0
    _
  %s12 = ssub.s32 1, %s10
  %s13 = scalar_select 0, %s12, %s10
  $region1: #{generator_forward.1} parent=0
    #allocation2 [shape = 'u8[65536]{0}', space=vmem, size = 0x10000, scoped, tag = 'input window, operand 1, single buffered']
    #allocation3 [shape = 's32[1]{0}', space=sflag, size = 0x4, scoped, tag = 'scoped memory for generator_forward.1']
    #allocation4 [shape = 's32[1]{0}', space=sflag, size = 0x4, scoped, tag = 'scoped memory for generator_forward.1']
    #allocation5 [shape = 'u8[1024]{0}', space=vmem, size = 0x400, scoped, tag = 'input window, operand 2, single buffered']
    #allocation6 [shape = 's32[1]{0}', space=sflag, size = 0x4, scoped, tag = 'scoped memory for generator_forward.1']
    #allocation7 [shape = 'u8[262144]{0}', space=vmem, size = 0x40000, scoped, tag = 'input window, operand 3, single buffered']
    #allocation8 [shape = 'u8[2048]{0}', space=vmem, size = 0x800, scoped, tag = 'input window, operand 4, single buffered']
    #allocation9 [shape = 's32[1]{0}', space=sflag, size = 0x4, scoped, tag = 'scoped memory for generator_forward.1']
    #allocation10 [shape = 'u8[1048576]{0}', space=vmem, size = 0x100000, scoped, tag = 'input window, operand 5, single buffered']
    #allocation11 [shape = 'u8[4096]{0}', space=vmem, size = 0x1000, scoped, tag = 'input window, operand 6, single buffered']
    #allocation12 [shape = 's32[1]{0}', space=sflag, size = 0x4, scoped, tag = 'scoped memory for generator_forward.1']
    #allocation13 [shape = 'u8[1835008]{0}', space=vmem, size = 0x1c0000, scoped, tag = 'input window, operand 7, single buffered']
    #allocation14 [shape = 'u8[3584]{0}', space=vmem, size = 0x1000, scoped, tag = 'input window, operand 8, single buffered']
    #allocation15 [shape = 's32[1]{0}', space=sflag, size = 0x4, scoped, tag = 'scoped memory for generator_forward.1']
    #allocation16 [shape = 'u8[28672]{0}', space=vmem, size = 0x7000, scoped, tag = 'output window, operand 0, single buffered']
    %14 = vsyncpa [#allocation3], 0
    %15 = vsyncpa [#allocation6], 0
    %16 = vsyncpa [#allocation9], 0
    %17 = vsyncpa [#allocation12], 0
    %18 = vsyncpa [#allocation15], 0
    %19 = vsyncpa [#allocation4], 0
    // Predicated region
    $region2: #{generator_forward.1} parent=1 // pred_check
      _
    $region3: #{generator_forward.1} parent=1 // pred_check_branch
      %21 = sbr.rel (0) target = $region5
    $region4: #{generator_forward.1} parent=1 // pred_region
      _
    $region5: #{generator_forward.1} parent=1 // pred_fallthru
      _
    // Predicated region
    $region6: #{generator_forward.1} parent=1 // pred_check
      _
    $region7: #{generator_forward.1} parent=1 // pred_check_branch
      %23 = sbr.rel (0) target = $region9
    $region8: #{generator_forward.1} parent=1 // pred_region
      %s25 = ssub.s32 2048, 2048
      %26 = vsyncadd [#allocation3], %s25
      %s27 = sshll.u32 [#allocation2], 4
      %s28 = int_to_ptr.vmem [resolvable:$true] %s27
      %33 = dma.hbm_to_vmem [thread:$0]  %s1, 2048, %s28, [#allocation3], 128, 128, 8
    $region9: #{generator_forward.1} parent=1 // pred_fallthru
      _
    // Predicated region
    $region10: #{generator_forward.1} parent=1 // pred_check
      _
    $region11: #{generator_forward.1} parent=1 // pred_check_branch
      %35 = sbr.rel (0) target = $region13
    $region12: #{generator_forward.1} parent=1 // pred_region
      %s37 = ssub.s32 32, 32
      %38 = vsyncadd [#allocation6], %s37
      %s40 = sshll.u32 [#allocation5], 4
      %s41 = int_to_ptr.vmem [resolvable:$true] %s40
      %43 = dma.hbm_to_vmem [thread:$0]  %s2, 32, %s41, [#allocation6]
    $region13: #{generator_forward.1} parent=1 // pred_fallthru
      _
    // Predicated region
    $region14: #{generator_forward.1} parent=1 // pred_check
      _
    $region15: #{generator_forward.1} parent=1 // pred_check_branch
      %45 = sbr.rel (0) target = $region17
    $region16: #{generator_forward.1} parent=1 // pred_region
      %s47 = ssub.s32 8192, 8192
      %48 = vsyncadd [#allocation6], %s47
      %s49 = sshll.u32 [#allocation7], 4
      %s50 = int_to_ptr.vmem [resolvable:$true] %s49
      %55 = dma.hbm_to_vmem [thread:$0]  %s3, 8192, %s50, [#allocation6], 256, 256, 16
    $region17: #{generator_forward.1} parent=1 // pred_fallthru
      _
    // Predicated region
    $region18: #{generator_forward.1} parent=1 // pred_check
      _
    $region19: #{generator_forward.1} parent=1 // pred_check_branch
      %57 = sbr.rel (0) target = $region21
    $region20: #{generator_forward.1} parent=1 // pred_region
      %s59 = ssub.s32 64, 64
      %60 = vsyncadd [#allocation9], %s59
      %s62 = sshll.u32 [#allocation8], 4
      %s63 = int_to_ptr.vmem [resolvable:$true] %s62
      %65 = dma.hbm_to_vmem [thread:$0]  %s4, 64, %s63, [#allocation9]
    $region21: #{generator_forward.1} parent=1 // pred_fallthru
      _
    // Predicated region
    $region22: #{generator_forward.1} parent=1 // pred_check
      _
    $region23: #{generator_forward.1} parent=1 // pred_check_branch
      %67 = sbr.rel (0) target = $region25
    $region24: #{generator_forward.1} parent=1 // pred_region
      %s69 = ssub.s32 32768, 32768
      %70 = vsyncadd [#allocation9], %s69
      %s71 = sshll.u32 [#allocation10], 4
      %s72 = int_to_ptr.vmem [resolvable:$true] %s71
      %77 = dma.hbm_to_vmem [thread:$0]  %s5, 32768, %s72, [#allocation9], 512, 512, 32
    $region25: #{generator_forward.1} parent=1 // pred_fallthru
      _
    // Predicated region
    $region26: #{generator_forward.1} parent=1 // pred_check
      _
    $region27: #{generator_forward.1} parent=1 // pred_check_branch
      %79 = sbr.rel (0) target = $region29
    $region28: #{generator_forward.1} parent=1 // pred_region
      %s81 = ssub.s32 128, 128
      %82 = vsyncadd [#allocation12], %s81
      %s84 = sshll.u32 [#allocation11], 4
      %s85 = int_to_ptr.vmem [resolvable:$true] %s84
      %87 = dma.hbm_to_vmem [thread:$0]  %s6, 128, %s85, [#allocation12]
    $region29: #{generator_forward.1} parent=1 // pred_fallthru
      _
    // Predicated region
    $region30: #{generator_forward.1} parent=1 // pred_check
      _
    $region31: #{generator_forward.1} parent=1 // pred_check_branch
      %89 = sbr.rel (0) target = $region33
    $region32: #{generator_forward.1} parent=1 // pred_region
      %s91 = ssub.s32 57344, 57344
      %92 = vsyncadd [#allocation12], %s91
      %s93 = sshll.u32 [#allocation13], 4
      %s94 = int_to_ptr.vmem [resolvable:$true] %s93
      %99 = dma.hbm_to_vmem [thread:$0]  %s7, 57344, %s94, [#allocation12], 448, 448, 28
    $region33: #{generator_forward.1} parent=1 // pred_fallthru
      _
    // Predicated region
    $region34: #{generator_forward.1} parent=1 // pred_check
      _
    $region35: #{generator_forward.1} parent=1 // pred_check_branch
      %101 = sbr.rel (0) target = $region37
    $region36: #{generator_forward.1} parent=1 // pred_region
      %s103 = ssub.s32 112, 112
      %104 = vsyncadd [#allocation15], %s103
      %s106 = sshll.u32 [#allocation14], 4
      %s107 = int_to_ptr.vmem [resolvable:$true] %s106
      %109 = dma.hbm_to_vmem [thread:$0]  %s8, 112, %s107, [#allocation15]
    $region37: #{generator_forward.1} parent=1 // pred_fallthru
      _
    // Predicated region
    $region38: #{generator_forward.1} parent=1 // pred_check
      _
    $region39: #{generator_forward.1} parent=1 // pred_check_branch
      %111 = sbr.rel (0) target = $region41
    $region40: #{generator_forward.1} parent=1 // pred_region
      %112 = dma.done [#allocation3], 2048
    $region41: #{generator_forward.1} parent=1 // pred_fallthru
      _
    // Predicated region
    $region42: #{generator_forward.1} parent=1 // pred_check
      _
    $region43: #{generator_forward.1} parent=1 // pred_check_branch
      %114 = sbr.rel (0) target = $region45
    $region44: #{generator_forward.1} parent=1 // pred_region
      %115 = dma.done [#allocation6], 32
    $region45: #{generator_forward.1} parent=1 // pred_fallthru
      _
    // Predicated region
    $region46: #{generator_forward.1} parent=1 // pred_check
      _
    $region47: #{generator_forward.1} parent=1 // pred_check_branch
      %117 = sbr.rel (0) target = $region49
    $region48: #{generator_forward.1} parent=1 // pred_region
      %118 = dma.done [#allocation6], 8192
    $region49: #{generator_forward.1} parent=1 // pred_fallthru
      _
    // Predicated region
    $region50: #{generator_forward.1} parent=1 // pred_check
      _
    $region51: #{generator_forward.1} parent=1 // pred_check_branch
      %120 = sbr.rel (0) target = $region53
    $region52: #{generator_forward.1} parent=1 // pred_region
      %121 = dma.done [#allocation9], 64
    $region53: #{generator_forward.1} parent=1 // pred_fallthru
      _
    // Predicated region
    $region54: #{generator_forward.1} parent=1 // pred_check
      _
    $region55: #{generator_forward.1} parent=1 // pred_check_branch
      %123 = sbr.rel (0) target = $region57
    $region56: #{generator_forward.1} parent=1 // pred_region
      %124 = dma.done [#allocation9], 32768
    $region57: #{generator_forward.1} parent=1 // pred_fallthru
      _
    // Predicated region
    $region58: #{generator_forward.1} parent=1 // pred_check
      _
    $region59: #{generator_forward.1} parent=1 // pred_check_branch
      %126 = sbr.rel (0) target = $region61
    $region60: #{generator_forward.1} parent=1 // pred_region
      %127 = dma.done [#allocation12], 128
    $region61: #{generator_forward.1} parent=1 // pred_fallthru
      _
    // Predicated region
    $region62: #{generator_forward.1} parent=1 // pred_check
      _
    $region63: #{generator_forward.1} parent=1 // pred_check_branch
      %129 = sbr.rel (0) target = $region65
    $region64: #{generator_forward.1} parent=1 // pred_region
      %130 = dma.done [#allocation12], 57344
    $region65: #{generator_forward.1} parent=1 // pred_fallthru
      _
    // Predicated region
    $region66: #{generator_forward.1} parent=1 // pred_check
      _
    $region67: #{generator_forward.1} parent=1 // pred_check_branch
      %132 = sbr.rel (0) target = $region69
    $region68: #{generator_forward.1} parent=1 // pred_region
      %133 = dma.done [#allocation15], 112
    $region69: #{generator_forward.1} parent=1 // pred_fallthru
      _
    %v134 = vld [vmem:[%s0] sm:$0xff]
    %v135 = vld [vmem:[#allocation2] sm:$0xff]
    %v136 = vld [vmem:[#allocation2 + $0x8] sm:$0xff]
    %v137 = vld [vmem:[#allocation2 + $0x10] sm:$0xff]
    %v138 = vld [vmem:[#allocation2 + $0x18] sm:$0xff]
    %v139 = vld [vmem:[#allocation2 + $0x20] sm:$0xff]
    %v140 = vld [vmem:[#allocation2 + $0x28] sm:$0xff]
    %v141 = vld [vmem:[#allocation2 + $0x30] sm:$0xff]
    %v142 = vld [vmem:[#allocation2 + $0x38] sm:$0xff]
    %v143 = vld [vmem:[#allocation2 + $0x40] sm:$0xff]
    %v144 = vld [vmem:[#allocation2 + $0x48] sm:$0xff]
    %v145 = vld [vmem:[#allocation2 + $0x50] sm:$0xff]
    %v146 = vld [vmem:[#allocation2 + $0x58] sm:$0xff]
    %v147 = vld [vmem:[#allocation2 + $0x60] sm:$0xff]
    %v148 = vld [vmem:[#allocation2 + $0x68] sm:$0xff]
    %v149 = vld [vmem:[#allocation2 + $0x70] sm:$0xff]
    %v150 = vld [vmem:[#allocation2 + $0x78] sm:$0xff]
    %v151 = vunpack.c.l.bf16 %v135
    %v152 = vunpack.c.h.bf16 %v135
    %v153 = vunpack.c.l.bf16 %v136
    %v154 = vunpack.c.h.bf16 %v136
    %v155 = vunpack.c.l.bf16 %v137
    %v156 = vunpack.c.h.bf16 %v137
    %v157 = vunpack.c.l.bf16 %v138
    %v158 = vunpack.c.h.bf16 %v138
    %v159 = vunpack.c.l.bf16 %v139
    %v160 = vunpack.c.h.bf16 %v139
    %v161 = vunpack.c.l.bf16 %v140
    %v162 = vunpack.c.h.bf16 %v140
    %v163 = vunpack.c.l.bf16 %v141
    %v164 = vunpack.c.h.bf16 %v141
    %v165 = vunpack.c.l.bf16 %v142
    %v166 = vunpack.c.h.bf16 %v142
    %v167 = vunpack.c.l.bf16 %v143
    %v168 = vunpack.c.h.bf16 %v143
    %v169 = vunpack.c.l.bf16 %v144
    %v170 = vunpack.c.h.bf16 %v144
    %v171 = vunpack.c.l.bf16 %v145
    %v172 = vunpack.c.h.bf16 %v145
    %v173 = vunpack.c.l.bf16 %v146
    %v174 = vunpack.c.h.bf16 %v146
    %v175 = vunpack.c.l.bf16 %v147
    %v176 = vunpack.c.h.bf16 %v147
    %v177 = vunpack.c.l.bf16 %v148
    %v178 = vunpack.c.h.bf16 %v148
    %v179 = vunpack.c.l.bf16 %v149
    %v180 = vunpack.c.h.bf16 %v149
    %v181 = vunpack.c.l.bf16 %v150
    %v182 = vunpack.c.h.bf16 %v150
    %v183 = vld [vmem:[#allocation5] sm:$0x3]
    %v185 = vlaneseq
    %v186 = vshrl.u32 %v185, 7
    %v187 = vsub.s32 0, %v186
    %v188 = vrot.slane %v183, %v187
    %v189 = vlaneseq
    %v190 = vshrl.u32 %v189, 7
    %v191 = vsub.s32 1, %v190
    %v192 = vrot.slane %v183, %v191
    %195 = vmatprep.subr.mxu0 %v152
    %196 = vmatpush1.msra.mxu0 %v151
    %197 = vmatprep.subr.mxu0 %v154
    %198 = vmatpush1.msra.mxu0 %v153
    %199 = vmatprep.subr.mxu0 %v156
    %200 = vmatpush1.msra.mxu0 %v155
    %201 = vmatprep.subr.mxu0 %v158
    %202 = vmatpush1.msra.mxu0 %v157
    %203 = vmatprep.subr.mxu0 %v160
    %204 = vmatpush1.msra.mxu0 %v159
    %205 = vmatprep.subr.mxu0 %v162
    %206 = vmatpush1.msra.mxu0 %v161
    %207 = vmatprep.subr.mxu0 %v164
    %208 = vmatpush1.msra.mxu0 %v163
    %209 = vmatprep.subr.mxu0 %v166
    %210 = vmatpush1.msra.mxu0 %v165
    %211 = vmatprep.subr.mxu0 %v168
    %212 = vmatpush1.msra.mxu0 %v167
    %213 = vmatprep.subr.mxu0 %v170
    %214 = vmatpush1.msra.mxu0 %v169
    %215 = vmatprep.subr.mxu0 %v172
    %216 = vmatpush1.msra.mxu0 %v171
    %217 = vmatprep.subr.mxu0 %v174
    %218 = vmatpush1.msra.mxu0 %v173
    %219 = vmatprep.subr.mxu0 %v176
    %220 = vmatpush1.msra.mxu0 %v175
    %221 = vmatprep.subr.mxu0 %v178
    %222 = vmatpush1.msra.mxu0 %v177
    %223 = vmatprep.subr.mxu0 %v180
    %224 = vmatpush1.msra.mxu0 %v179
    %225 = vmatprep.subr.mxu0 %v182
    %226 = vmatpush1.msra.mxu0 %v181
    %227 = vmatprep.subr.mxu0 0.0
    %228 = vmatpush1.msra.mxu0 0.0
    %229 = vmatprep.subr.mxu0 0.0
    %230 = vmatpush1.msra.mxu0 0.0
    %231 = vmatprep.subr.mxu0 0.0
    %232 = vmatpush1.msra.mxu0 0.0
    %233 = vmatprep.subr.mxu0 0.0
    %234 = vmatpush1.msra.mxu0 0.0
    %235 = vmatprep.subr.mxu0 0.0
    %236 = vmatpush1.msra.mxu0 0.0
    %237 = vmatprep.subr.mxu0 0.0
    %238 = vmatpush1.msra.mxu0 0.0
    %239 = vmatprep.subr.mxu0 0.0
    %240 = vmatpush1.msra.mxu0 0.0
    %241 = vmatprep.subr.mxu0 0.0
    %242 = vmatpush1.msra.mxu0 0.0
    %243 = vmatprep.subr.mxu0 0.0
    %244 = vmatpush1.msra.mxu0 0.0
    %245 = vmatprep.subr.mxu0 0.0
    %246 = vmatpush1.msra.mxu0 0.0
    %247 = vmatprep.subr.mxu0 0.0
    %248 = vmatpush1.msra.mxu0 0.0
    %249 = vmatprep.subr.mxu0 0.0
    %250 = vmatpush1.msra.mxu0 0.0
    %251 = vmatprep.subr.mxu0 0.0
    %252 = vmatpush1.msra.mxu0 0.0
    %253 = vmatprep.subr.mxu0 0.0
    %254 = vmatpush1.msra.mxu0 0.0
    %255 = vmatprep.subr.mxu0 0.0
    %256 = vmatpush1.msra.mxu0 0.0
    %257 = vmatprep.subr.mxu0 0.0
    %258 = vmatpush1.msra.mxu0 0.0
    %259 = vmatprep.mubr.f32.mxu0 0.0
    %260 = vmatmul.mubr.f32.gmra.mrb[0].mxu0 %v134
    %v261 = vpop.f32.mrb[0].mxu0
    %v262 = vadd.f32 %v188, %v261
    %v263 = vpop.f32.mrb[0].mxu0
    %v264 = vadd.f32 %v192, %v263
    %265 = vdwg.mxu0
    %vm266 = vcmp.gt.f32.partialorder %v262, 0.0
    %vm267 = vcmp.gt.f32.partialorder %v264, 0.0
    %v268 = vmul.f32 %v262, 0.2
    %v269 = vmul.f32 %v264, 0.2
    %v270 = vsel %vm266, %v262, %v268
    %v271 = vsel %vm267, %v264, %v269
    %v272 = vld [vmem:[#allocation7] sm:$0xff]
    %v273 = vld [vmem:[#allocation7 + $0x8] sm:$0xff]
    %v274 = vld [vmem:[#allocation7 + $0x10] sm:$0xff]
    %v275 = vld [vmem:[#allocation7 + $0x18] sm:$0xff]
    %v276 = vld [vmem:[#allocation7 + $0x20] sm:$0xff]
    %v277 = vld [vmem:[#allocation7 + $0x28] sm:$0xff]
    %v278 = vld [vmem:[#allocation7 + $0x30] sm:$0xff]
    %v279 = vld [vmem:[#allocation7 + $0x38] sm:$0xff]
    %v280 = vld [vmem:[#allocation7 + $0x40] sm:$0xff]
    %v281 = vld [vmem:[#allocation7 + $0x48] sm:$0xff]
    %v282 = vld [vmem:[#allocation7 + $0x50] sm:$0xff]
    %v283 = vld [vmem:[#allocation7 + $0x58] sm:$0xff]
    %v284 = vld [vmem:[#allocation7 + $0x60] sm:$0xff]
    %v285 = vld [vmem:[#allocation7 + $0x68] sm:$0xff]
    %v286 = vld [vmem:[#allocation7 + $0x70] sm:$0xff]
    %v287 = vld [vmem:[#allocation7 + $0x78] sm:$0xff]
    %v288 = vld [vmem:[#allocation7 + $0x80] sm:$0xff]
    %v289 = vld [vmem:[#allocation7 + $0x88] sm:$0xff]
    %v290 = vld [vmem:[#allocation7 + $0x90] sm:$0xff]
    %v291 = vld [vmem:[#allocation7 + $0x98] sm:$0xff]
    %v292 = vld [vmem:[#allocation7 + $0xa0] sm:$0xff]
    %v293 = vld [vmem:[#allocation7 + $0xa8] sm:$0xff]
    %v294 = vld [vmem:[#allocation7 + $0xb0] sm:$0xff]
    %v295 = vld [vmem:[#allocation7 + $0xb8] sm:$0xff]
    %v296 = vld [vmem:[#allocation7 + $0xc0] sm:$0xff]
    %v297 = vld [vmem:[#allocation7 + $0xc8] sm:$0xff]
    %v298 = vld [vmem:[#allocation7 + $0xd0] sm:$0xff]
    %v299 = vld [vmem:[#allocation7 + $0xd8] sm:$0xff]
    %v300 = vld [vmem:[#allocation7 + $0xe0] sm:$0xff]
    %v301 = vld [vmem:[#allocation7 + $0xe8] sm:$0xff]
    %v302 = vld [vmem:[#allocation7 + $0xf0] sm:$0xff]
    %v303 = vld [vmem:[#allocation7 + $0xf8] sm:$0xff]
    %v304 = vld [vmem:[#allocation7 + $0x100] sm:$0xff]
    %v305 = vld [vmem:[#allocation7 + $0x108] sm:$0xff]
    %v306 = vld [vmem:[#allocation7 + $0x110] sm:$0xff]
    %v307 = vld [vmem:[#allocation7 + $0x118] sm:$0xff]
    %v308 = vld [vmem:[#allocation7 + $0x120] sm:$0xff]
    %v309 = vld [vmem:[#allocation7 + $0x128] sm:$0xff]
    %v310 = vld [vmem:[#allocation7 + $0x130] sm:$0xff]
    %v311 = vld [vmem:[#allocation7 + $0x138] sm:$0xff]
    %v312 = vld [vmem:[#allocation7 + $0x140] sm:$0xff]
    %v313 = vld [vmem:[#allocation7 + $0x148] sm:$0xff]
    %v314 = vld [vmem:[#allocation7 + $0x150] sm:$0xff]
    %v315 = vld [vmem:[#allocation7 + $0x158] sm:$0xff]
    %v316 = vld [vmem:[#allocation7 + $0x160] sm:$0xff]
    %v317 = vld [vmem:[#allocation7 + $0x168] sm:$0xff]
    %v318 = vld [vmem:[#allocation7 + $0x170] sm:$0xff]
    %v319 = vld [vmem:[#allocation7 + $0x178] sm:$0xff]
    %v320 = vld [vmem:[#allocation7 + $0x180] sm:$0xff]
    %v321 = vld [vmem:[#allocation7 + $0x188] sm:$0xff]
    %v322 = vld [vmem:[#allocation7 + $0x190] sm:$0xff]
    %v323 = vld [vmem:[#allocation7 + $0x198] sm:$0xff]
    %v324 = vld [vmem:[#allocation7 + $0x1a0] sm:$0xff]
    %v325 = vld [vmem:[#allocation7 + $0x1a8] sm:$0xff]
    %v326 = vld [vmem:[#allocation7 + $0x1b0] sm:$0xff]
    %v327 = vld [vmem:[#allocation7 + $0x1b8] sm:$0xff]
    %v328 = vld [vmem:[#allocation7 + $0x1c0] sm:$0xff]
    %v329 = vld [vmem:[#allocation7 + $0x1c8] sm:$0xff]
    %v330 = vld [vmem:[#allocation7 + $0x1d0] sm:$0xff]
    %v331 = vld [vmem:[#allocation7 + $0x1d8] sm:$0xff]
    %v332 = vld [vmem:[#allocation7 + $0x1e0] sm:$0xff]
    %v333 = vld [vmem:[#allocation7 + $0x1e8] sm:$0xff]
    %v334 = vld [vmem:[#allocation7 + $0x1f0] sm:$0xff]
    %v335 = vld [vmem:[#allocation7 + $0x1f8] sm:$0xff]
    %v336 = vunpack.c.l.bf16 %v272
    %v337 = vunpack.c.h.bf16 %v272
    %v338 = vunpack.c.l.bf16 %v273
    %v339 = vunpack.c.h.bf16 %v273
    %v340 = vunpack.c.l.bf16 %v274
    %v341 = vunpack.c.h.bf16 %v274
    %v342 = vunpack.c.l.bf16 %v275
    %v343 = vunpack.c.h.bf16 %v275
    %v344 = vunpack.c.l.bf16 %v276
    %v345 = vunpack.c.h.bf16 %v276
    %v346 = vunpack.c.l.bf16 %v277
    %v347 = vunpack.c.h.bf16 %v277
    %v348 = vunpack.c.l.bf16 %v278
    %v349 = vunpack.c.h.bf16 %v278
    %v350 = vunpack.c.l.bf16 %v279
    %v351 = vunpack.c.h.bf16 %v279
    %v352 = vunpack.c.l.bf16 %v280
    %v353 = vunpack.c.h.bf16 %v280
    %v354 = vunpack.c.l.bf16 %v281
    %v355 = vunpack.c.h.bf16 %v281
    %v356 = vunpack.c.l.bf16 %v282
    %v357 = vunpack.c.h.bf16 %v282
    %v358 = vunpack.c.l.bf16 %v283
    %v359 = vunpack.c.h.bf16 %v283
    %v360 = vunpack.c.l.bf16 %v284
    %v361 = vunpack.c.h.bf16 %v284
    %v362 = vunpack.c.l.bf16 %v285
    %v363 = vunpack.c.h.bf16 %v285
    %v364 = vunpack.c.l.bf16 %v286
    %v365 = vunpack.c.h.bf16 %v286
    %v366 = vunpack.c.l.bf16 %v287
    %v367 = vunpack.c.h.bf16 %v287
    %v368 = vunpack.c.l.bf16 %v288
    %v369 = vunpack.c.h.bf16 %v288
    %v370 = vunpack.c.l.bf16 %v289
    %v371 = vunpack.c.h.bf16 %v289
    %v372 = vunpack.c.l.bf16 %v290
    %v373 = vunpack.c.h.bf16 %v290
    %v374 = vunpack.c.l.bf16 %v291
    %v375 = vunpack.c.h.bf16 %v291
    %v376 = vunpack.c.l.bf16 %v292
    %v377 = vunpack.c.h.bf16 %v292
    %v378 = vunpack.c.l.bf16 %v293
    %v379 = vunpack.c.h.bf16 %v293
    %v380 = vunpack.c.l.bf16 %v294
    %v381 = vunpack.c.h.bf16 %v294
    %v382 = vunpack.c.l.bf16 %v295
    %v383 = vunpack.c.h.bf16 %v295
    %v384 = vunpack.c.l.bf16 %v296
    %v385 = vunpack.c.h.bf16 %v296
    %v386 = vunpack.c.l.bf16 %v297
    %v387 = vunpack.c.h.bf16 %v297
    %v388 = vunpack.c.l.bf16 %v298
    %v389 = vunpack.c.h.bf16 %v298
    %v390 = vunpack.c.l.bf16 %v299
    %v391 = vunpack.c.h.bf16 %v299
    %v392 = vunpack.c.l.bf16 %v300
    %v393 = vunpack.c.h.bf16 %v300
    %v394 = vunpack.c.l.bf16 %v301
    %v395 = vunpack.c.h.bf16 %v301
    %v396 = vunpack.c.l.bf16 %v302
    %v397 = vunpack.c.h.bf16 %v302
    %v398 = vunpack.c.l.bf16 %v303
    %v399 = vunpack.c.h.bf16 %v303
    %v400 = vunpack.c.l.bf16 %v304
    %v401 = vunpack.c.h.bf16 %v304
    %v402 = vunpack.c.l.bf16 %v305
    %v403 = vunpack.c.h.bf16 %v305
    %v404 = vunpack.c.l.bf16 %v306
    %v405 = vunpack.c.h.bf16 %v306
    %v406 = vunpack.c.l.bf16 %v307
    %v407 = vunpack.c.h.bf16 %v307
    %v408 = vunpack.c.l.bf16 %v308
    %v409 = vunpack.c.h.bf16 %v308
    %v410 = vunpack.c.l.bf16 %v309
    %v411 = vunpack.c.h.bf16 %v309
    %v412 = vunpack.c.l.bf16 %v310
    %v413 = vunpack.c.h.bf16 %v310
    %v414 = vunpack.c.l.bf16 %v311
    %v415 = vunpack.c.h.bf16 %v311
    %v416 = vunpack.c.l.bf16 %v312
    %v417 = vunpack.c.h.bf16 %v312
    %v418 = vunpack.c.l.bf16 %v313
    %v419 = vunpack.c.h.bf16 %v313
    %v420 = vunpack.c.l.bf16 %v314
    %v421 = vunpack.c.h.bf16 %v314
    %v422 = vunpack.c.l.bf16 %v315
    %v423 = vunpack.c.h.bf16 %v315
    %v424 = vunpack.c.l.bf16 %v316
    %v425 = vunpack.c.h.bf16 %v316
    %v426 = vunpack.c.l.bf16 %v317
    %v427 = vunpack.c.h.bf16 %v317
    %v428 = vunpack.c.l.bf16 %v318
    %v429 = vunpack.c.h.bf16 %v318
    %v430 = vunpack.c.l.bf16 %v319
    %v431 = vunpack.c.h.bf16 %v319
    %v432 = vunpack.c.l.bf16 %v320
    %v433 = vunpack.c.h.bf16 %v320
    %v434 = vunpack.c.l.bf16 %v321
    %v435 = vunpack.c.h.bf16 %v321
    %v436 = vunpack.c.l.bf16 %v322
    %v437 = vunpack.c.h.bf16 %v322
    %v438 = vunpack.c.l.bf16 %v323
    %v439 = vunpack.c.h.bf16 %v323
    %v440 = vunpack.c.l.bf16 %v324
    %v441 = vunpack.c.h.bf16 %v324
    %v442 = vunpack.c.l.bf16 %v325
    %v443 = vunpack.c.h.bf16 %v325
    %v444 = vunpack.c.l.bf16 %v326
    %v445 = vunpack.c.h.bf16 %v326
    %v446 = vunpack.c.l.bf16 %v327
    %v447 = vunpack.c.h.bf16 %v327
    %v448 = vunpack.c.l.bf16 %v328
    %v449 = vunpack.c.h.bf16 %v328
    %v450 = vunpack.c.l.bf16 %v329
    %v451 = vunpack.c.h.bf16 %v329
    %v452 = vunpack.c.l.bf16 %v330
    %v453 = vunpack.c.h.bf16 %v330
    %v454 = vunpack.c.l.bf16 %v331
    %v455 = vunpack.c.h.bf16 %v331
    %v456 = vunpack.c.l.bf16 %v332
    %v457 = vunpack.c.h.bf16 %v332
    %v458 = vunpack.c.l.bf16 %v333
    %v459 = vunpack.c.h.bf16 %v333
    %v460 = vunpack.c.l.bf16 %v334
    %v461 = vunpack.c.h.bf16 %v334
    %v462 = vunpack.c.l.bf16 %v335
    %v463 = vunpack.c.h.bf16 %v335
    %v464 = vld [vmem:[#allocation8] sm:$0xf]
    %v466 = vlaneseq
    %v467 = vshrl.u32 %v466, 7
    %v468 = vsub.s32 0, %v467
    %v469 = vrot.slane %v464, %v468
    %v470 = vlaneseq
    %v471 = vshrl.u32 %v470, 7
    %v472 = vsub.s32 1, %v471
    %v473 = vrot.slane %v464, %v472
    %v474 = vlaneseq
    %v475 = vshrl.u32 %v474, 7
    %v476 = vsub.s32 2, %v475
    %v477 = vrot.slane %v464, %v476
    %v478 = vlaneseq
    %v479 = vshrl.u32 %v478, 7
    %v480 = vsub.s32 3, %v479
    %v481 = vrot.slane %v464, %v480
    %486 = vmatprep.subr.mxu0 %v337
    %487 = vmatpush1.msra.mxu0 %v336
    %488 = vmatprep.subr.mxu0 %v341
    %489 = vmatpush1.msra.mxu0 %v340
    %490 = vmatprep.subr.mxu0 %v345
    %491 = vmatpush1.msra.mxu0 %v344
    %492 = vmatprep.subr.mxu0 %v349
    %493 = vmatpush1.msra.mxu0 %v348
    %494 = vmatprep.subr.mxu0 %v353
    %495 = vmatpush1.msra.mxu0 %v352
    %496 = vmatprep.subr.mxu0 %v357
    %497 = vmatpush1.msra.mxu0 %v356
    %498 = vmatprep.subr.mxu0 %v361
    %499 = vmatpush1.msra.mxu0 %v360
    %500 = vmatprep.subr.mxu0 %v365
    %501 = vmatpush1.msra.mxu0 %v364
    %502 = vmatprep.subr.mxu0 %v369
    %503 = vmatpush1.msra.mxu0 %v368
    %504 = vmatprep.subr.mxu0 %v373
    %505 = vmatpush1.msra.mxu0 %v372
    %506 = vmatprep.subr.mxu0 %v377
    %507 = vmatpush1.msra.mxu0 %v376
    %508 = vmatprep.subr.mxu0 %v381
    %509 = vmatpush1.msra.mxu0 %v380
    %510 = vmatprep.subr.mxu0 %v385
    %511 = vmatpush1.msra.mxu0 %v384
    %512 = vmatprep.subr.mxu0 %v389
    %513 = vmatpush1.msra.mxu0 %v388
    %514 = vmatprep.subr.mxu0 %v393
    %515 = vmatpush1.msra.mxu0 %v392
    %516 = vmatprep.subr.mxu0 %v397
    %517 = vmatpush1.msra.mxu0 %v396
    %518 = vmatprep.subr.mxu0 %v401
    %519 = vmatpush1.msra.mxu0 %v400
    %520 = vmatprep.subr.mxu0 %v405
    %521 = vmatpush1.msra.mxu0 %v404
    %522 = vmatprep.subr.mxu0 %v409
    %523 = vmatpush1.msra.mxu0 %v408
    %524 = vmatprep.subr.mxu0 %v413
    %525 = vmatpush1.msra.mxu0 %v412
    %526 = vmatprep.subr.mxu0 %v417
    %527 = vmatpush1.msra.mxu0 %v416
    %528 = vmatprep.subr.mxu0 %v421
    %529 = vmatpush1.msra.mxu0 %v420
    %530 = vmatprep.subr.mxu0 %v425
    %531 = vmatpush1.msra.mxu0 %v424
    %532 = vmatprep.subr.mxu0 %v429
    %533 = vmatpush1.msra.mxu0 %v428
    %534 = vmatprep.subr.mxu0 %v433
    %535 = vmatpush1.msra.mxu0 %v432
    %536 = vmatprep.subr.mxu0 %v437
    %537 = vmatpush1.msra.mxu0 %v436
    %538 = vmatprep.subr.mxu0 %v441
    %539 = vmatpush1.msra.mxu0 %v440
    %540 = vmatprep.subr.mxu0 %v445
    %541 = vmatpush1.msra.mxu0 %v444
    %542 = vmatprep.subr.mxu0 %v449
    %543 = vmatpush1.msra.mxu0 %v448
    %544 = vmatprep.subr.mxu0 %v453
    %545 = vmatpush1.msra.mxu0 %v452
    %546 = vmatprep.subr.mxu0 %v457
    %547 = vmatpush1.msra.mxu0 %v456
    %548 = vmatprep.subr.mxu0 %v461
    %549 = vmatpush1.msra.mxu0 %v460
    %550 = vmatprep.mubr.f32.mxu0 %v271
    %551 = vmatmul.mubr.f32.gmra.mrb[0].mxu0 %v270
    %v552 = vpop.f32.mrb[0].mxu0
    %v553 = vadd.f32 %v469, %v552
    %v554 = vpop.f32.mrb[0].mxu0
    %v555 = vadd.f32 %v473, %v554
    %556 = vdwg.mxu0
    %557 = vmatprep.subr.mxu0 %v339
    %558 = vmatpush1.msra.mxu0 %v338
    %559 = vmatprep.subr.mxu0 %v343
    %560 = vmatpush1.msra.mxu0 %v342
    %561 = vmatprep.subr.mxu0 %v347
    %562 = vmatpush1.msra.mxu0 %v346
    %563 = vmatprep.subr.mxu0 %v351
    %564 = vmatpush1.msra.mxu0 %v350
    %565 = vmatprep.subr.mxu0 %v355
    %566 = vmatpush1.msra.mxu0 %v354
    %567 = vmatprep.subr.mxu0 %v359
    %568 = vmatpush1.msra.mxu0 %v358
    %569 = vmatprep.subr.mxu0 %v363
    %570 = vmatpush1.msra.mxu0 %v362
    %571 = vmatprep.subr.mxu0 %v367
    %572 = vmatpush1.msra.mxu0 %v366
    %573 = vmatprep.subr.mxu0 %v371
    %574 = vmatpush1.msra.mxu0 %v370
    %575 = vmatprep.subr.mxu0 %v375
    %576 = vmatpush1.msra.mxu0 %v374
    %577 = vmatprep.subr.mxu0 %v379
    %578 = vmatpush1.msra.mxu0 %v378
    %579 = vmatprep.subr.mxu0 %v383
    %580 = vmatpush1.msra.mxu0 %v382
    %581 = vmatprep.subr.mxu0 %v387
    %582 = vmatpush1.msra.mxu0 %v386
    %583 = vmatprep.subr.mxu0 %v391
    %584 = vmatpush1.msra.mxu0 %v390
    %585 = vmatprep.subr.mxu0 %v395
    %586 = vmatpush1.msra.mxu0 %v394
    %587 = vmatprep.subr.mxu0 %v399
    %588 = vmatpush1.msra.mxu0 %v398
    %589 = vmatprep.subr.mxu0 %v403
    %590 = vmatpush1.msra.mxu0 %v402
    %591 = vmatprep.subr.mxu0 %v407
    %592 = vmatpush1.msra.mxu0 %v406
    %593 = vmatprep.subr.mxu0 %v411
    %594 = vmatpush1.msra.mxu0 %v410
    %595 = vmatprep.subr.mxu0 %v415
    %596 = vmatpush1.msra.mxu0 %v414
    %597 = vmatprep.subr.mxu0 %v419
    %598 = vmatpush1.msra.mxu0 %v418
    %599 = vmatprep.subr.mxu0 %v423
    %600 = vmatpush1.msra.mxu0 %v422
    %601 = vmatprep.subr.mxu0 %v427
    %602 = vmatpush1.msra.mxu0 %v426
    %603 = vmatprep.subr.mxu0 %v431
    %604 = vmatpush1.msra.mxu0 %v430
    %605 = vmatprep.subr.mxu0 %v435
    %606 = vmatpush1.msra.mxu0 %v434
    %607 = vmatprep.subr.mxu0 %v439
    %608 = vmatpush1.msra.mxu0 %v438
    %609 = vmatprep.subr.mxu0 %v443
    %610 = vmatpush1.msra.mxu0 %v442
    %611 = vmatprep.subr.mxu0 %v447
    %612 = vmatpush1.msra.mxu0 %v446
    %613 = vmatprep.subr.mxu0 %v451
    %614 = vmatpush1.msra.mxu0 %v450
    %615 = vmatprep.subr.mxu0 %v455
    %616 = vmatpush1.msra.mxu0 %v454
    %617 = vmatprep.subr.mxu0 %v459
    %618 = vmatpush1.msra.mxu0 %v458
    %619 = vmatprep.subr.mxu0 %v463
    %620 = vmatpush1.msra.mxu0 %v462
    %621 = vmatprep.mubr.f32.mxu0 %v271
    %622 = vmatmul.mubr.f32.gmra.mrb[0].mxu0 %v270
    %v623 = vpop.f32.mrb[0].mxu0
    %v624 = vadd.f32 %v477, %v623
    %v625 = vpop.f32.mrb[0].mxu0
    %v626 = vadd.f32 %v481, %v625
    %627 = vdwg.mxu0
    %vm628 = vcmp.gt.f32.partialorder %v553, 0.0
    %vm629 = vcmp.gt.f32.partialorder %v555, 0.0
    %vm630 = vcmp.gt.f32.partialorder %v624, 0.0
    %vm631 = vcmp.gt.f32.partialorder %v626, 0.0
    %v632 = vmul.f32 %v553, 0.2
    %v633 = vmul.f32 %v555, 0.2
    %v634 = vmul.f32 %v624, 0.2
    %v635 = vmul.f32 %v626, 0.2
    %v636 = vsel %vm628, %v553, %v632
    %v637 = vsel %vm629, %v555, %v633
    %v638 = vsel %vm630, %v624, %v634
    %v639 = vsel %vm631, %v626, %v635
    %v640 = vld [vmem:[#allocation10] sm:$0xff]
    %v641 = vld [vmem:[#allocation10 + $0x8] sm:$0xff]
    %v642 = vld [vmem:[#allocation10 + $0x10] sm:$0xff]
    %v643 = vld [vmem:[#allocation10 + $0x18] sm:$0xff]
    %v644 = vld [vmem:[#allocation10 + $0x20] sm:$0xff]
    %v645 = vld [vmem:[#allocation10 + $0x28] sm:$0xff]
    %v646 = vld [vmem:[#allocation10 + $0x30] sm:$0xff]
    %v647 = vld [vmem:[#allocation10 + $0x38] sm:$0xff]
    %v648 = vld [vmem:[#allocation10 + $0x40] sm:$0xff]
    %v649 = vld [vmem:[#allocation10 + $0x48] sm:$0xff]
    %v650 = vld [vmem:[#allocation10 + $0x50] sm:$0xff]
    %v651 = vld [vmem:[#allocation10 + $0x58] sm:$0xff]
    %v652 = vld [vmem:[#allocation10 + $0x60] sm:$0xff]
    %v653 = vld [vmem:[#allocation10 + $0x68] sm:$0xff]
    %v654 = vld [vmem:[#allocation10 + $0x70] sm:$0xff]
    %v655 = vld [vmem:[#allocation10 + $0x78] sm:$0xff]
    %v656 = vld [vmem:[#allocation10 + $0x80] sm:$0xff]
    %v657 = vld [vmem:[#allocation10 + $0x88] sm:$0xff]
    %v658 = vld [vmem:[#allocation10 + $0x90] sm:$0xff]
    %v659 = vld [vmem:[#allocation10 + $0x98] sm:$0xff]
    %v660 = vld [vmem:[#allocation10 + $0xa0] sm:$0xff]
    %v661 = vld [vmem:[#allocation10 + $0xa8] sm:$0xff]
    %v662 = vld [vmem:[#allocation10 + $0xb0] sm:$0xff]
    %v663 = vld [vmem:[#allocation10 + $0xb8] sm:$0xff]
    %v664 = vld [vmem:[#allocation10 + $0xc0] sm:$0xff]
    %v665 = vld [vmem:[#allocation10 + $0xc8] sm:$0xff]
    %v666 = vld [vmem:[#allocation10 + $0xd0] sm:$0xff]
    %v667 = vld [vmem:[#allocation10 + $0xd8] sm:$0xff]
    %v668 = vld [vmem:[#allocation10 + $0xe0] sm:$0xff]
    %v669 = vld [vmem:[#allocation10 + $0xe8] sm:$0xff]
    %v670 = vld [vmem:[#allocation10 + $0xf0] sm:$0xff]
    %v671 = vld [vmem:[#allocation10 + $0xf8] sm:$0xff]
    %v672 = vld [vmem:[#allocation10 + $0x100] sm:$0xff]
    %v673 = vld [vmem:[#allocation10 + $0x108] sm:$0xff]
    %v674 = vld [vmem:[#allocation10 + $0x110] sm:$0xff]
    %v675 = vld [vmem:[#allocation10 + $0x118] sm:$0xff]
    %v676 = vld [vmem:[#allocation10 + $0x120] sm:$0xff]
    %v677 = vld [vmem:[#allocation10 + $0x128] sm:$0xff]
    %v678 = vld [vmem:[#allocation10 + $0x130] sm:$0xff]
    %v679 = vld [vmem:[#allocation10 + $0x138] sm:$0xff]
    %v680 = vld [vmem:[#allocation10 + $0x140] sm:$0xff]
    %v681 = vld [vmem:[#allocation10 + $0x148] sm:$0xff]
    %v682 = vld [vmem:[#allocation10 + $0x150] sm:$0xff]
    %v683 = vld [vmem:[#allocation10 + $0x158] sm:$0xff]
    %v684 = vld [vmem:[#allocation10 + $0x160] sm:$0xff]
    %v685 = vld [vmem:[#allocation10 + $0x168] sm:$0xff]
    %v686 = vld [vmem:[#allocation10 + $0x170] sm:$0xff]
    %v687 = vld [vmem:[#allocation10 + $0x178] sm:$0xff]
    %v688 = vld [vmem:[#allocation10 + $0x180] sm:$0xff]
    %v689 = vld [vmem:[#allocation10 + $0x188] sm:$0xff]
    %v690 = vld [vmem:[#allocation10 + $0x190] sm:$0xff]
    %v691 = vld [vmem:[#allocation10 + $0x198] sm:$0xff]
    %v692 = vld [vmem:[#allocation10 + $0x1a0] sm:$0xff]
    %v693 = vld [vmem:[#allocation10 + $0x1a8] sm:$0xff]
    %v694 = vld [vmem:[#allocation10 + $0x1b0] sm:$0xff]
    %v695 = vld [vmem:[#allocation10 + $0x1b8] sm:$0xff]
    %v696 = vld [vmem:[#allocation10 + $0x1c0] sm:$0xff]
    %v697 = vld [vmem:[#allocation10 + $0x1c8] sm:$0xff]
    %v698 = vld [vmem:[#allocation10 + $0x1d0] sm:$0xff]
    %v699 = vld [vmem:[#allocation10 + $0x1d8] sm:$0xff]
    %v700 = vld [vmem:[#allocation10 + $0x1e0] sm:$0xff]
    %v701 = vld [vmem:[#allocation10 + $0x1e8] sm:$0xff]
    %v702 = vld [vmem:[#allocation10 + $0x1f0] sm:$0xff]
    %v703 = vld [vmem:[#allocation10 + $0x1f8] sm:$0xff]
    %v704 = vld [vmem:[#allocation10 + $0x200] sm:$0xff]
    %v705 = vld [vmem:[#allocation10 + $0x208] sm:$0xff]
    %v706 = vld [vmem:[#allocation10 + $0x210] sm:$0xff]
    %v707 = vld [vmem:[#allocation10 + $0x218] sm:$0xff]
    %v708 = vld [vmem:[#allocation10 + $0x220] sm:$0xff]
    %v709 = vld [vmem:[#allocation10 + $0x228] sm:$0xff]
    %v710 = vld [vmem:[#allocation10 + $0x230] sm:$0xff]
    %v711 = vld [vmem:[#allocation10 + $0x238] sm:$0xff]
    %v712 = vld [vmem:[#allocation10 + $0x240] sm:$0xff]
    %v713 = vld [vmem:[#allocation10 + $0x248] sm:$0xff]
    %v714 = vld [vmem:[#allocation10 + $0x250] sm:$0xff]
    %v715 = vld [vmem:[#allocation10 + $0x258] sm:$0xff]
    %v716 = vld [vmem:[#allocation10 + $0x260] sm:$0xff]
    %v717 = vld [vmem:[#allocation10 + $0x268] sm:$0xff]
    %v718 = vld [vmem:[#allocation10 + $0x270] sm:$0xff]
    %v719 = vld [vmem:[#allocation10 + $0x278] sm:$0xff]
    %v720 = vld [vmem:[#allocation10 + $0x280] sm:$0xff]
    %v721 = vld [vmem:[#allocation10 + $0x288] sm:$0xff]
    %v722 = vld [vmem:[#allocation10 + $0x290] sm:$0xff]
    %v723 = vld [vmem:[#allocation10 + $0x298] sm:$0xff]
    %v724 = vld [vmem:[#allocation10 + $0x2a0] sm:$0xff]
    %v725 = vld [vmem:[#allocation10 + $0x2a8] sm:$0xff]
    %v726 = vld [vmem:[#allocation10 + $0x2b0] sm:$0xff]
    %v727 = vld [vmem:[#allocation10 + $0x2b8] sm:$0xff]
    %v728 = vld [vmem:[#allocation10 + $0x2c0] sm:$0xff]
    %v729 = vld [vmem:[#allocation10 + $0x2c8] sm:$0xff]
    %v730 = vld [vmem:[#allocation10 + $0x2d0] sm:$0xff]
    %v731 = vld [vmem:[#allocation10 + $0x2d8] sm:$0xff]
    %v732 = vld [vmem:[#allocation10 + $0x2e0] sm:$0xff]
    %v733 = vld [vmem:[#allocation10 + $0x2e8] sm:$0xff]
    %v734 = vld [vmem:[#allocation10 + $0x2f0] sm:$0xff]
    %v735 = vld [vmem:[#allocation10 + $0x2f8] sm:$0xff]
    %v736 = vld [vmem:[#allocation10 + $0x300] sm:$0xff]
    %v737 = vld [vmem:[#allocation10 + $0x308] sm:$0xff]
    %v738 = vld [vmem:[#allocation10 + $0x310] sm:$0xff]
    %v739 = vld [vmem:[#allocation10 + $0x318] sm:$0xff]
    %v740 = vld [vmem:[#allocation10 + $0x320] sm:$0xff]
    %v741 = vld [vmem:[#allocation10 + $0x328] sm:$0xff]
    %v742 = vld [vmem:[#allocation10 + $0x330] sm:$0xff]
    %v743 = vld [vmem:[#allocation10 + $0x338] sm:$0xff]
    %v744 = vld [vmem:[#allocation10 + $0x340] sm:$0xff]
    %v745 = vld [vmem:[#allocation10 + $0x348] sm:$0xff]
    %v746 = vld [vmem:[#allocation10 + $0x350] sm:$0xff]
    %v747 = vld [vmem:[#allocation10 + $0x358] sm:$0xff]
    %v748 = vld [vmem:[#allocation10 + $0x360] sm:$0xff]
    %v749 = vld [vmem:[#allocation10 + $0x368] sm:$0xff]
    %v750 = vld [vmem:[#allocation10 + $0x370] sm:$0xff]
    %v751 = vld [vmem:[#allocation10 + $0x378] sm:$0xff]
    %v752 = vld [vmem:[#allocation10 + $0x380] sm:$0xff]
    %v753 = vld [vmem:[#allocation10 + $0x388] sm:$0xff]
    %v754 = vld [vmem:[#allocation10 + $0x390] sm:$0xff]
    %v755 = vld [vmem:[#allocation10 + $0x398] sm:$0xff]
    %v756 = vld [vmem:[#allocation10 + $0x3a0] sm:$0xff]
    %v757 = vld [vmem:[#allocation10 + $0x3a8] sm:$0xff]
    %v758 = vld [vmem:[#allocation10 + $0x3b0] sm:$0xff]
    %v759 = vld [vmem:[#allocation10 + $0x3b8] sm:$0xff]
    %v760 = vld [vmem:[#allocation10 + $0x3c0] sm:$0xff]
    %v761 = vld [vmem:[#allocation10 + $0x3c8] sm:$0xff]
    %v762 = vld [vmem:[#allocation10 + $0x3d0] sm:$0xff]
    %v763 = vld [vmem:[#allocation10 + $0x3d8] sm:$0xff]
    %v764 = vld [vmem:[#allocation10 + $0x3e0] sm:$0xff]
    %v765 = vld [vmem:[#allocation10 + $0x3e8] sm:$0xff]
    %v766 = vld [vmem:[#allocation10 + $0x3f0] sm:$0xff]
    %v767 = vld [vmem:[#allocation10 + $0x3f8] sm:$0xff]
    %v768 = vld [vmem:[#allocation10 + $0x400] sm:$0xff]
    %v769 = vld [vmem:[#allocation10 + $0x408] sm:$0xff]
    %v770 = vld [vmem:[#allocation10 + $0x410] sm:$0xff]
    %v771 = vld [vmem:[#allocation10 + $0x418] sm:$0xff]
    %v772 = vld [vmem:[#allocation10 + $0x420] sm:$0xff]
    %v773 = vld [vmem:[#allocation10 + $0x428] sm:$0xff]
    %v774 = vld [vmem:[#allocation10 + $0x430] sm:$0xff]
    %v775 = vld [vmem:[#allocation10 + $0x438] sm:$0xff]
    %v776 = vld [vmem:[#allocation10 + $0x440] sm:$0xff]
    %v777 = vld [vmem:[#allocation10 + $0x448] sm:$0xff]
    %v778 = vld [vmem:[#allocation10 + $0x450] sm:$0xff]
    %v779 = vld [vmem:[#allocation10 + $0x458] sm:$0xff]
    %v780 = vld [vmem:[#allocation10 + $0x460] sm:$0xff]
    %v781 = vld [vmem:[#allocation10 + $0x468] sm:$0xff]
    %v782 = vld [vmem:[#allocation10 + $0x470] sm:$0xff]
    %v783 = vld [vmem:[#allocation10 + $0x478] sm:$0xff]
    %v784 = vld [vmem:[#allocation10 + $0x480] sm:$0xff]
    %v785 = vld [vmem:[#allocation10 + $0x488] sm:$0xff]
    %v786 = vld [vmem:[#allocation10 + $0x490] sm:$0xff]
    %v787 = vld [vmem:[#allocation10 + $0x498] sm:$0xff]
    %v788 = vld [vmem:[#allocation10 + $0x4a0] sm:$0xff]
    %v789 = vld [vmem:[#allocation10 + $0x4a8] sm:$0xff]
    %v790 = vld [vmem:[#allocation10 + $0x4b0] sm:$0xff]
    %v791 = vld [vmem:[#allocation10 + $0x4b8] sm:$0xff]
    %v792 = vld [vmem:[#allocation10 + $0x4c0] sm:$0xff]
    %v793 = vld [vmem:[#allocation10 + $0x4c8] sm:$0xff]
    %v794 = vld [vmem:[#allocation10 + $0x4d0] sm:$0xff]
    %v795 = vld [vmem:[#allocation10 + $0x4d8] sm:$0xff]
    %v796 = vld [vmem:[#allocation10 + $0x4e0] sm:$0xff]
    %v797 = vld [vmem:[#allocation10 + $0x4e8] sm:$0xff]
    %v798 = vld [vmem:[#allocation10 + $0x4f0] sm:$0xff]
    %v799 = vld [vmem:[#allocation10 + $0x4f8] sm:$0xff]
    %v800 = vld [vmem:[#allocation10 + $0x500] sm:$0xff]
    %v801 = vld [vmem:[#allocation10 + $0x508] sm:$0xff]
    %v802 = vld [vmem:[#allocation10 + $0x510] sm:$0xff]
    %v803 = vld [vmem:[#allocation10 + $0x518] sm:$0xff]
    %v804 = vld [vmem:[#allocation10 + $0x520] sm:$0xff]
    %v805 = vld [vmem:[#allocation10 + $0x528] sm:$0xff]
    %v806 = vld [vmem:[#allocation10 + $0x530] sm:$0xff]
    %v807 = vld [vmem:[#allocation10 + $0x538] sm:$0xff]
    %v808 = vld [vmem:[#allocation10 + $0x540] sm:$0xff]
    %v809 = vld [vmem:[#allocation10 + $0x548] sm:$0xff]
    %v810 = vld [vmem:[#allocation10 + $0x550] sm:$0xff]
    %v811 = vld [vmem:[#allocation10 + $0x558] sm:$0xff]
    %v812 = vld [vmem:[#allocation10 + $0x560] sm:$0xff]
    %v813 = vld [vmem:[#allocation10 + $0x568] sm:$0xff]
    %v814 = vld [vmem:[#allocation10 + $0x570] sm:$0xff]
    %v815 = vld [vmem:[#allocation10 + $0x578] sm:$0xff]
    %v816 = vld [vmem:[#allocation10 + $0x580] sm:$0xff]
    %v817 = vld [vmem:[#allocation10 + $0x588] sm:$0xff]
    %v818 = vld [vmem:[#allocation10 + $0x590] sm:$0xff]
    %v819 = vld [vmem:[#allocation10 + $0x598] sm:$0xff]
    %v820 = vld [vmem:[#allocation10 + $0x5a0] sm:$0xff]
    %v821 = vld [vmem:[#allocation10 + $0x5a8] sm:$0xff]
    %v822 = vld [vmem:[#allocation10 + $0x5b0] sm:$0xff]
    %v823 = vld [vmem:[#allocation10 + $0x5b8] sm:$0xff]
    %v824 = vld [vmem:[#allocation10 + $0x5c0] sm:$0xff]
    %v825 = vld [vmem:[#allocation10 + $0x5c8] sm:$0xff]
    %v826 = vld [vmem:[#allocation10 + $0x5d0] sm:$0xff]
    %v827 = vld [vmem:[#allocation10 + $0x5d8] sm:$0xff]
    %v828 = vld [vmem:[#allocation10 + $0x5e0] sm:$0xff]
    %v829 = vld [vmem:[#allocation10 + $0x5e8] sm:$0xff]
    %v830 = vld [vmem:[#allocation10 + $0x5f0] sm:$0xff]
    %v831 = vld [vmem:[#allocation10 + $0x5f8] sm:$0xff]
    %v832 = vld [vmem:[#allocation10 + $0x600] sm:$0xff]
    %v833 = vld [vmem:[#allocation10 + $0x608] sm:$0xff]
    %v834 = vld [vmem:[#allocation10 + $0x610] sm:$0xff]
    %v835 = vld [vmem:[#allocation10 + $0x618] sm:$0xff]
    %v836 = vld [vmem:[#allocation10 + $0x620] sm:$0xff]
    %v837 = vld [vmem:[#allocation10 + $0x628] sm:$0xff]
    %v838 = vld [vmem:[#allocation10 + $0x630] sm:$0xff]
    %v839 = vld [vmem:[#allocation10 + $0x638] sm:$0xff]
    %v840 = vld [vmem:[#allocation10 + $0x640] sm:$0xff]
    %v841 = vld [vmem:[#allocation10 + $0x648] sm:$0xff]
    %v842 = vld [vmem:[#allocation10 + $0x650] sm:$0xff]
    %v843 = vld [vmem:[#allocation10 + $0x658] sm:$0xff]
    %v844 = vld [vmem:[#allocation10 + $0x660] sm:$0xff]
    %v845 = vld [vmem:[#allocation10 + $0x668] sm:$0xff]
    %v846 = vld [vmem:[#allocation10 + $0x670] sm:$0xff]
    %v847 = vld [vmem:[#allocation10 + $0x678] sm:$0xff]
    %v848 = vld [vmem:[#allocation10 + $0x680] sm:$0xff]
    %v849 = vld [vmem:[#allocation10 + $0x688] sm:$0xff]
    %v850 = vld [vmem:[#allocation10 + $0x690] sm:$0xff]
    %v851 = vld [vmem:[#allocation10 + $0x698] sm:$0xff]
    %v852 = vld [vmem:[#allocation10 + $0x6a0] sm:$0xff]
    %v853 = vld [vmem:[#allocation10 + $0x6a8] sm:$0xff]
    %v854 = vld [vmem:[#allocation10 + $0x6b0] sm:$0xff]
    %v855 = vld [vmem:[#allocation10 + $0x6b8] sm:$0xff]
    %v856 = vld [vmem:[#allocation10 + $0x6c0] sm:$0xff]
    %v857 = vld [vmem:[#allocation10 + $0x6c8] sm:$0xff]
    %v858 = vld [vmem:[#allocation10 + $0x6d0] sm:$0xff]
    %v859 = vld [vmem:[#allocation10 + $0x6d8] sm:$0xff]
    %v860 = vld [vmem:[#allocation10 + $0x6e0] sm:$0xff]
    %v861 = vld [vmem:[#allocation10 + $0x6e8] sm:$0xff]
    %v862 = vld [vmem:[#allocation10 + $0x6f0] sm:$0xff]
    %v863 = vld [vmem:[#allocation10 + $0x6f8] sm:$0xff]
    %v864 = vld [vmem:[#allocation10 + $0x700] sm:$0xff]
    %v865 = vld [vmem:[#allocation10 + $0x708] sm:$0xff]
    %v866 = vld [vmem:[#allocation10 + $0x710] sm:$0xff]
    %v867 = vld [vmem:[#allocation10 + $0x718] sm:$0xff]
    %v868 = vld [vmem:[#allocation10 + $0x720] sm:$0xff]
    %v869 = vld [vmem:[#allocation10 + $0x728] sm:$0xff]
    %v870 = vld [vmem:[#allocation10 + $0x730] sm:$0xff]
    %v871 = vld [vmem:[#allocation10 + $0x738] sm:$0xff]
    %v872 = vld [vmem:[#allocation10 + $0x740] sm:$0xff]
    %v873 = vld [vmem:[#allocation10 + $0x748] sm:$0xff]
    %v874 = vld [vmem:[#allocation10 + $0x750] sm:$0xff]
    %v875 = vld [vmem:[#allocation10 + $0x758] sm:$0xff]
    %v876 = vld [vmem:[#allocation10 + $0x760] sm:$0xff]
    %v877 = vld [vmem:[#allocation10 + $0x768] sm:$0xff]
    %v878 = vld [vmem:[#allocation10 + $0x770] sm:$0xff]
    %v879 = vld [vmem:[#allocation10 + $0x778] sm:$0xff]
    %v880 = vld [vmem:[#allocation10 + $0x780] sm:$0xff]
    %v881 = vld [vmem:[#allocation10 + $0x788] sm:$0xff]
    %v882 = vld [vmem:[#allocation10 + $0x790] sm:$0xff]
    %v883 = vld [vmem:[#allocation10 + $0x798] sm:$0xff]
    %v884 = vld [vmem:[#allocation10 + $0x7a0] sm:$0xff]
    %v885 = vld [vmem:[#allocation10 + $0x7a8] sm:$0xff]
    %v886 = vld [vmem:[#allocation10 + $0x7b0] sm:$0xff]
    %v887 = vld [vmem:[#allocation10 + $0x7b8] sm:$0xff]
    %v888 = vld [vmem:[#allocation10 + $0x7c0] sm:$0xff]
    %v889 = vld [vmem:[#allocation10 + $0x7c8] sm:$0xff]
    %v890 = vld [vmem:[#allocation10 + $0x7d0] sm:$0xff]
    %v891 = vld [vmem:[#allocation10 + $0x7d8] sm:$0xff]
    %v892 = vld [vmem:[#allocation10 + $0x7e0] sm:$0xff]
    %v893 = vld [vmem:[#allocation10 + $0x7e8] sm:$0xff]
    %v894 = vld [vmem:[#allocation10 + $0x7f0] sm:$0xff]
    %v895 = vld [vmem:[#allocation10 + $0x7f8] sm:$0xff]
    %v896 = vunpack.c.l.bf16 %v640
    %v897 = vunpack.c.h.bf16 %v640
    %v898 = vunpack.c.l.bf16 %v641
    %v899 = vunpack.c.h.bf16 %v641
    %v900 = vunpack.c.l.bf16 %v642
    %v901 = vunpack.c.h.bf16 %v642
    %v902 = vunpack.c.l.bf16 %v643
    %v903 = vunpack.c.h.bf16 %v643
    %v904 = vunpack.c.l.bf16 %v644
    %v905 = vunpack.c.h.bf16 %v644
    %v906 = vunpack.c.l.bf16 %v645
    %v907 = vunpack.c.h.bf16 %v645
    %v908 = vunpack.c.l.bf16 %v646
    %v909 = vunpack.c.h.bf16 %v646
    %v910 = vunpack.c.l.bf16 %v647
    %v911 = vunpack.c.h.bf16 %v647
    %v912 = vunpack.c.l.bf16 %v648
    %v913 = vunpack.c.h.bf16 %v648
    %v914 = vunpack.c.l.bf16 %v649
    %v915 = vunpack.c.h.bf16 %v649
    %v916 = vunpack.c.l.bf16 %v650
    %v917 = vunpack.c.h.bf16 %v650
    %v918 = vunpack.c.l.bf16 %v651
    %v919 = vunpack.c.h.bf16 %v651
    %v920 = vunpack.c.l.bf16 %v652
    %v921 = vunpack.c.h.bf16 %v652
    %v922 = vunpack.c.l.bf16 %v653
    %v923 = vunpack.c.h.bf16 %v653
    %v924 = vunpack.c.l.bf16 %v654
    %v925 = vunpack.c.h.bf16 %v654
    %v926 = vunpack.c.l.bf16 %v655
    %v927 = vunpack.c.h.bf16 %v655
    %v928 = vunpack.c.l.bf16 %v656
    %v929 = vunpack.c.h.bf16 %v656
    %v930 = vunpack.c.l.bf16 %v657
    %v931 = vunpack.c.h.bf16 %v657
    %v932 = vunpack.c.l.bf16 %v658
    %v933 = vunpack.c.h.bf16 %v658
    %v934 = vunpack.c.l.bf16 %v659
    %v935 = vunpack.c.h.bf16 %v659
    %v936 = vunpack.c.l.bf16 %v660
    %v937 = vunpack.c.h.bf16 %v660
    %v938 = vunpack.c.l.bf16 %v661
    %v939 = vunpack.c.h.bf16 %v661
    %v940 = vunpack.c.l.bf16 %v662
    %v941 = vunpack.c.h.bf16 %v662
    %v942 = vunpack.c.l.bf16 %v663
    %v943 = vunpack.c.h.bf16 %v663
    %v944 = vunpack.c.l.bf16 %v664
    %v945 = vunpack.c.h.bf16 %v664
    %v946 = vunpack.c.l.bf16 %v665
    %v947 = vunpack.c.h.bf16 %v665
    %v948 = vunpack.c.l.bf16 %v666
    %v949 = vunpack.c.h.bf16 %v666
    %v950 = vunpack.c.l.bf16 %v667
    %v951 = vunpack.c.h.bf16 %v667
    %v952 = vunpack.c.l.bf16 %v668
    %v953 = vunpack.c.h.bf16 %v668
    %v954 = vunpack.c.l.bf16 %v669
    %v955 = vunpack.c.h.bf16 %v669
    %v956 = vunpack.c.l.bf16 %v670
    %v957 = vunpack.c.h.bf16 %v670
    %v958 = vunpack.c.l.bf16 %v671
    %v959 = vunpack.c.h.bf16 %v671
    %v960 = vunpack.c.l.bf16 %v672
    %v961 = vunpack.c.h.bf16 %v672
    %v962 = vunpack.c.l.bf16 %v673
    %v963 = vunpack.c.h.bf16 %v673
    %v964 = vunpack.c.l.bf16 %v674
    %v965 = vunpack.c.h.bf16 %v674
    %v966 = vunpack.c.l.bf16 %v675
    %v967 = vunpack.c.h.bf16 %v675
    %v968 = vunpack.c.l.bf16 %v676
    %v969 = vunpack.c.h.bf16 %v676
    %v970 = vunpack.c.l.bf16 %v677
    %v971 = vunpack.c.h.bf16 %v677
    %v972 = vunpack.c.l.bf16 %v678
    %v973 = vunpack.c.h.bf16 %v678
    %v974 = vunpack.c.l.bf16 %v679
    %v975 = vunpack.c.h.bf16 %v679
    %v976 = vunpack.c.l.bf16 %v680
    %v977 = vunpack.c.h.bf16 %v680
    %v978 = vunpack.c.l.bf16 %v681
    %v979 = vunpack.c.h.bf16 %v681
    %v980 = vunpack.c.l.bf16 %v682
    %v981 = vunpack.c.h.bf16 %v682
    %v982 = vunpack.c.l.bf16 %v683
    %v983 = vunpack.c.h.bf16 %v683
    %v984 = vunpack.c.l.bf16 %v684
    %v985 = vunpack.c.h.bf16 %v684
    %v986 = vunpack.c.l.bf16 %v685
    %v987 = vunpack.c.h.bf16 %v685
    %v988 = vunpack.c.l.bf16 %v686
    %v989 = vunpack.c.h.bf16 %v686
    %v990 = vunpack.c.l.bf16 %v687
    %v991 = vunpack.c.h.bf16 %v687
    %v992 = vunpack.c.l.bf16 %v688
    %v993 = vunpack.c.h.bf16 %v688
    %v994 = vunpack.c.l.bf16 %v689
    %v995 = vunpack.c.h.bf16 %v689
    %v996 = vunpack.c.l.bf16 %v690
    %v997 = vunpack.c.h.bf16 %v690
    %v998 = vunpack.c.l.bf16 %v691
    %v999 = vunpack.c.h.bf16 %v691
    %v1000 = vunpack.c.l.bf16 %v692
    %v1001 = vunpack.c.h.bf16 %v692
    %v1002 = vunpack.c.l.bf16 %v693
    %v1003 = vunpack.c.h.bf16 %v693
    %v1004 = vunpack.c.l.bf16 %v694
    %v1005 = vunpack.c.h.bf16 %v694
    %v1006 = vunpack.c.l.bf16 %v695
    %v1007 = vunpack.c.h.bf16 %v695
    %v1008 = vunpack.c.l.bf16 %v696
    %v1009 = vunpack.c.h.bf16 %v696
    %v1010 = vunpack.c.l.bf16 %v697
    %v1011 = vunpack.c.h.bf16 %v697
    %v1012 = vunpack.c.l.bf16 %v698
    %v1013 = vunpack.c.h.bf16 %v698
    %v1014 = vunpack.c.l.bf16 %v699
    %v1015 = vunpack.c.h.bf16 %v699
    %v1016 = vunpack.c.l.bf16 %v700
    %v1017 = vunpack.c.h.bf16 %v700
    %v1018 = vunpack.c.l.bf16 %v701
    %v1019 = vunpack.c.h.bf16 %v701
    %v1020 = vunpack.c.l.bf16 %v702
    %v1021 = vunpack.c.h.bf16 %v702
    %v1022 = vunpack.c.l.bf16 %v703
    %v1023 = vunpack.c.h.bf16 %v703
    %v1024 = vunpack.c.l.bf16 %v704
    %v1025 = vunpack.c.h.bf16 %v704
    %v1026 = vunpack.c.l.bf16 %v705
    %v1027 = vunpack.c.h.bf16 %v705
    %v1028 = vunpack.c.l.bf16 %v706
    %v1029 = vunpack.c.h.bf16 %v706
    %v1030 = vunpack.c.l.bf16 %v707
    %v1031 = vunpack.c.h.bf16 %v707
    %v1032 = vunpack.c.l.bf16 %v708
    %v1033 = vunpack.c.h.bf16 %v708
    %v1034 = vunpack.c.l.bf16 %v709
    %v1035 = vunpack.c.h.bf16 %v709
    %v1036 = vunpack.c.l.bf16 %v710
    %v1037 = vunpack.c.h.bf16 %v710
    %v1038 = vunpack.c.l.bf16 %v711
    %v1039 = vunpack.c.h.bf16 %v711
    %v1040 = vunpack.c.l.bf16 %v712
    %v1041 = vunpack.c.h.bf16 %v712
    %v1042 = vunpack.c.l.bf16 %v713
    %v1043 = vunpack.c.h.bf16 %v713
    %v1044 = vunpack.c.l.bf16 %v714
    %v1045 = vunpack.c.h.bf16 %v714
    %v1046 = vunpack.c.l.bf16 %v715
    %v1047 = vunpack.c.h.bf16 %v715
    %v1048 = vunpack.c.l.bf16 %v716
    %v1049 = vunpack.c.h.bf16 %v716
    %v1050 = vunpack.c.l.bf16 %v717
    %v1051 = vunpack.c.h.bf16 %v717
    %v1052 = vunpack.c.l.bf16 %v718
    %v1053 = vunpack.c.h.bf16 %v718
    %v1054 = vunpack.c.l.bf16 %v719
    %v1055 = vunpack.c.h.bf16 %v719
    %v1056 = vunpack.c.l.bf16 %v720
    %v1057 = vunpack.c.h.bf16 %v720
    %v1058 = vunpack.c.l.bf16 %v721
    %v1059 = vunpack.c.h.bf16 %v721
    %v1060 = vunpack.c.l.bf16 %v722
    %v1061 = vunpack.c.h.bf16 %v722
    %v1062 = vunpack.c.l.bf16 %v723
    %v1063 = vunpack.c.h.bf16 %v723
    %v1064 = vunpack.c.l.bf16 %v724
    %v1065 = vunpack.c.h.bf16 %v724
    %v1066 = vunpack.c.l.bf16 %v725
    %v1067 = vunpack.c.h.bf16 %v725
    %v1068 = vunpack.c.l.bf16 %v726
    %v1069 = vunpack.c.h.bf16 %v726
    %v1070 = vunpack.c.l.bf16 %v727
    %v1071 = vunpack.c.h.bf16 %v727
    %v1072 = vunpack.c.l.bf16 %v728
    %v1073 = vunpack.c.h.bf16 %v728
    %v1074 = vunpack.c.l.bf16 %v729
    %v1075 = vunpack.c.h.bf16 %v729
    %v1076 = vunpack.c.l.bf16 %v730
    %v1077 = vunpack.c.h.bf16 %v730
    %v1078 = vunpack.c.l.bf16 %v731
    %v1079 = vunpack.c.h.bf16 %v731
    %v1080 = vunpack.c.l.bf16 %v732
    %v1081 = vunpack.c.h.bf16 %v732
    %v1082 = vunpack.c.l.bf16 %v733
    %v1083 = vunpack.c.h.bf16 %v733
    %v1084 = vunpack.c.l.bf16 %v734
    %v1085 = vunpack.c.h.bf16 %v734
    %v1086 = vunpack.c.l.bf16 %v735
    %v1087 = vunpack.c.h.bf16 %v735
    %v1088 = vunpack.c.l.bf16 %v736
    %v1089 = vunpack.c.h.bf16 %v736
    %v1090 = vunpack.c.l.bf16 %v737
    %v1091 = vunpack.c.h.bf16 %v737
    %v1092 = vunpack.c.l.bf16 %v738
    %v1093 = vunpack.c.h.bf16 %v738
    %v1094 = vunpack.c.l.bf16 %v739
    %v1095 = vunpack.c.h.bf16 %v739
    %v1096 = vunpack.c.l.bf16 %v740
    %v1097 = vunpack.c.h.bf16 %v740
    %v1098 = vunpack.c.l.bf16 %v741
    %v1099 = vunpack.c.h.bf16 %v741
    %v1100 = vunpack.c.l.bf16 %v742
    %v1101 = vunpack.c.h.bf16 %v742
    %v1102 = vunpack.c.l.bf16 %v743
    %v1103 = vunpack.c.h.bf16 %v743
    %v1104 = vunpack.c.l.bf16 %v744
    %v1105 = vunpack.c.h.bf16 %v744
    %v1106 = vunpack.c.l.bf16 %v745
    %v1107 = vunpack.c.h.bf16 %v745
    %v1108 = vunpack.c.l.bf16 %v746
    %v1109 = vunpack.c.h.bf16 %v746
    %v1110 = vunpack.c.l.bf16 %v747
    %v1111 = vunpack.c.h.bf16 %v747
    %v1112 = vunpack.c.l.bf16 %v748
    %v1113 = vunpack.c.h.bf16 %v748
    %v1114 = vunpack.c.l.bf16 %v749
    %v1115 = vunpack.c.h.bf16 %v749
    %v1116 = vunpack.c.l.bf16 %v750
    %v1117 = vunpack.c.h.bf16 %v750
    %v1118 = vunpack.c.l.bf16 %v751
    %v1119 = vunpack.c.h.bf16 %v751
    %v1120 = vunpack.c.l.bf16 %v752
    %v1121 = vunpack.c.h.bf16 %v752
    %v1122 = vunpack.c.l.bf16 %v753
    %v1123 = vunpack.c.h.bf16 %v753
    %v1124 = vunpack.c.l.bf16 %v754
    %v1125 = vunpack.c.h.bf16 %v754
    %v1126 = vunpack.c.l.bf16 %v755
    %v1127 = vunpack.c.h.bf16 %v755
    %v1128 = vunpack.c.l.bf16 %v756
    %v1129 = vunpack.c.h.bf16 %v756
    %v1130 = vunpack.c.l.bf16 %v757
    %v1131 = vunpack.c.h.bf16 %v757
    %v1132 = vunpack.c.l.bf16 %v758
    %v1133 = vunpack.c.h.bf16 %v758
    %v1134 = vunpack.c.l.bf16 %v759
    %v1135 = vunpack.c.h.bf16 %v759
    %v1136 = vunpack.c.l.bf16 %v760
    %v1137 = vunpack.c.h.bf16 %v760
    %v1138 = vunpack.c.l.bf16 %v761
    %v1139 = vunpack.c.h.bf16 %v761
    %v1140 = vunpack.c.l.bf16 %v762
    %v1141 = vunpack.c.h.bf16 %v762
    %v1142 = vunpack.c.l.bf16 %v763
    %v1143 = vunpack.c.h.bf16 %v763
    %v1144 = vunpack.c.l.bf16 %v764
    %v1145 = vunpack.c.h.bf16 %v764
    %v1146 = vunpack.c.l.bf16 %v765
    %v1147 = vunpack.c.h.bf16 %v765
    %v1148 = vunpack.c.l.bf16 %v766
    %v1149 = vunpack.c.h.bf16 %v766
    %v1150 = vunpack.c.l.bf16 %v767
    %v1151 = vunpack.c.h.bf16 %v767
    %v1152 = vunpack.c.l.bf16 %v768
    %v1153 = vunpack.c.h.bf16 %v768
    %v1154 = vunpack.c.l.bf16 %v769
    %v1155 = vunpack.c.h.bf16 %v769
    %v1156 = vunpack.c.l.bf16 %v770
    %v1157 = vunpack.c.h.bf16 %v770
    %v1158 = vunpack.c.l.bf16 %v771
    %v1159 = vunpack.c.h.bf16 %v771
    %v1160 = vunpack.c.l.bf16 %v772
    %v1161 = vunpack.c.h.bf16 %v772
    %v1162 = vunpack.c.l.bf16 %v773
    %v1163 = vunpack.c.h.bf16 %v773
    %v1164 = vunpack.c.l.bf16 %v774
    %v1165 = vunpack.c.h.bf16 %v774
    %v1166 = vunpack.c.l.bf16 %v775
    %v1167 = vunpack.c.h.bf16 %v775
    %v1168 = vunpack.c.l.bf16 %v776
    %v1169 = vunpack.c.h.bf16 %v776
    %v1170 = vunpack.c.l.bf16 %v777
    %v1171 = vunpack.c.h.bf16 %v777
    %v1172 = vunpack.c.l.bf16 %v778
    %v1173 = vunpack.c.h.bf16 %v778
    %v1174 = vunpack.c.l.bf16 %v779
    %v1175 = vunpack.c.h.bf16 %v779
    %v1176 = vunpack.c.l.bf16 %v780
    %v1177 = vunpack.c.h.bf16 %v780
    %v1178 = vunpack.c.l.bf16 %v781
    %v1179 = vunpack.c.h.bf16 %v781
    %v1180 = vunpack.c.l.bf16 %v782
    %v1181 = vunpack.c.h.bf16 %v782
    %v1182 = vunpack.c.l.bf16 %v783
    %v1183 = vunpack.c.h.bf16 %v783
    %v1184 = vunpack.c.l.bf16 %v784
    %v1185 = vunpack.c.h.bf16 %v784
    %v1186 = vunpack.c.l.bf16 %v785
    %v1187 = vunpack.c.h.bf16 %v785
    %v1188 = vunpack.c.l.bf16 %v786
    %v1189 = vunpack.c.h.bf16 %v786
    %v1190 = vunpack.c.l.bf16 %v787
    %v1191 = vunpack.c.h.bf16 %v787
    %v1192 = vunpack.c.l.bf16 %v788
    %v1193 = vunpack.c.h.bf16 %v788
    %v1194 = vunpack.c.l.bf16 %v789
    %v1195 = vunpack.c.h.bf16 %v789
    %v1196 = vunpack.c.l.bf16 %v790
    %v1197 = vunpack.c.h.bf16 %v790
    %v1198 = vunpack.c.l.bf16 %v791
    %v1199 = vunpack.c.h.bf16 %v791
    %v1200 = vunpack.c.l.bf16 %v792
    %v1201 = vunpack.c.h.bf16 %v792
    %v1202 = vunpack.c.l.bf16 %v793
    %v1203 = vunpack.c.h.bf16 %v793
    %v1204 = vunpack.c.l.bf16 %v794
    %v1205 = vunpack.c.h.bf16 %v794
    %v1206 = vunpack.c.l.bf16 %v795
    %v1207 = vunpack.c.h.bf16 %v795
    %v1208 = vunpack.c.l.bf16 %v796
    %v1209 = vunpack.c.h.bf16 %v796
    %v1210 = vunpack.c.l.bf16 %v797
    %v1211 = vunpack.c.h.bf16 %v797
    %v1212 = vunpack.c.l.bf16 %v798
    %v1213 = vunpack.c.h.bf16 %v798
    %v1214 = vunpack.c.l.bf16 %v799
    %v1215 = vunpack.c.h.bf16 %v799
    %v1216 = vunpack.c.l.bf16 %v800
    %v1217 = vunpack.c.h.bf16 %v800
    %v1218 = vunpack.c.l.bf16 %v801
    %v1219 = vunpack.c.h.bf16 %v801
    %v1220 = vunpack.c.l.bf16 %v802
    %v1221 = vunpack.c.h.bf16 %v802
    %v1222 = vunpack.c.l.bf16 %v803
    %v1223 = vunpack.c.h.bf16 %v803
    %v1224 = vunpack.c.l.bf16 %v804
    %v1225 = vunpack.c.h.bf16 %v804
    %v1226 = vunpack.c.l.bf16 %v805
    %v1227 = vunpack.c.h.bf16 %v805
    %v1228 = vunpack.c.l.bf16 %v806
    %v1229 = vunpack.c.h.bf16 %v806
    %v1230 = vunpack.c.l.bf16 %v807
    %v1231 = vunpack.c.h.bf16 %v807
    %v1232 = vunpack.c.l.bf16 %v808
    %v1233 = vunpack.c.h.bf16 %v808
    %v1234 = vunpack.c.l.bf16 %v809
    %v1235 = vunpack.c.h.bf16 %v809
    %v1236 = vunpack.c.l.bf16 %v810
    %v1237 = vunpack.c.h.bf16 %v810
    %v1238 = vunpack.c.l.bf16 %v811
    %v1239 = vunpack.c.h.bf16 %v811
    %v1240 = vunpack.c.l.bf16 %v812
    %v1241 = vunpack.c.h.bf16 %v812
    %v1242 = vunpack.c.l.bf16 %v813
    %v1243 = vunpack.c.h.bf16 %v813
    %v1244 = vunpack.c.l.bf16 %v814
    %v1245 = vunpack.c.h.bf16 %v814
    %v1246 = vunpack.c.l.bf16 %v815
    %v1247 = vunpack.c.h.bf16 %v815
    %v1248 = vunpack.c.l.bf16 %v816
    %v1249 = vunpack.c.h.bf16 %v816
    %v1250 = vunpack.c.l.bf16 %v817
    %v1251 = vunpack.c.h.bf16 %v817
    %v1252 = vunpack.c.l.bf16 %v818
    %v1253 = vunpack.c.h.bf16 %v818
    %v1254 = vunpack.c.l.bf16 %v819
    %v1255 = vunpack.c.h.bf16 %v819
    %v1256 = vunpack.c.l.bf16 %v820
    %v1257 = vunpack.c.h.bf16 %v820
    %v1258 = vunpack.c.l.bf16 %v821
    %v1259 = vunpack.c.h.bf16 %v821
    %v1260 = vunpack.c.l.bf16 %v822
    %v1261 = vunpack.c.h.bf16 %v822
    %v1262 = vunpack.c.l.bf16 %v823
    %v1263 = vunpack.c.h.bf16 %v823
    %v1264 = vunpack.c.l.bf16 %v824
    %v1265 = vunpack.c.h.bf16 %v824
    %v1266 = vunpack.c.l.bf16 %v825
    %v1267 = vunpack.c.h.bf16 %v825
    %v1268 = vunpack.c.l.bf16 %v826
    %v1269 = vunpack.c.h.bf16 %v826
    %v1270 = vunpack.c.l.bf16 %v827
    %v1271 = vunpack.c.h.bf16 %v827
    %v1272 = vunpack.c.l.bf16 %v828
    %v1273 = vunpack.c.h.bf16 %v828
    %v1274 = vunpack.c.l.bf16 %v829
    %v1275 = vunpack.c.h.bf16 %v829
    %v1276 = vunpack.c.l.bf16 %v830
    %v1277 = vunpack.c.h.bf16 %v830
    %v1278 = vunpack.c.l.bf16 %v831
    %v1279 = vunpack.c.h.bf16 %v831
    %v1280 = vunpack.c.l.bf16 %v832
    %v1281 = vunpack.c.h.bf16 %v832
    %v1282 = vunpack.c.l.bf16 %v833
    %v1283 = vunpack.c.h.bf16 %v833
    %v1284 = vunpack.c.l.bf16 %v834
    %v1285 = vunpack.c.h.bf16 %v834
    %v1286 = vunpack.c.l.bf16 %v835
    %v1287 = vunpack.c.h.bf16 %v835
    %v1288 = vunpack.c.l.bf16 %v836
    %v1289 = vunpack.c.h.bf16 %v836
    %v1290 = vunpack.c.l.bf16 %v837
    %v1291 = vunpack.c.h.bf16 %v837
    %v1292 = vunpack.c.l.bf16 %v838
    %v1293 = vunpack.c.h.bf16 %v838
    %v1294 = vunpack.c.l.bf16 %v839
    %v1295 = vunpack.c.h.bf16 %v839
    %v1296 = vunpack.c.l.bf16 %v840
    %v1297 = vunpack.c.h.bf16 %v840
    %v1298 = vunpack.c.l.bf16 %v841
    %v1299 = vunpack.c.h.bf16 %v841
    %v1300 = vunpack.c.l.bf16 %v842
    %v1301 = vunpack.c.h.bf16 %v842
    %v1302 = vunpack.c.l.bf16 %v843
    %v1303 = vunpack.c.h.bf16 %v843
    %v1304 = vunpack.c.l.bf16 %v844
    %v1305 = vunpack.c.h.bf16 %v844
    %v1306 = vunpack.c.l.bf16 %v845
    %v1307 = vunpack.c.h.bf16 %v845
    %v1308 = vunpack.c.l.bf16 %v846
    %v1309 = vunpack.c.h.bf16 %v846
    %v1310 = vunpack.c.l.bf16 %v847
    %v1311 = vunpack.c.h.bf16 %v847
    %v1312 = vunpack.c.l.bf16 %v848
    %v1313 = vunpack.c.h.bf16 %v848
    %v1314 = vunpack.c.l.bf16 %v849
    %v1315 = vunpack.c.h.bf16 %v849
    %v1316 = vunpack.c.l.bf16 %v850
    %v1317 = vunpack.c.h.bf16 %v850
    %v1318 = vunpack.c.l.bf16 %v851
    %v1319 = vunpack.c.h.bf16 %v851
    %v1320 = vunpack.c.l.bf16 %v852
    %v1321 = vunpack.c.h.bf16 %v852
    %v1322 = vunpack.c.l.bf16 %v853
    %v1323 = vunpack.c.h.bf16 %v853
    %v1324 = vunpack.c.l.bf16 %v854
    %v1325 = vunpack.c.h.bf16 %v854
    %v1326 = vunpack.c.l.bf16 %v855
    %v1327 = vunpack.c.h.bf16 %v855
    %v1328 = vunpack.c.l.bf16 %v856
    %v1329 = vunpack.c.h.bf16 %v856
    %v1330 = vunpack.c.l.bf16 %v857
    %v1331 = vunpack.c.h.bf16 %v857
    %v1332 = vunpack.c.l.bf16 %v858
    %v1333 = vunpack.c.h.bf16 %v858
    %v1334 = vunpack.c.l.bf16 %v859
    %v1335 = vunpack.c.h.bf16 %v859
    %v1336 = vunpack.c.l.bf16 %v860
    %v1337 = vunpack.c.h.bf16 %v860
    %v1338 = vunpack.c.l.bf16 %v861
    %v1339 = vunpack.c.h.bf16 %v861
    %v1340 = vunpack.c.l.bf16 %v862
    %v1341 = vunpack.c.h.bf16 %v862
    %v1342 = vunpack.c.l.bf16 %v863
    %v1343 = vunpack.c.h.bf16 %v863
    %v1344 = vunpack.c.l.bf16 %v864
    %v1345 = vunpack.c.h.bf16 %v864
    %v1346 = vunpack.c.l.bf16 %v865
    %v1347 = vunpack.c.h.bf16 %v865
    %v1348 = vunpack.c.l.bf16 %v866
    %v1349 = vunpack.c.h.bf16 %v866
    %v1350 = vunpack.c.l.bf16 %v867
    %v1351 = vunpack.c.h.bf16 %v867
    %v1352 = vunpack.c.l.bf16 %v868
    %v1353 = vunpack.c.h.bf16 %v868
    %v1354 = vunpack.c.l.bf16 %v869
    %v1355 = vunpack.c.h.bf16 %v869
    %v1356 = vunpack.c.l.bf16 %v870
    %v1357 = vunpack.c.h.bf16 %v870
    %v1358 = vunpack.c.l.bf16 %v871
    %v1359 = vunpack.c.h.bf16 %v871
    %v1360 = vunpack.c.l.bf16 %v872
    %v1361 = vunpack.c.h.bf16 %v872
    %v1362 = vunpack.c.l.bf16 %v873
    %v1363 = vunpack.c.h.bf16 %v873
    %v1364 = vunpack.c.l.bf16 %v874
    %v1365 = vunpack.c.h.bf16 %v874
    %v1366 = vunpack.c.l.bf16 %v875
    %v1367 = vunpack.c.h.bf16 %v875
    %v1368 = vunpack.c.l.bf16 %v876
    %v1369 = vunpack.c.h.bf16 %v876
    %v1370 = vunpack.c.l.bf16 %v877
    %v1371 = vunpack.c.h.bf16 %v877
    %v1372 = vunpack.c.l.bf16 %v878
    %v1373 = vunpack.c.h.bf16 %v878
    %v1374 = vunpack.c.l.bf16 %v879
    %v1375 = vunpack.c.h.bf16 %v879
    %v1376 = vunpack.c.l.bf16 %v880
    %v1377 = vunpack.c.h.bf16 %v880
    %v1378 = vunpack.c.l.bf16 %v881
    %v1379 = vunpack.c.h.bf16 %v881
    %v1380 = vunpack.c.l.bf16 %v882
    %v1381 = vunpack.c.h.bf16 %v882
    %v1382 = vunpack.c.l.bf16 %v883
    %v1383 = vunpack.c.h.bf16 %v883
    %v1384 = vunpack.c.l.bf16 %v884
    %v1385 = vunpack.c.h.bf16 %v884
    %v1386 = vunpack.c.l.bf16 %v885
    %v1387 = vunpack.c.h.bf16 %v885
    %v1388 = vunpack.c.l.bf16 %v886
    %v1389 = vunpack.c.h.bf16 %v886
    %v1390 = vunpack.c.l.bf16 %v887
    %v1391 = vunpack.c.h.bf16 %v887
    %v1392 = vunpack.c.l.bf16 %v888
    %v1393 = vunpack.c.h.bf16 %v888
    %v1394 = vunpack.c.l.bf16 %v889
    %v1395 = vunpack.c.h.bf16 %v889
    %v1396 = vunpack.c.l.bf16 %v890
    %v1397 = vunpack.c.h.bf16 %v890
    %v1398 = vunpack.c.l.bf16 %v891
    %v1399 = vunpack.c.h.bf16 %v891
    %v1400 = vunpack.c.l.bf16 %v892
    %v1401 = vunpack.c.h.bf16 %v892
    %v1402 = vunpack.c.l.bf16 %v893
    %v1403 = vunpack.c.h.bf16 %v893
    %v1404 = vunpack.c.l.bf16 %v894
    %v1405 = vunpack.c.h.bf16 %v894
    %v1406 = vunpack.c.l.bf16 %v895
    %v1407 = vunpack.c.h.bf16 %v895
    %v1408 = vld [vmem:[#allocation11] sm:$0xff]
    %v1410 = vlaneseq
    %v1411 = vshrl.u32 %v1410, 7
    %v1412 = vsub.s32 0, %v1411
    %v1413 = vrot.slane %v1408, %v1412
    %v1414 = vlaneseq
    %v1415 = vshrl.u32 %v1414, 7
    %v1416 = vsub.s32 1, %v1415
    %v1417 = vrot.slane %v1408, %v1416
    %v1418 = vlaneseq
    %v1419 = vshrl.u32 %v1418, 7
    %v1420 = vsub.s32 2, %v1419
    %v1421 = vrot.slane %v1408, %v1420
    %v1422 = vlaneseq
    %v1423 = vshrl.u32 %v1422, 7
    %v1424 = vsub.s32 3, %v1423
    %v1425 = vrot.slane %v1408, %v1424
    %v1426 = vlaneseq
    %v1427 = vshrl.u32 %v1426, 7
    %v1428 = vsub.s32 4, %v1427
    %v1429 = vrot.slane %v1408, %v1428
    %v1430 = vlaneseq
    %v1431 = vshrl.u32 %v1430, 7
    %v1432 = vsub.s32 5, %v1431
    %v1433 = vrot.slane %v1408, %v1432
    %v1434 = vlaneseq
    %v1435 = vshrl.u32 %v1434, 7
    %v1436 = vsub.s32 6, %v1435
    %v1437 = vrot.slane %v1408, %v1436
    %v1438 = vlaneseq
    %v1439 = vshrl.u32 %v1438, 7
    %v1440 = vsub.s32 7, %v1439
    %v1441 = vrot.slane %v1408, %v1440
    %1450 = vmatprep.subr.mxu0 %v897
    %1451 = vmatpush1.msra.mxu0 %v896
    %1452 = vmatprep.subr.mxu0 %v905
    %1453 = vmatpush1.msra.mxu0 %v904
    %1454 = vmatprep.subr.mxu0 %v913
    %1455 = vmatpush1.msra.mxu0 %v912
    %1456 = vmatprep.subr.mxu0 %v921
    %1457 = vmatpush1.msra.mxu0 %v920
    %1458 = vmatprep.subr.mxu0 %v929
    %1459 = vmatpush1.msra.mxu0 %v928
    %1460 = vmatprep.subr.mxu0 %v937
    %1461 = vmatpush1.msra.mxu0 %v936
    %1462 = vmatprep.subr.mxu0 %v945
    %1463 = vmatpush1.msra.mxu0 %v944
    %1464 = vmatprep.subr.mxu0 %v953
    %1465 = vmatpush1.msra.mxu0 %v952
    %1466 = vmatprep.subr.mxu0 %v961
    %1467 = vmatpush1.msra.mxu0 %v960
    %1468 = vmatprep.subr.mxu0 %v969
    %1469 = vmatpush1.msra.mxu0 %v968
    %1470 = vmatprep.subr.mxu0 %v977
    %1471 = vmatpush1.msra.mxu0 %v976
    %1472 = vmatprep.subr.mxu0 %v985
    %1473 = vmatpush1.msra.mxu0 %v984
    %1474 = vmatprep.subr.mxu0 %v993
    %1475 = vmatpush1.msra.mxu0 %v992
    %1476 = vmatprep.subr.mxu0 %v1001
    %1477 = vmatpush1.msra.mxu0 %v1000
    %1478 = vmatprep.subr.mxu0 %v1009
    %1479 = vmatpush1.msra.mxu0 %v1008
    %1480 = vmatprep.subr.mxu0 %v1017
    %1481 = vmatpush1.msra.mxu0 %v1016
    %1482 = vmatprep.subr.mxu0 %v1025
    %1483 = vmatpush1.msra.mxu0 %v1024
    %1484 = vmatprep.subr.mxu0 %v1033
    %1485 = vmatpush1.msra.mxu0 %v1032
    %1486 = vmatprep.subr.mxu0 %v1041
    %1487 = vmatpush1.msra.mxu0 %v1040
    %1488 = vmatprep.subr.mxu0 %v1049
    %1489 = vmatpush1.msra.mxu0 %v1048
    %1490 = vmatprep.subr.mxu0 %v1057
    %1491 = vmatpush1.msra.mxu0 %v1056
    %1492 = vmatprep.subr.mxu0 %v1065
    %1493 = vmatpush1.msra.mxu0 %v1064
    %1494 = vmatprep.subr.mxu0 %v1073
    %1495 = vmatpush1.msra.mxu0 %v1072
    %1496 = vmatprep.subr.mxu0 %v1081
    %1497 = vmatpush1.msra.mxu0 %v1080
    %1498 = vmatprep.subr.mxu0 %v1089
    %1499 = vmatpush1.msra.mxu0 %v1088
    %1500 = vmatprep.subr.mxu0 %v1097
    %1501 = vmatpush1.msra.mxu0 %v1096
    %1502 = vmatprep.subr.mxu0 %v1105
    %1503 = vmatpush1.msra.mxu0 %v1104
    %1504 = vmatprep.subr.mxu0 %v1113
    %1505 = vmatpush1.msra.mxu0 %v1112
    %1506 = vmatprep.subr.mxu0 %v1121
    %1507 = vmatpush1.msra.mxu0 %v1120
    %1508 = vmatprep.subr.mxu0 %v1129
    %1509 = vmatpush1.msra.mxu0 %v1128
    %1510 = vmatprep.subr.mxu0 %v1137
    %1511 = vmatpush1.msra.mxu0 %v1136
    %1512 = vmatprep.subr.mxu0 %v1145
    %1513 = vmatpush1.msra.mxu0 %v1144
    %1514 = vmatprep.mubr.f32.mxu0 %v637
    %1515 = vmatmul.mubr.f32.gmra.mrb[0].mxu0 %v636
    %v1516 = vpop.f32.mrb[0].mxu0
    %v1517 = vadd.f32 %v1413, %v1516
    %v1518 = vpop.f32.mrb[0].mxu0
    %v1519 = vadd.f32 %v1417, %v1518
    %1520 = vdwg.mxu0
    %1521 = vmatprep.subr.mxu0 %v1153
    %1522 = vmatpush1.msra.mxu0 %v1152
    %1523 = vmatprep.subr.mxu0 %v1161
    %1524 = vmatpush1.msra.mxu0 %v1160
    %1525 = vmatprep.subr.mxu0 %v1169
    %1526 = vmatpush1.msra.mxu0 %v1168
    %1527 = vmatprep.subr.mxu0 %v1177
    %1528 = vmatpush1.msra.mxu0 %v1176
    %1529 = vmatprep.subr.mxu0 %v1185
    %1530 = vmatpush1.msra.mxu0 %v1184
    %1531 = vmatprep.subr.mxu0 %v1193
    %1532 = vmatpush1.msra.mxu0 %v1192
    %1533 = vmatprep.subr.mxu0 %v1201
    %1534 = vmatpush1.msra.mxu0 %v1200
    %1535 = vmatprep.subr.mxu0 %v1209
    %1536 = vmatpush1.msra.mxu0 %v1208
    %1537 = vmatprep.subr.mxu0 %v1217
    %1538 = vmatpush1.msra.mxu0 %v1216
    %1539 = vmatprep.subr.mxu0 %v1225
    %1540 = vmatpush1.msra.mxu0 %v1224
    %1541 = vmatprep.subr.mxu0 %v1233
    %1542 = vmatpush1.msra.mxu0 %v1232
    %1543 = vmatprep.subr.mxu0 %v1241
    %1544 = vmatpush1.msra.mxu0 %v1240
    %1545 = vmatprep.subr.mxu0 %v1249
    %1546 = vmatpush1.msra.mxu0 %v1248
    %1547 = vmatprep.subr.mxu0 %v1257
    %1548 = vmatpush1.msra.mxu0 %v1256
    %1549 = vmatprep.subr.mxu0 %v1265
    %1550 = vmatpush1.msra.mxu0 %v1264
    %1551 = vmatprep.subr.mxu0 %v1273
    %1552 = vmatpush1.msra.mxu0 %v1272
    %1553 = vmatprep.subr.mxu0 %v1281
    %1554 = vmatpush1.msra.mxu0 %v1280
    %1555 = vmatprep.subr.mxu0 %v1289
    %1556 = vmatpush1.msra.mxu0 %v1288
    %1557 = vmatprep.subr.mxu0 %v1297
    %1558 = vmatpush1.msra.mxu0 %v1296
    %1559 = vmatprep.subr.mxu0 %v1305
    %1560 = vmatpush1.msra.mxu0 %v1304
    %1561 = vmatprep.subr.mxu0 %v1313
    %1562 = vmatpush1.msra.mxu0 %v1312
    %1563 = vmatprep.subr.mxu0 %v1321
    %1564 = vmatpush1.msra.mxu0 %v1320
    %1565 = vmatprep.subr.mxu0 %v1329
    %1566 = vmatpush1.msra.mxu0 %v1328
    %1567 = vmatprep.subr.mxu0 %v1337
    %1568 = vmatpush1.msra.mxu0 %v1336
    %1569 = vmatprep.subr.mxu0 %v1345
    %1570 = vmatpush1.msra.mxu0 %v1344
    %1571 = vmatprep.subr.mxu0 %v1353
    %1572 = vmatpush1.msra.mxu0 %v1352
    %1573 = vmatprep.subr.mxu0 %v1361
    %1574 = vmatpush1.msra.mxu0 %v1360
    %1575 = vmatprep.subr.mxu0 %v1369
    %1576 = vmatpush1.msra.mxu0 %v1368
    %1577 = vmatprep.subr.mxu0 %v1377
    %1578 = vmatpush1.msra.mxu0 %v1376
    %1579 = vmatprep.subr.mxu0 %v1385
    %1580 = vmatpush1.msra.mxu0 %v1384
    %1581 = vmatprep.subr.mxu0 %v1393
    %1582 = vmatpush1.msra.mxu0 %v1392
    %1583 = vmatprep.subr.mxu0 %v1401
    %1584 = vmatpush1.msra.mxu0 %v1400
    %1585 = vmatprep.mubr.f32.mxu0 %v639
    %1586 = vmatmul.mubr.f32.gmra.mrb[0].mxu0 %v638
    %v1587 = vpop.f32.mrb[0].mxu0
    %v1588 = vadd.f32 %v1517, %v1587
    %v1589 = vpop.f32.mrb[0].mxu0
    %v1590 = vadd.f32 %v1519, %v1589
    %1591 = vdwg.mxu0
    %1592 = vmatprep.subr.mxu0 %v899
    %1593 = vmatpush1.msra.mxu0 %v898
    %1594 = vmatprep.subr.mxu0 %v907
    %1595 = vmatpush1.msra.mxu0 %v906
    %1596 = vmatprep.subr.mxu0 %v915
    %1597 = vmatpush1.msra.mxu0 %v914
    %1598 = vmatprep.subr.mxu0 %v923
    %1599 = vmatpush1.msra.mxu0 %v922
    %1600 = vmatprep.subr.mxu0 %v931
    %1601 = vmatpush1.msra.mxu0 %v930
    %1602 = vmatprep.subr.mxu0 %v939
    %1603 = vmatpush1.msra.mxu0 %v938
    %1604 = vmatprep.subr.mxu0 %v947
    %1605 = vmatpush1.msra.mxu0 %v946
    %1606 = vmatprep.subr.mxu0 %v955
    %1607 = vmatpush1.msra.mxu0 %v954
    %1608 = vmatprep.subr.mxu0 %v963
    %1609 = vmatpush1.msra.mxu0 %v962
    %1610 = vmatprep.subr.mxu0 %v971
    %1611 = vmatpush1.msra.mxu0 %v970
    %1612 = vmatprep.subr.mxu0 %v979
    %1613 = vmatpush1.msra.mxu0 %v978
    %1614 = vmatprep.subr.mxu0 %v987
    %1615 = vmatpush1.msra.mxu0 %v986
    %1616 = vmatprep.subr.mxu0 %v995
    %1617 = vmatpush1.msra.mxu0 %v994
    %1618 = vmatprep.subr.mxu0 %v1003
    %1619 = vmatpush1.msra.mxu0 %v1002
    %1620 = vmatprep.subr.mxu0 %v1011
    %1621 = vmatpush1.msra.mxu0 %v1010
    %1622 = vmatprep.subr.mxu0 %v1019
    %1623 = vmatpush1.msra.mxu0 %v1018
    %1624 = vmatprep.subr.mxu0 %v1027
    %1625 = vmatpush1.msra.mxu0 %v1026
    %1626 = vmatprep.subr.mxu0 %v1035
    %1627 = vmatpush1.msra.mxu0 %v1034
    %1628 = vmatprep.subr.mxu0 %v1043
    %1629 = vmatpush1.msra.mxu0 %v1042
    %1630 = vmatprep.subr.mxu0 %v1051
    %1631 = vmatpush1.msra.mxu0 %v1050
    %1632 = vmatprep.subr.mxu0 %v1059
    %1633 = vmatpush1.msra.mxu0 %v1058
    %1634 = vmatprep.subr.mxu0 %v1067
    %1635 = vmatpush1.msra.mxu0 %v1066
    %1636 = vmatprep.subr.mxu0 %v1075
    %1637 = vmatpush1.msra.mxu0 %v1074
    %1638 = vmatprep.subr.mxu0 %v1083
    %1639 = vmatpush1.msra.mxu0 %v1082
    %1640 = vmatprep.subr.mxu0 %v1091
    %1641 = vmatpush1.msra.mxu0 %v1090
    %1642 = vmatprep.subr.mxu0 %v1099
    %1643 = vmatpush1.msra.mxu0 %v1098
    %1644 = vmatprep.subr.mxu0 %v1107
    %1645 = vmatpush1.msra.mxu0 %v1106
    %1646 = vmatprep.subr.mxu0 %v1115
    %1647 = vmatpush1.msra.mxu0 %v1114
    %1648 = vmatprep.subr.mxu0 %v1123
    %1649 = vmatpush1.msra.mxu0 %v1122
    %1650 = vmatprep.subr.mxu0 %v1131
    %1651 = vmatpush1.msra.mxu0 %v1130
    %1652 = vmatprep.subr.mxu0 %v1139
    %1653 = vmatpush1.msra.mxu0 %v1138
    %1654 = vmatprep.subr.mxu0 %v1147
    %1655 = vmatpush1.msra.mxu0 %v1146
    %1656 = vmatprep.mubr.f32.mxu0 %v637
    %1657 = vmatmul.mubr.f32.gmra.mrb[0].mxu0 %v636
    %v1658 = vpop.f32.mrb[0].mxu0
    %v1659 = vadd.f32 %v1421, %v1658
    %v1660 = vpop.f32.mrb[0].mxu0
    %v1661 = vadd.f32 %v1425, %v1660
    %1662 = vdwg.mxu0
    %1663 = vmatprep.subr.mxu0 %v1155
    %1664 = vmatpush1.msra.mxu0 %v1154
    %1665 = vmatprep.subr.mxu0 %v1163
    %1666 = vmatpush1.msra.mxu0 %v1162
    %1667 = vmatprep.subr.mxu0 %v1171
    %1668 = vmatpush1.msra.mxu0 %v1170
    %1669 = vmatprep.subr.mxu0 %v1179
    %1670 = vmatpush1.msra.mxu0 %v1178
    %1671 = vmatprep.subr.mxu0 %v1187
    %1672 = vmatpush1.msra.mxu0 %v1186
    %1673 = vmatprep.subr.mxu0 %v1195
    %1674 = vmatpush1.msra.mxu0 %v1194
    %1675 = vmatprep.subr.mxu0 %v1203
    %1676 = vmatpush1.msra.mxu0 %v1202
    %1677 = vmatprep.subr.mxu0 %v1211
    %1678 = vmatpush1.msra.mxu0 %v1210
    %1679 = vmatprep.subr.mxu0 %v1219
    %1680 = vmatpush1.msra.mxu0 %v1218
    %1681 = vmatprep.subr.mxu0 %v1227
    %1682 = vmatpush1.msra.mxu0 %v1226
    %1683 = vmatprep.subr.mxu0 %v1235
    %1684 = vmatpush1.msra.mxu0 %v1234
    %1685 = vmatprep.subr.mxu0 %v1243
    %1686 = vmatpush1.msra.mxu0 %v1242
    %1687 = vmatprep.subr.mxu0 %v1251
    %1688 = vmatpush1.msra.mxu0 %v1250
    %1689 = vmatprep.subr.mxu0 %v1259
    %1690 = vmatpush1.msra.mxu0 %v1258
    %1691 = vmatprep.subr.mxu0 %v1267
    %1692 = vmatpush1.msra.mxu0 %v1266
    %1693 = vmatprep.subr.mxu0 %v1275
    %1694 = vmatpush1.msra.mxu0 %v1274
    %1695 = vmatprep.subr.mxu0 %v1283
    %1696 = vmatpush1.msra.mxu0 %v1282
    %1697 = vmatprep.subr.mxu0 %v1291
    %1698 = vmatpush1.msra.mxu0 %v1290
    %1699 = vmatprep.subr.mxu0 %v1299
    %1700 = vmatpush1.msra.mxu0 %v1298
    %1701 = vmatprep.subr.mxu0 %v1307
    %1702 = vmatpush1.msra.mxu0 %v1306
    %1703 = vmatprep.subr.mxu0 %v1315
    %1704 = vmatpush1.msra.mxu0 %v1314
    %1705 = vmatprep.subr.mxu0 %v1323
    %1706 = vmatpush1.msra.mxu0 %v1322
    %1707 = vmatprep.subr.mxu0 %v1331
    %1708 = vmatpush1.msra.mxu0 %v1330
    %1709 = vmatprep.subr.mxu0 %v1339
    %1710 = vmatpush1.msra.mxu0 %v1338
    %1711 = vmatprep.subr.mxu0 %v1347
    %1712 = vmatpush1.msra.mxu0 %v1346
    %1713 = vmatprep.subr.mxu0 %v1355
    %1714 = vmatpush1.msra.mxu0 %v1354
    %1715 = vmatprep.subr.mxu0 %v1363
    %1716 = vmatpush1.msra.mxu0 %v1362
    %1717 = vmatprep.subr.mxu0 %v1371
    %1718 = vmatpush1.msra.mxu0 %v1370
    %1719 = vmatprep.subr.mxu0 %v1379
    %1720 = vmatpush1.msra.mxu0 %v1378
    %1721 = vmatprep.subr.mxu0 %v1387
    %1722 = vmatpush1.msra.mxu0 %v1386
    %1723 = vmatprep.subr.mxu0 %v1395
    %1724 = vmatpush1.msra.mxu0 %v1394
    %1725 = vmatprep.subr.mxu0 %v1403
    %1726 = vmatpush1.msra.mxu0 %v1402
    %1727 = vmatprep.mubr.f32.mxu0 %v639
    %1728 = vmatmul.mubr.f32.gmra.mrb[0].mxu0 %v638
    %v1729 = vpop.f32.mrb[0].mxu0
    %v1730 = vadd.f32 %v1659, %v1729
    %v1731 = vpop.f32.mrb[0].mxu0
    %v1732 = vadd.f32 %v1661, %v1731
    %1733 = vdwg.mxu0
    %1734 = vmatprep.subr.mxu0 %v901
    %1735 = vmatpush1.msra.mxu0 %v900
    %1736 = vmatprep.subr.mxu0 %v909
    %1737 = vmatpush1.msra.mxu0 %v908
    %1738 = vmatprep.subr.mxu0 %v917
    %1739 = vmatpush1.msra.mxu0 %v916
    %1740 = vmatprep.subr.mxu0 %v925
    %1741 = vmatpush1.msra.mxu0 %v924
    %1742 = vmatprep.subr.mxu0 %v933
    %1743 = vmatpush1.msra.mxu0 %v932
    %1744 = vmatprep.subr.mxu0 %v941
    %1745 = vmatpush1.msra.mxu0 %v940
    %1746 = vmatprep.subr.mxu0 %v949
    %1747 = vmatpush1.msra.mxu0 %v948
    %1748 = vmatprep.subr.mxu0 %v957
    %1749 = vmatpush1.msra.mxu0 %v956
    %1750 = vmatprep.subr.mxu0 %v965
    %1751 = vmatpush1.msra.mxu0 %v964
    %1752 = vmatprep.subr.mxu0 %v973
    %1753 = vmatpush1.msra.mxu0 %v972
    %1754 = vmatprep.subr.mxu0 %v981
    %1755 = vmatpush1.msra.mxu0 %v980
    %1756 = vmatprep.subr.mxu0 %v989
    %1757 = vmatpush1.msra.mxu0 %v988
    %1758 = vmatprep.subr.mxu0 %v997
    %1759 = vmatpush1.msra.mxu0 %v996
    %1760 = vmatprep.subr.mxu0 %v1005
    %1761 = vmatpush1.msra.mxu0 %v1004
    %1762 = vmatprep.subr.mxu0 %v1013
    %1763 = vmatpush1.msra.mxu0 %v1012
    %1764 = vmatprep.subr.mxu0 %v1021
    %1765 = vmatpush1.msra.mxu0 %v1020
    %1766 = vmatprep.subr.mxu0 %v1029
    %1767 = vmatpush1.msra.mxu0 %v1028
    %1768 = vmatprep.subr.mxu0 %v1037
    %1769 = vmatpush1.msra.mxu0 %v1036
    %1770 = vmatprep.subr.mxu0 %v1045
    %1771 = vmatpush1.msra.mxu0 %v1044
    %1772 = vmatprep.subr.mxu0 %v1053
    %1773 = vmatpush1.msra.mxu0 %v1052
    %1774 = vmatprep.subr.mxu0 %v1061
    %1775 = vmatpush1.msra.mxu0 %v1060
    %1776 = vmatprep.subr.mxu0 %v1069
    %1777 = vmatpush1.msra.mxu0 %v1068
    %1778 = vmatprep.subr.mxu0 %v1077
    %1779 = vmatpush1.msra.mxu0 %v1076
    %1780 = vmatprep.subr.mxu0 %v1085
    %1781 = vmatpush1.msra.mxu0 %v1084
    %1782 = vmatprep.subr.mxu0 %v1093
    %1783 = vmatpush1.msra.mxu0 %v1092
    %1784 = vmatprep.subr.mxu0 %v1101
    %1785 = vmatpush1.msra.mxu0 %v1100
    %1786 = vmatprep.subr.mxu0 %v1109
    %1787 = vmatpush1.msra.mxu0 %v1108
    %1788 = vmatprep.subr.mxu0 %v1117
    %1789 = vmatpush1.msra.mxu0 %v1116
    %1790 = vmatprep.subr.mxu0 %v1125
    %1791 = vmatpush1.msra.mxu0 %v1124
    %1792 = vmatprep.subr.mxu0 %v1133
    %1793 = vmatpush1.msra.mxu0 %v1132
    %1794 = vmatprep.subr.mxu0 %v1141
    %1795 = vmatpush1.msra.mxu0 %v1140
    %1796 = vmatprep.subr.mxu0 %v1149
    %1797 = vmatpush1.msra.mxu0 %v1148
    %1798 = vmatprep.mubr.f32.mxu0 %v637
    %1799 = vmatmul.mubr.f32.gmra.mrb[0].mxu0 %v636
    %v1800 = vpop.f32.mrb[0].mxu0
    %v1801 = vadd.f32 %v1429, %v1800
    %v1802 = vpop.f32.mrb[0].mxu0
    %v1803 = vadd.f32 %v1433, %v1802
    %1804 = vdwg.mxu0
    %1805 = vmatprep.subr.mxu0 %v1157
    %1806 = vmatpush1.msra.mxu0 %v1156
    %1807 = vmatprep.subr.mxu0 %v1165
    %1808 = vmatpush1.msra.mxu0 %v1164
    %1809 = vmatprep.subr.mxu0 %v1173
    %1810 = vmatpush1.msra.mxu0 %v1172
    %1811 = vmatprep.subr.mxu0 %v1181
    %1812 = vmatpush1.msra.mxu0 %v1180
    %1813 = vmatprep.subr.mxu0 %v1189
    %1814 = vmatpush1.msra.mxu0 %v1188
    %1815 = vmatprep.subr.mxu0 %v1197
    %1816 = vmatpush1.msra.mxu0 %v1196
    %1817 = vmatprep.subr.mxu0 %v1205
    %1818 = vmatpush1.msra.mxu0 %v1204
    %1819 = vmatprep.subr.mxu0 %v1213
    %1820 = vmatpush1.msra.mxu0 %v1212
    %1821 = vmatprep.subr.mxu0 %v1221
    %1822 = vmatpush1.msra.mxu0 %v1220
    %1823 = vmatprep.subr.mxu0 %v1229
    %1824 = vmatpush1.msra.mxu0 %v1228
    %1825 = vmatprep.subr.mxu0 %v1237
    %1826 = vmatpush1.msra.mxu0 %v1236
    %1827 = vmatprep.subr.mxu0 %v1245
    %1828 = vmatpush1.msra.mxu0 %v1244
    %1829 = vmatprep.subr.mxu0 %v1253
    %1830 = vmatpush1.msra.mxu0 %v1252
    %1831 = vmatprep.subr.mxu0 %v1261
    %1832 = vmatpush1.msra.mxu0 %v1260
    %1833 = vmatprep.subr.mxu0 %v1269
    %1834 = vmatpush1.msra.mxu0 %v1268
    %1835 = vmatprep.subr.mxu0 %v1277
    %1836 = vmatpush1.msra.mxu0 %v1276
    %1837 = vmatprep.subr.mxu0 %v1285
    %1838 = vmatpush1.msra.mxu0 %v1284
    %1839 = vmatprep.subr.mxu0 %v1293
    %1840 = vmatpush1.msra.mxu0 %v1292
    %1841 = vmatprep.subr.mxu0 %v1301
    %1842 = vmatpush1.msra.mxu0 %v1300
    %1843 = vmatprep.subr.mxu0 %v1309
    %1844 = vmatpush1.msra.mxu0 %v1308
    %1845 = vmatprep.subr.mxu0 %v1317
    %1846 = vmatpush1.msra.mxu0 %v1316
    %1847 = vmatprep.subr.mxu0 %v1325
    %1848 = vmatpush1.msra.mxu0 %v1324
    %1849 = vmatprep.subr.mxu0 %v1333
    %1850 = vmatpush1.msra.mxu0 %v1332
    %1851 = vmatprep.subr.mxu0 %v1341
    %1852 = vmatpush1.msra.mxu0 %v1340
    %1853 = vmatprep.subr.mxu0 %v1349
    %1854 = vmatpush1.msra.mxu0 %v1348
    %1855 = vmatprep.subr.mxu0 %v1357
    %1856 = vmatpush1.msra.mxu0 %v1356
    %1857 = vmatprep.subr.mxu0 %v1365
    %1858 = vmatpush1.msra.mxu0 %v1364
    %1859 = vmatprep.subr.mxu0 %v1373
    %1860 = vmatpush1.msra.mxu0 %v1372
    %1861 = vmatprep.subr.mxu0 %v1381
    %1862 = vmatpush1.msra.mxu0 %v1380
    %1863 = vmatprep.subr.mxu0 %v1389
    %1864 = vmatpush1.msra.mxu0 %v1388
    %1865 = vmatprep.subr.mxu0 %v1397
    %1866 = vmatpush1.msra.mxu0 %v1396
    %1867 = vmatprep.subr.mxu0 %v1405
    %1868 = vmatpush1.msra.mxu0 %v1404
    %1869 = vmatprep.mubr.f32.mxu0 %v639
    %1870 = vmatmul.mubr.f32.gmra.mrb[0].mxu0 %v638
    %v1871 = vpop.f32.mrb[0].mxu0
    %v1872 = vadd.f32 %v1801, %v1871
    %v1873 = vpop.f32.mrb[0].mxu0
    %v1874 = vadd.f32 %v1803, %v1873
    %1875 = vdwg.mxu0
    %1876 = vmatprep.subr.mxu0 %v903
    %1877 = vmatpush1.msra.mxu0 %v902
    %1878 = vmatprep.subr.mxu0 %v911
    %1879 = vmatpush1.msra.mxu0 %v910
    %1880 = vmatprep.subr.mxu0 %v919
    %1881 = vmatpush1.msra.mxu0 %v918
    %1882 = vmatprep.subr.mxu0 %v927
    %1883 = vmatpush1.msra.mxu0 %v926
    %1884 = vmatprep.subr.mxu0 %v935
    %1885 = vmatpush1.msra.mxu0 %v934
    %1886 = vmatprep.subr.mxu0 %v943
    %1887 = vmatpush1.msra.mxu0 %v942
    %1888 = vmatprep.subr.mxu0 %v951
    %1889 = vmatpush1.msra.mxu0 %v950
    %1890 = vmatprep.subr.mxu0 %v959
    %1891 = vmatpush1.msra.mxu0 %v958
    %1892 = vmatprep.subr.mxu0 %v967
    %1893 = vmatpush1.msra.mxu0 %v966
    %1894 = vmatprep.subr.mxu0 %v975
    %1895 = vmatpush1.msra.mxu0 %v974
    %1896 = vmatprep.subr.mxu0 %v983
    %1897 = vmatpush1.msra.mxu0 %v982
    %1898 = vmatprep.subr.mxu0 %v991
    %1899 = vmatpush1.msra.mxu0 %v990
    %1900 = vmatprep.subr.mxu0 %v999
    %1901 = vmatpush1.msra.mxu0 %v998
    %1902 = vmatprep.subr.mxu0 %v1007
    %1903 = vmatpush1.msra.mxu0 %v1006
    %1904 = vmatprep.subr.mxu0 %v1015
    %1905 = vmatpush1.msra.mxu0 %v1014
    %1906 = vmatprep.subr.mxu0 %v1023
    %1907 = vmatpush1.msra.mxu0 %v1022
    %1908 = vmatprep.subr.mxu0 %v1031
    %1909 = vmatpush1.msra.mxu0 %v1030
    %1910 = vmatprep.subr.mxu0 %v1039
    %1911 = vmatpush1.msra.mxu0 %v1038
    %1912 = vmatprep.subr.mxu0 %v1047
    %1913 = vmatpush1.msra.mxu0 %v1046
    %1914 = vmatprep.subr.mxu0 %v1055
    %1915 = vmatpush1.msra.mxu0 %v1054
    %1916 = vmatprep.subr.mxu0 %v1063
    %1917 = vmatpush1.msra.mxu0 %v1062
    %1918 = vmatprep.subr.mxu0 %v1071
    %1919 = vmatpush1.msra.mxu0 %v1070
    %1920 = vmatprep.subr.mxu0 %v1079
    %1921 = vmatpush1.msra.mxu0 %v1078
    %1922 = vmatprep.subr.mxu0 %v1087
    %1923 = vmatpush1.msra.mxu0 %v1086
    %1924 = vmatprep.subr.mxu0 %v1095
    %1925 = vmatpush1.msra.mxu0 %v1094
    %1926 = vmatprep.subr.mxu0 %v1103
    %1927 = vmatpush1.msra.mxu0 %v1102
    %1928 = vmatprep.subr.mxu0 %v1111
    %1929 = vmatpush1.msra.mxu0 %v1110
    %1930 = vmatprep.subr.mxu0 %v1119
    %1931 = vmatpush1.msra.mxu0 %v1118
    %1932 = vmatprep.subr.mxu0 %v1127
    %1933 = vmatpush1.msra.mxu0 %v1126
    %1934 = vmatprep.subr.mxu0 %v1135
    %1935 = vmatpush1.msra.mxu0 %v1134
    %1936 = vmatprep.subr.mxu0 %v1143
    %1937 = vmatpush1.msra.mxu0 %v1142
    %1938 = vmatprep.subr.mxu0 %v1151
    %1939 = vmatpush1.msra.mxu0 %v1150
    %1940 = vmatprep.mubr.f32.mxu0 %v637
    %1941 = vmatmul.mubr.f32.gmra.mrb[0].mxu0 %v636
    %v1942 = vpop.f32.mrb[0].mxu0
    %v1943 = vadd.f32 %v1437, %v1942
    %v1944 = vpop.f32.mrb[0].mxu0
    %v1945 = vadd.f32 %v1441, %v1944
    %1946 = vdwg.mxu0
    %1947 = vmatprep.subr.mxu0 %v1159
    %1948 = vmatpush1.msra.mxu0 %v1158
    %1949 = vmatprep.subr.mxu0 %v1167
    %1950 = vmatpush1.msra.mxu0 %v1166
    %1951 = vmatprep.subr.mxu0 %v1175
    %1952 = vmatpush1.msra.mxu0 %v1174
    %1953 = vmatprep.subr.mxu0 %v1183
    %1954 = vmatpush1.msra.mxu0 %v1182
    %1955 = vmatprep.subr.mxu0 %v1191
    %1956 = vmatpush1.msra.mxu0 %v1190
    %1957 = vmatprep.subr.mxu0 %v1199
    %1958 = vmatpush1.msra.mxu0 %v1198
    %1959 = vmatprep.subr.mxu0 %v1207
    %1960 = vmatpush1.msra.mxu0 %v1206
    %1961 = vmatprep.subr.mxu0 %v1215
    %1962 = vmatpush1.msra.mxu0 %v1214
    %1963 = vmatprep.subr.mxu0 %v1223
    %1964 = vmatpush1.msra.mxu0 %v1222
    %1965 = vmatprep.subr.mxu0 %v1231
    %1966 = vmatpush1.msra.mxu0 %v1230
    %1967 = vmatprep.subr.mxu0 %v1239
    %1968 = vmatpush1.msra.mxu0 %v1238
    %1969 = vmatprep.subr.mxu0 %v1247
    %1970 = vmatpush1.msra.mxu0 %v1246
    %1971 = vmatprep.subr.mxu0 %v1255
    %1972 = vmatpush1.msra.mxu0 %v1254
    %1973 = vmatprep.subr.mxu0 %v1263
    %1974 = vmatpush1.msra.mxu0 %v1262
    %1975 = vmatprep.subr.mxu0 %v1271
    %1976 = vmatpush1.msra.mxu0 %v1270
    %1977 = vmatprep.subr.mxu0 %v1279
    %1978 = vmatpush1.msra.mxu0 %v1278
    %1979 = vmatprep.subr.mxu0 %v1287
    %1980 = vmatpush1.msra.mxu0 %v1286
    %1981 = vmatprep.subr.mxu0 %v1295
    %1982 = vmatpush1.msra.mxu0 %v1294
    %1983 = vmatprep.subr.mxu0 %v1303
    %1984 = vmatpush1.msra.mxu0 %v1302
    %1985 = vmatprep.subr.mxu0 %v1311
    %1986 = vmatpush1.msra.mxu0 %v1310
    %1987 = vmatprep.subr.mxu0 %v1319
    %1988 = vmatpush1.msra.mxu0 %v1318
    %1989 = vmatprep.subr.mxu0 %v1327
    %1990 = vmatpush1.msra.mxu0 %v1326
    %1991 = vmatprep.subr.mxu0 %v1335
    %1992 = vmatpush1.msra.mxu0 %v1334
    %1993 = vmatprep.subr.mxu0 %v1343
    %1994 = vmatpush1.msra.mxu0 %v1342
    %1995 = vmatprep.subr.mxu0 %v1351
    %1996 = vmatpush1.msra.mxu0 %v1350
    %1997 = vmatprep.subr.mxu0 %v1359
    %1998 = vmatpush1.msra.mxu0 %v1358
    %1999 = vmatprep.subr.mxu0 %v1367
    %2000 = vmatpush1.msra.mxu0 %v1366
    %2001 = vmatprep.subr.mxu0 %v1375
    %2002 = vmatpush1.msra.mxu0 %v1374
    %2003 = vmatprep.subr.mxu0 %v1383
    %2004 = vmatpush1.msra.mxu0 %v1382
    %2005 = vmatprep.subr.mxu0 %v1391
    %2006 = vmatpush1.msra.mxu0 %v1390
    %2007 = vmatprep.subr.mxu0 %v1399
    %2008 = vmatpush1.msra.mxu0 %v1398
    %2009 = vmatprep.subr.mxu0 %v1407
    %2010 = vmatpush1.msra.mxu0 %v1406
    %2011 = vmatprep.mubr.f32.mxu0 %v639
    %2012 = vmatmul.mubr.f32.gmra.mrb[0].mxu0 %v638
    %v2013 = vpop.f32.mrb[0].mxu0
    %v2014 = vadd.f32 %v1943, %v2013
    %v2015 = vpop.f32.mrb[0].mxu0
    %v2016 = vadd.f32 %v1945, %v2015
    %2017 = vdwg.mxu0
    %vm2018 = vcmp.gt.f32.partialorder %v1588, 0.0
    %vm2019 = vcmp.gt.f32.partialorder %v1590, 0.0
    %vm2020 = vcmp.gt.f32.partialorder %v1730, 0.0
    %vm2021 = vcmp.gt.f32.partialorder %v1732, 0.0
    %vm2022 = vcmp.gt.f32.partialorder %v1872, 0.0
    %vm2023 = vcmp.gt.f32.partialorder %v1874, 0.0
    %vm2024 = vcmp.gt.f32.partialorder %v2014, 0.0
    %vm2025 = vcmp.gt.f32.partialorder %v2016, 0.0
    %v2026 = vmul.f32 %v1588, 0.2
    %v2027 = vmul.f32 %v1590, 0.2
    %v2028 = vmul.f32 %v1730, 0.2
    %v2029 = vmul.f32 %v1732, 0.2
    %v2030 = vmul.f32 %v1872, 0.2
    %v2031 = vmul.f32 %v1874, 0.2
    %v2032 = vmul.f32 %v2014, 0.2
    %v2033 = vmul.f32 %v2016, 0.2
    %v2034 = vsel %vm2018, %v1588, %v2026
    %v2035 = vsel %vm2019, %v1590, %v2027
    %v2036 = vsel %vm2020, %v1730, %v2028
    %v2037 = vsel %vm2021, %v1732, %v2029
    %v2038 = vsel %vm2022, %v1872, %v2030
    %v2039 = vsel %vm2023, %v1874, %v2031
    %v2040 = vsel %vm2024, %v2014, %v2032
    %v2041 = vsel %vm2025, %v2016, %v2033
    %v2042 = vld [vmem:[#allocation13] sm:$0xff]
    %v2043 = vld [vmem:[#allocation13 + $0x8] sm:$0xff]
    %v2044 = vld [vmem:[#allocation13 + $0x10] sm:$0xff]
    %v2045 = vld [vmem:[#allocation13 + $0x18] sm:$0xf]
    %v2046 = vld [vmem:[#allocation13 + $0x1c] sm:$0xff]
    %v2047 = vld [vmem:[#allocation13 + $0x24] sm:$0xff]
    %v2048 = vld [vmem:[#allocation13 + $0x2c] sm:$0xff]
    %v2049 = vld [vmem:[#allocation13 + $0x34] sm:$0xf]
    %v2050 = vld [vmem:[#allocation13 + $0x38] sm:$0xff]
    %v2051 = vld [vmem:[#allocation13 + $0x40] sm:$0xff]
    %v2052 = vld [vmem:[#allocation13 + $0x48] sm:$0xff]
    %v2053 = vld [vmem:[#allocation13 + $0x50] sm:$0xf]
    %v2054 = vld [vmem:[#allocation13 + $0x54] sm:$0xff]
    %v2055 = vld [vmem:[#allocation13 + $0x5c] sm:$0xff]
    %v2056 = vld [vmem:[#allocation13 + $0x64] sm:$0xff]
    %v2057 = vld [vmem:[#allocation13 + $0x6c] sm:$0xf]
    %v2058 = vld [vmem:[#allocation13 + $0x70] sm:$0xff]
    %v2059 = vld [vmem:[#allocation13 + $0x78] sm:$0xff]
    %v2060 = vld [vmem:[#allocation13 + $0x80] sm:$0xff]
    %v2061 = vld [vmem:[#allocation13 + $0x88] sm:$0xf]
    %v2062 = vld [vmem:[#allocation13 + $0x8c] sm:$0xff]
    %v2063 = vld [vmem:[#allocation13 + $0x94] sm:$0xff]
    %v2064 = vld [vmem:[#allocation13 + $0x9c] sm:$0xff]
    %v2065 = vld [vmem:[#allocation13 + $0xa4] sm:$0xf]
    %v2066 = vld [vmem:[#allocation13 + $0xa8] sm:$0xff]
    %v2067 = vld [vmem:[#allocation13 + $0xb0] sm:$0xff]
    %v2068 = vld [vmem:[#allocation13 + $0xb8] sm:$0xff]
    %v2069 = vld [vmem:[#allocation13 + $0xc0] sm:$0xf]
    %v2070 = vld [vmem:[#allocation13 + $0xc4] sm:$0xff]
    %v2071 = vld [vmem:[#allocation13 + $0xcc] sm:$0xff]
    %v2072 = vld [vmem:[#allocation13 + $0xd4] sm:$0xff]
    %v2073 = vld [vmem:[#allocation13 + $0xdc] sm:$0xf]
    %v2074 = vld [vmem:[#allocation13 + $0xe0] sm:$0xff]
    %v2075 = vld [vmem:[#allocation13 + $0xe8] sm:$0xff]
    %v2076 = vld [vmem:[#allocation13 + $0xf0] sm:$0xff]
    %v2077 = vld [vmem:[#allocation13 + $0xf8] sm:$0xf]
    %v2078 = vld [vmem:[#allocation13 + $0xfc] sm:$0xff]
    %v2079 = vld [vmem:[#allocation13 + $0x104] sm:$0xff]
    %v2080 = vld [vmem:[#allocation13 + $0x10c] sm:$0xff]
    %v2081 = vld [vmem:[#allocation13 + $0x114] sm:$0xf]
    %v2082 = vld [vmem:[#allocation13 + $0x118] sm:$0xff]
    %v2083 = vld [vmem:[#allocation13 + $0x120] sm:$0xff]
    %v2084 = vld [vmem:[#allocation13 + $0x128] sm:$0xff]
    %v2085 = vld [vmem:[#allocation13 + $0x130] sm:$0xf]
    %v2086 = vld [vmem:[#allocation13 + $0x134] sm:$0xff]
    %v2087 = vld [vmem:[#allocation13 + $0x13c] sm:$0xff]
    %v2088 = vld [vmem:[#allocation13 + $0x144] sm:$0xff]
    %v2089 = vld [vmem:[#allocation13 + $0x14c] sm:$0xf]
    %v2090 = vld [vmem:[#allocation13 + $0x150] sm:$0xff]
    %v2091 = vld [vmem:[#allocation13 + $0x158] sm:$0xff]
    %v2092 = vld [vmem:[#allocation13 + $0x160] sm:$0xff]
    %v2093 = vld [vmem:[#allocation13 + $0x168] sm:$0xf]
    %v2094 = vld [vmem:[#allocation13 + $0x16c] sm:$0xff]
    %v2095 = vld [vmem:[#allocation13 + $0x174] sm:$0xff]
    %v2096 = vld [vmem:[#allocation13 + $0x17c] sm:$0xff]
    %v2097 = vld [vmem:[#allocation13 + $0x184] sm:$0xf]
    %v2098 = vld [vmem:[#allocation13 + $0x188] sm:$0xff]
    %v2099 = vld [vmem:[#allocation13 + $0x190] sm:$0xff]
    %v2100 = vld [vmem:[#allocation13 + $0x198] sm:$0xff]
    %v2101 = vld [vmem:[#allocation13 + $0x1a0] sm:$0xf]
    %v2102 = vld [vmem:[#allocation13 + $0x1a4] sm:$0xff]
    %v2103 = vld [vmem:[#allocation13 + $0x1ac] sm:$0xff]
    %v2104 = vld [vmem:[#allocation13 + $0x1b4] sm:$0xff]
    %v2105 = vld [vmem:[#allocation13 + $0x1bc] sm:$0xf]
    %v2106 = vld [vmem:[#allocation13 + $0x1c0] sm:$0xff]
    %v2107 = vld [vmem:[#allocation13 + $0x1c8] sm:$0xff]
    %v2108 = vld [vmem:[#allocation13 + $0x1d0] sm:$0xff]
    %v2109 = vld [vmem:[#allocation13 + $0x1d8] sm:$0xf]
    %v2110 = vld [vmem:[#allocation13 + $0x1dc] sm:$0xff]
    %v2111 = vld [vmem:[#allocation13 + $0x1e4] sm:$0xff]
    %v2112 = vld [vmem:[#allocation13 + $0x1ec] sm:$0xff]
    %v2113 = vld [vmem:[#allocation13 + $0x1f4] sm:$0xf]
    %v2114 = vld [vmem:[#allocation13 + $0x1f8] sm:$0xff]
    %v2115 = vld [vmem:[#allocation13 + $0x200] sm:$0xff]
    %v2116 = vld [vmem:[#allocation13 + $0x208] sm:$0xff]
    %v2117 = vld [vmem:[#allocation13 + $0x210] sm:$0xf]
    %v2118 = vld [vmem:[#allocation13 + $0x214] sm:$0xff]
    %v2119 = vld [vmem:[#allocation13 + $0x21c] sm:$0xff]
    %v2120 = vld [vmem:[#allocation13 + $0x224] sm:$0xff]
    %v2121 = vld [vmem:[#allocation13 + $0x22c] sm:$0xf]
    %v2122 = vld [vmem:[#allocation13 + $0x230] sm:$0xff]
    %v2123 = vld [vmem:[#allocation13 + $0x238] sm:$0xff]
    %v2124 = vld [vmem:[#allocation13 + $0x240] sm:$0xff]
    %v2125 = vld [vmem:[#allocation13 + $0x248] sm:$0xf]
    %v2126 = vld [vmem:[#allocation13 + $0x24c] sm:$0xff]
    %v2127 = vld [vmem:[#allocation13 + $0x254] sm:$0xff]
    %v2128 = vld [vmem:[#allocation13 + $0x25c] sm:$0xff]
    %v2129 = vld [vmem:[#allocation13 + $0x264] sm:$0xf]
    %v2130 = vld [vmem:[#allocation13 + $0x268] sm:$0xff]
    %v2131 = vld [vmem:[#allocation13 + $0x270] sm:$0xff]
    %v2132 = vld [vmem:[#allocation13 + $0x278] sm:$0xff]
    %v2133 = vld [vmem:[#allocation13 + $0x280] sm:$0xf]
    %v2134 = vld [vmem:[#allocation13 + $0x284] sm:$0xff]
    %v2135 = vld [vmem:[#allocation13 + $0x28c] sm:$0xff]
    %v2136 = vld [vmem:[#allocation13 + $0x294] sm:$0xff]
    %v2137 = vld [vmem:[#allocation13 + $0x29c] sm:$0xf]
    %v2138 = vld [vmem:[#allocation13 + $0x2a0] sm:$0xff]
    %v2139 = vld [vmem:[#allocation13 + $0x2a8] sm:$0xff]
    %v2140 = vld [vmem:[#allocation13 + $0x2b0] sm:$0xff]
    %v2141 = vld [vmem:[#allocation13 + $0x2b8] sm:$0xf]
    %v2142 = vld [vmem:[#allocation13 + $0x2bc] sm:$0xff]
    %v2143 = vld [vmem:[#allocation13 + $0x2c4] sm:$0xff]
    %v2144 = vld [vmem:[#allocation13 + $0x2cc] sm:$0xff]
    %v2145 = vld [vmem:[#allocation13 + $0x2d4] sm:$0xf]
    %v2146 = vld [vmem:[#allocation13 + $0x2d8] sm:$0xff]
    %v2147 = vld [vmem:[#allocation13 + $0x2e0] sm:$0xff]
    %v2148 = vld [vmem:[#allocation13 + $0x2e8] sm:$0xff]
    %v2149 = vld [vmem:[#allocation13 + $0x2f0] sm:$0xf]
    %v2150 = vld [vmem:[#allocation13 + $0x2f4] sm:$0xff]
    %v2151 = vld [vmem:[#allocation13 + $0x2fc] sm:$0xff]
    %v2152 = vld [vmem:[#allocation13 + $0x304] sm:$0xff]
    %v2153 = vld [vmem:[#allocation13 + $0x30c] sm:$0xf]
    %v2154 = vld [vmem:[#allocation13 + $0x310] sm:$0xff]
    %v2155 = vld [vmem:[#allocation13 + $0x318] sm:$0xff]
    %v2156 = vld [vmem:[#allocation13 + $0x320] sm:$0xff]
    %v2157 = vld [vmem:[#allocation13 + $0x328] sm:$0xf]
    %v2158 = vld [vmem:[#allocation13 + $0x32c] sm:$0xff]
    %v2159 = vld [vmem:[#allocation13 + $0x334] sm:$0xff]
    %v2160 = vld [vmem:[#allocation13 + $0x33c] sm:$0xff]
    %v2161 = vld [vmem:[#allocation13 + $0x344] sm:$0xf]
    %v2162 = vld [vmem:[#allocation13 + $0x348] sm:$0xff]
    %v2163 = vld [vmem:[#allocation13 + $0x350] sm:$0xff]
    %v2164 = vld [vmem:[#allocation13 + $0x358] sm:$0xff]
    %v2165 = vld [vmem:[#allocation13 + $0x360] sm:$0xf]
    %v2166 = vld [vmem:[#allocation13 + $0x364] sm:$0xff]
    %v2167 = vld [vmem:[#allocation13 + $0x36c] sm:$0xff]
    %v2168 = vld [vmem:[#allocation13 + $0x374] sm:$0xff]
    %v2169 = vld [vmem:[#allocation13 + $0x37c] sm:$0xf]
    %v2170 = vld [vmem:[#allocation13 + $0x380] sm:$0xff]
    %v2171 = vld [vmem:[#allocation13 + $0x388] sm:$0xff]
    %v2172 = vld [vmem:[#allocation13 + $0x390] sm:$0xff]
    %v2173 = vld [vmem:[#allocation13 + $0x398] sm:$0xf]
    %v2174 = vld [vmem:[#allocation13 + $0x39c] sm:$0xff]
    %v2175 = vld [vmem:[#allocation13 + $0x3a4] sm:$0xff]
    %v2176 = vld [vmem:[#allocation13 + $0x3ac] sm:$0xff]
    %v2177 = vld [vmem:[#allocation13 + $0x3b4] sm:$0xf]
    %v2178 = vld [vmem:[#allocation13 + $0x3b8] sm:$0xff]
    %v2179 = vld [vmem:[#allocation13 + $0x3c0] sm:$0xff]
    %v2180 = vld [vmem:[#allocation13 + $0x3c8] sm:$0xff]
    %v2181 = vld [vmem:[#allocation13 + $0x3d0] sm:$0xf]
    %v2182 = vld [vmem:[#allocation13 + $0x3d4] sm:$0xff]
    %v2183 = vld [vmem:[#allocation13 + $0x3dc] sm:$0xff]
    %v2184 = vld [vmem:[#allocation13 + $0x3e4] sm:$0xff]
    %v2185 = vld [vmem:[#allocation13 + $0x3ec] sm:$0xf]
    %v2186 = vld [vmem:[#allocation13 + $0x3f0] sm:$0xff]
    %v2187 = vld [vmem:[#allocation13 + $0x3f8] sm:$0xff]
    %v2188 = vld [vmem:[#allocation13 + $0x400] sm:$0xff]
    %v2189 = vld [vmem:[#allocation13 + $0x408] sm:$0xf]
    %v2190 = vld [vmem:[#allocation13 + $0x40c] sm:$0xff]
    %v2191 = vld [vmem:[#allocation13 + $0x414] sm:$0xff]
    %v2192 = vld [vmem:[#allocation13 + $0x41c] sm:$0xff]
    %v2193 = vld [vmem:[#allocation13 + $0x424] sm:$0xf]
    %v2194 = vld [vmem:[#allocation13 + $0x428] sm:$0xff]
    %v2195 = vld [vmem:[#allocation13 + $0x430] sm:$0xff]
    %v2196 = vld [vmem:[#allocation13 + $0x438] sm:$0xff]
    %v2197 = vld [vmem:[#allocation13 + $0x440] sm:$0xf]
    %v2198 = vld [vmem:[#allocation13 + $0x444] sm:$0xff]
    %v2199 = vld [vmem:[#allocation13 + $0x44c] sm:$0xff]
    %v2200 = vld [vmem:[#allocation13 + $0x454] sm:$0xff]
    %v2201 = vld [vmem:[#allocation13 + $0x45c] sm:$0xf]
    %v2202 = vld [vmem:[#allocation13 + $0x460] sm:$0xff]
    %v2203 = vld [vmem:[#allocation13 + $0x468] sm:$0xff]
    %v2204 = vld [vmem:[#allocation13 + $0x470] sm:$0xff]
    %v2205 = vld [vmem:[#allocation13 + $0x478] sm:$0xf]
    %v2206 = vld [vmem:[#allocation13 + $0x47c] sm:$0xff]
    %v2207 = vld [vmem:[#allocation13 + $0x484] sm:$0xff]
    %v2208 = vld [vmem:[#allocation13 + $0x48c] sm:$0xff]
    %v2209 = vld [vmem:[#allocation13 + $0x494] sm:$0xf]
    %v2210 = vld [vmem:[#allocation13 + $0x498] sm:$0xff]
    %v2211 = vld [vmem:[#allocation13 + $0x4a0] sm:$0xff]
    %v2212 = vld [vmem:[#allocation13 + $0x4a8] sm:$0xff]
    %v2213 = vld [vmem:[#allocation13 + $0x4b0] sm:$0xf]
    %v2214 = vld [vmem:[#allocation13 + $0x4b4] sm:$0xff]
    %v2215 = vld [vmem:[#allocation13 + $0x4bc] sm:$0xff]
    %v2216 = vld [vmem:[#allocation13 + $0x4c4] sm:$0xff]
    %v2217 = vld [vmem:[#allocation13 + $0x4cc] sm:$0xf]
    %v2218 = vld [vmem:[#allocation13 + $0x4d0] sm:$0xff]
    %v2219 = vld [vmem:[#allocation13 + $0x4d8] sm:$0xff]
    %v2220 = vld [vmem:[#allocation13 + $0x4e0] sm:$0xff]
    %v2221 = vld [vmem:[#allocation13 + $0x4e8] sm:$0xf]
    %v2222 = vld [vmem:[#allocation13 + $0x4ec] sm:$0xff]
    %v2223 = vld [vmem:[#allocation13 + $0x4f4] sm:$0xff]
    %v2224 = vld [vmem:[#allocation13 + $0x4fc] sm:$0xff]
    %v2225 = vld [vmem:[#allocation13 + $0x504] sm:$0xf]
    %v2226 = vld [vmem:[#allocation13 + $0x508] sm:$0xff]
    %v2227 = vld [vmem:[#allocation13 + $0x510] sm:$0xff]
    %v2228 = vld [vmem:[#allocation13 + $0x518] sm:$0xff]
    %v2229 = vld [vmem:[#allocation13 + $0x520] sm:$0xf]
    %v2230 = vld [vmem:[#allocation13 + $0x524] sm:$0xff]
    %v2231 = vld [vmem:[#allocation13 + $0x52c] sm:$0xff]
    %v2232 = vld [vmem:[#allocation13 + $0x534] sm:$0xff]
    %v2233 = vld [vmem:[#allocation13 + $0x53c] sm:$0xf]
    %v2234 = vld [vmem:[#allocation13 + $0x540] sm:$0xff]
    %v2235 = vld [vmem:[#allocation13 + $0x548] sm:$0xff]
    %v2236 = vld [vmem:[#allocation13 + $0x550] sm:$0xff]
    %v2237 = vld [vmem:[#allocation13 + $0x558] sm:$0xf]
    %v2238 = vld [vmem:[#allocation13 + $0x55c] sm:$0xff]
    %v2239 = vld [vmem:[#allocation13 + $0x564] sm:$0xff]
    %v2240 = vld [vmem:[#allocation13 + $0x56c] sm:$0xff]
    %v2241 = vld [vmem:[#allocation13 + $0x574] sm:$0xf]
    %v2242 = vld [vmem:[#allocation13 + $0x578] sm:$0xff]
    %v2243 = vld [vmem:[#allocation13 + $0x580] sm:$0xff]
    %v2244 = vld [vmem:[#allocation13 + $0x588] sm:$0xff]
    %v2245 = vld [vmem:[#allocation13 + $0x590] sm:$0xf]
    %v2246 = vld [vmem:[#allocation13 + $0x594] sm:$0xff]
    %v2247 = vld [vmem:[#allocation13 + $0x59c] sm:$0xff]
    %v2248 = vld [vmem:[#allocation13 + $0x5a4] sm:$0xff]
    %v2249 = vld [vmem:[#allocation13 + $0x5ac] sm:$0xf]
    %v2250 = vld [vmem:[#allocation13 + $0x5b0] sm:$0xff]
    %v2251 = vld [vmem:[#allocation13 + $0x5b8] sm:$0xff]
    %v2252 = vld [vmem:[#allocation13 + $0x5c0] sm:$0xff]
    %v2253 = vld [vmem:[#allocation13 + $0x5c8] sm:$0xf]
    %v2254 = vld [vmem:[#allocation13 + $0x5cc] sm:$0xff]
    %v2255 = vld [vmem:[#allocation13 + $0x5d4] sm:$0xff]
    %v2256 = vld [vmem:[#allocation13 + $0x5dc] sm:$0xff]
    %v2257 = vld [vmem:[#allocation13 + $0x5e4] sm:$0xf]
    %v2258 = vld [vmem:[#allocation13 + $0x5e8] sm:$0xff]
    %v2259 = vld [vmem:[#allocation13 + $0x5f0] sm:$0xff]
    %v2260 = vld [vmem:[#allocation13 + $0x5f8] sm:$0xff]
    %v2261 = vld [vmem:[#allocation13 + $0x600] sm:$0xf]
    %v2262 = vld [vmem:[#allocation13 + $0x604] sm:$0xff]
    %v2263 = vld [vmem:[#allocation13 + $0x60c] sm:$0xff]
    %v2264 = vld [vmem:[#allocation13 + $0x614] sm:$0xff]
    %v2265 = vld [vmem:[#allocation13 + $0x61c] sm:$0xf]
    %v2266 = vld [vmem:[#allocation13 + $0x620] sm:$0xff]
    %v2267 = vld [vmem:[#allocation13 + $0x628] sm:$0xff]
    %v2268 = vld [vmem:[#allocation13 + $0x630] sm:$0xff]
    %v2269 = vld [vmem:[#allocation13 + $0x638] sm:$0xf]
    %v2270 = vld [vmem:[#allocation13 + $0x63c] sm:$0xff]
    %v2271 = vld [vmem:[#allocation13 + $0x644] sm:$0xff]
    %v2272 = vld [vmem:[#allocation13 + $0x64c] sm:$0xff]
    %v2273 = vld [vmem:[#allocation13 + $0x654] sm:$0xf]
    %v2274 = vld [vmem:[#allocation13 + $0x658] sm:$0xff]
    %v2275 = vld [vmem:[#allocation13 + $0x660] sm:$0xff]
    %v2276 = vld [vmem:[#allocation13 + $0x668] sm:$0xff]
    %v2277 = vld [vmem:[#allocation13 + $0x670] sm:$0xf]
    %v2278 = vld [vmem:[#allocation13 + $0x674] sm:$0xff]
    %v2279 = vld [vmem:[#allocation13 + $0x67c] sm:$0xff]
    %v2280 = vld [vmem:[#allocation13 + $0x684] sm:$0xff]
    %v2281 = vld [vmem:[#allocation13 + $0x68c] sm:$0xf]
    %v2282 = vld [vmem:[#allocation13 + $0x690] sm:$0xff]
    %v2283 = vld [vmem:[#allocation13 + $0x698] sm:$0xff]
    %v2284 = vld [vmem:[#allocation13 + $0x6a0] sm:$0xff]
    %v2285 = vld [vmem:[#allocation13 + $0x6a8] sm:$0xf]
    %v2286 = vld [vmem:[#allocation13 + $0x6ac] sm:$0xff]
    %v2287 = vld [vmem:[#allocation13 + $0x6b4] sm:$0xff]
    %v2288 = vld [vmem:[#allocation13 + $0x6bc] sm:$0xff]
    %v2289 = vld [vmem:[#allocation13 + $0x6c4] sm:$0xf]
    %v2290 = vld [vmem:[#allocation13 + $0x6c8] sm:$0xff]
    %v2291 = vld [vmem:[#allocation13 + $0x6d0] sm:$0xff]
    %v2292 = vld [vmem:[#allocation13 + $0x6d8] sm:$0xff]
    %v2293 = vld [vmem:[#allocation13 + $0x6e0] sm:$0xf]
    %v2294 = vld [vmem:[#allocation13 + $0x6e4] sm:$0xff]
    %v2295 = vld [vmem:[#allocation13 + $0x6ec] sm:$0xff]
    %v2296 = vld [vmem:[#allocation13 + $0x6f4] sm:$0xff]
    %v2297 = vld [vmem:[#allocation13 + $0x6fc] sm:$0xf]
    %v2298 = vld [vmem:[#allocation13 + $0x700] sm:$0xff]
    %v2299 = vld [vmem:[#allocation13 + $0x708] sm:$0xff]
    %v2300 = vld [vmem:[#allocation13 + $0x710] sm:$0xff]
    %v2301 = vld [vmem:[#allocation13 + $0x718] sm:$0xf]
    %v2302 = vld [vmem:[#allocation13 + $0x71c] sm:$0xff]
    %v2303 = vld [vmem:[#allocation13 + $0x724] sm:$0xff]
    %v2304 = vld [vmem:[#allocation13 + $0x72c] sm:$0xff]
    %v2305 = vld [vmem:[#allocation13 + $0x734] sm:$0xf]
    %v2306 = vld [vmem:[#allocation13 + $0x738] sm:$0xff]
    %v2307 = vld [vmem:[#allocation13 + $0x740] sm:$0xff]
    %v2308 = vld [vmem:[#allocation13 + $0x748] sm:$0xff]
    %v2309 = vld [vmem:[#allocation13 + $0x750] sm:$0xf]
    %v2310 = vld [vmem:[#allocation13 + $0x754] sm:$0xff]
    %v2311 = vld [vmem:[#allocation13 + $0x75c] sm:$0xff]
    %v2312 = vld [vmem:[#allocation13 + $0x764] sm:$0xff]
    %v2313 = vld [vmem:[#allocation13 + $0x76c] sm:$0xf]
    %v2314 = vld [vmem:[#allocation13 + $0x770] sm:$0xff]
    %v2315 = vld [vmem:[#allocation13 + $0x778] sm:$0xff]
    %v2316 = vld [vmem:[#allocation13 + $0x780] sm:$0xff]
    %v2317 = vld [vmem:[#allocation13 + $0x788] sm:$0xf]
    %v2318 = vld [vmem:[#allocation13 + $0x78c] sm:$0xff]
    %v2319 = vld [vmem:[#allocation13 + $0x794] sm:$0xff]
    %v2320 = vld [vmem:[#allocation13 + $0x79c] sm:$0xff]
    %v2321 = vld [vmem:[#allocation13 + $0x7a4] sm:$0xf]
    %v2322 = vld [vmem:[#allocation13 + $0x7a8] sm:$0xff]
    %v2323 = vld [vmem:[#allocation13 + $0x7b0] sm:$0xff]
    %v2324 = vld [vmem:[#allocation13 + $0x7b8] sm:$0xff]
    %v2325 = vld [vmem:[#allocation13 + $0x7c0] sm:$0xf]
    %v2326 = vld [vmem:[#allocation13 + $0x7c4] sm:$0xff]
    %v2327 = vld [vmem:[#allocation13 + $0x7cc] sm:$0xff]
    %v2328 = vld [vmem:[#allocation13 + $0x7d4] sm:$0xff]
    %v2329 = vld [vmem:[#allocation13 + $0x7dc] sm:$0xf]
    %v2330 = vld [vmem:[#allocation13 + $0x7e0] sm:$0xff]
    %v2331 = vld [vmem:[#allocation13 + $0x7e8] sm:$0xff]
    %v2332 = vld [vmem:[#allocation13 + $0x7f0] sm:$0xff]
    %v2333 = vld [vmem:[#allocation13 + $0x7f8] sm:$0xf]
    %v2334 = vld [vmem:[#allocation13 + $0x7fc] sm:$0xff]
    %v2335 = vld [vmem:[#allocation13 + $0x804] sm:$0xff]
    %v2336 = vld [vmem:[#allocation13 + $0x80c] sm:$0xff]
    %v2337 = vld [vmem:[#allocation13 + $0x814] sm:$0xf]
    %v2338 = vld [vmem:[#allocation13 + $0x818] sm:$0xff]
    %v2339 = vld [vmem:[#allocation13 + $0x820] sm:$0xff]
    %v2340 = vld [vmem:[#allocation13 + $0x828] sm:$0xff]
    %v2341 = vld [vmem:[#allocation13 + $0x830] sm:$0xf]
    %v2342 = vld [vmem:[#allocation13 + $0x834] sm:$0xff]
    %v2343 = vld [vmem:[#allocation13 + $0x83c] sm:$0xff]
    %v2344 = vld [vmem:[#allocation13 + $0x844] sm:$0xff]
    %v2345 = vld [vmem:[#allocation13 + $0x84c] sm:$0xf]
    %v2346 = vld [vmem:[#allocation13 + $0x850] sm:$0xff]
    %v2347 = vld [vmem:[#allocation13 + $0x858] sm:$0xff]
    %v2348 = vld [vmem:[#allocation13 + $0x860] sm:$0xff]
    %v2349 = vld [vmem:[#allocation13 + $0x868] sm:$0xf]
    %v2350 = vld [vmem:[#allocation13 + $0x86c] sm:$0xff]
    %v2351 = vld [vmem:[#allocation13 + $0x874] sm:$0xff]
    %v2352 = vld [vmem:[#allocation13 + $0x87c] sm:$0xff]
    %v2353 = vld [vmem:[#allocation13 + $0x884] sm:$0xf]
    %v2354 = vld [vmem:[#allocation13 + $0x888] sm:$0xff]
    %v2355 = vld [vmem:[#allocation13 + $0x890] sm:$0xff]
    %v2356 = vld [vmem:[#allocation13 + $0x898] sm:$0xff]
    %v2357 = vld [vmem:[#allocation13 + $0x8a0] sm:$0xf]
    %v2358 = vld [vmem:[#allocation13 + $0x8a4] sm:$0xff]
    %v2359 = vld [vmem:[#allocation13 + $0x8ac] sm:$0xff]
    %v2360 = vld [vmem:[#allocation13 + $0x8b4] sm:$0xff]
    %v2361 = vld [vmem:[#allocation13 + $0x8bc] sm:$0xf]
    %v2362 = vld [vmem:[#allocation13 + $0x8c0] sm:$0xff]
    %v2363 = vld [vmem:[#allocation13 + $0x8c8] sm:$0xff]
    %v2364 = vld [vmem:[#allocation13 + $0x8d0] sm:$0xff]
    %v2365 = vld [vmem:[#allocation13 + $0x8d8] sm:$0xf]
    %v2366 = vld [vmem:[#allocation13 + $0x8dc] sm:$0xff]
    %v2367 = vld [vmem:[#allocation13 + $0x8e4] sm:$0xff]
    %v2368 = vld [vmem:[#allocation13 + $0x8ec] sm:$0xff]
    %v2369 = vld [vmem:[#allocation13 + $0x8f4] sm:$0xf]
    %v2370 = vld [vmem:[#allocation13 + $0x8f8] sm:$0xff]
    %v2371 = vld [vmem:[#allocation13 + $0x900] sm:$0xff]
    %v2372 = vld [vmem:[#allocation13 + $0x908] sm:$0xff]
    %v2373 = vld [vmem:[#allocation13 + $0x910] sm:$0xf]
    %v2374 = vld [vmem:[#allocation13 + $0x914] sm:$0xff]
    %v2375 = vld [vmem:[#allocation13 + $0x91c] sm:$0xff]
    %v2376 = vld [vmem:[#allocation13 + $0x924] sm:$0xff]
    %v2377 = vld [vmem:[#allocation13 + $0x92c] sm:$0xf]
    %v2378 = vld [vmem:[#allocation13 + $0x930] sm:$0xff]
    %v2379 = vld [vmem:[#allocation13 + $0x938] sm:$0xff]
    %v2380 = vld [vmem:[#allocation13 + $0x940] sm:$0xff]
    %v2381 = vld [vmem:[#allocation13 + $0x948] sm:$0xf]
    %v2382 = vld [vmem:[#allocation13 + $0x94c] sm:$0xff]
    %v2383 = vld [vmem:[#allocation13 + $0x954] sm:$0xff]
    %v2384 = vld [vmem:[#allocation13 + $0x95c] sm:$0xff]
    %v2385 = vld [vmem:[#allocation13 + $0x964] sm:$0xf]
    %v2386 = vld [vmem:[#allocation13 + $0x968] sm:$0xff]
    %v2387 = vld [vmem:[#allocation13 + $0x970] sm:$0xff]
    %v2388 = vld [vmem:[#allocation13 + $0x978] sm:$0xff]
    %v2389 = vld [vmem:[#allocation13 + $0x980] sm:$0xf]
    %v2390 = vld [vmem:[#allocation13 + $0x984] sm:$0xff]
    %v2391 = vld [vmem:[#allocation13 + $0x98c] sm:$0xff]
    %v2392 = vld [vmem:[#allocation13 + $0x994] sm:$0xff]
    %v2393 = vld [vmem:[#allocation13 + $0x99c] sm:$0xf]
    %v2394 = vld [vmem:[#allocation13 + $0x9a0] sm:$0xff]
    %v2395 = vld [vmem:[#allocation13 + $0x9a8] sm:$0xff]
    %v2396 = vld [vmem:[#allocation13 + $0x9b0] sm:$0xff]
    %v2397 = vld [vmem:[#allocation13 + $0x9b8] sm:$0xf]
    %v2398 = vld [vmem:[#allocation13 + $0x9bc] sm:$0xff]
    %v2399 = vld [vmem:[#allocation13 + $0x9c4] sm:$0xff]
    %v2400 = vld [vmem:[#allocation13 + $0x9cc] sm:$0xff]
    %v2401 = vld [vmem:[#allocation13 + $0x9d4] sm:$0xf]
    %v2402 = vld [vmem:[#allocation13 + $0x9d8] sm:$0xff]
    %v2403 = vld [vmem:[#allocation13 + $0x9e0] sm:$0xff]
    %v2404 = vld [vmem:[#allocation13 + $0x9e8] sm:$0xff]
    %v2405 = vld [vmem:[#allocation13 + $0x9f0] sm:$0xf]
    %v2406 = vld [vmem:[#allocation13 + $0x9f4] sm:$0xff]
    %v2407 = vld [vmem:[#allocation13 + $0x9fc] sm:$0xff]
    %v2408 = vld [vmem:[#allocation13 + $0xa04] sm:$0xff]
    %v2409 = vld [vmem:[#allocation13 + $0xa0c] sm:$0xf]
    %v2410 = vld [vmem:[#allocation13 + $0xa10] sm:$0xff]
    %v2411 = vld [vmem:[#allocation13 + $0xa18] sm:$0xff]
    %v2412 = vld [vmem:[#allocation13 + $0xa20] sm:$0xff]
    %v2413 = vld [vmem:[#allocation13 + $0xa28] sm:$0xf]
    %v2414 = vld [vmem:[#allocation13 + $0xa2c] sm:$0xff]
    %v2415 = vld [vmem:[#allocation13 + $0xa34] sm:$0xff]
    %v2416 = vld [vmem:[#allocation13 + $0xa3c] sm:$0xff]
    %v2417 = vld [vmem:[#allocation13 + $0xa44] sm:$0xf]
    %v2418 = vld [vmem:[#allocation13 + $0xa48] sm:$0xff]
    %v2419 = vld [vmem:[#allocation13 + $0xa50] sm:$0xff]
    %v2420 = vld [vmem:[#allocation13 + $0xa58] sm:$0xff]
    %v2421 = vld [vmem:[#allocation13 + $0xa60] sm:$0xf]
    %v2422 = vld [vmem:[#allocation13 + $0xa64] sm:$0xff]
    %v2423 = vld [vmem:[#allocation13 + $0xa6c] sm:$0xff]
    %v2424 = vld [vmem:[#allocation13 + $0xa74] sm:$0xff]
    %v2425 = vld [vmem:[#allocation13 + $0xa7c] sm:$0xf]
    %v2426 = vld [vmem:[#allocation13 + $0xa80] sm:$0xff]
    %v2427 = vld [vmem:[#allocation13 + $0xa88] sm:$0xff]
    %v2428 = vld [vmem:[#allocation13 + $0xa90] sm:$0xff]
    %v2429 = vld [vmem:[#allocation13 + $0xa98] sm:$0xf]
    %v2430 = vld [vmem:[#allocation13 + $0xa9c] sm:$0xff]
    %v2431 = vld [vmem:[#allocation13 + $0xaa4] sm:$0xff]
    %v2432 = vld [vmem:[#allocation13 + $0xaac] sm:$0xff]
    %v2433 = vld [vmem:[#allocation13 + $0xab4] sm:$0xf]
    %v2434 = vld [vmem:[#allocation13 + $0xab8] sm:$0xff]
    %v2435 = vld [vmem:[#allocation13 + $0xac0] sm:$0xff]
    %v2436 = vld [vmem:[#allocation13 + $0xac8] sm:$0xff]
    %v2437 = vld [vmem:[#allocation13 + $0xad0] sm:$0xf]
    %v2438 = vld [vmem:[#allocation13 + $0xad4] sm:$0xff]
    %v2439 = vld [vmem:[#allocation13 + $0xadc] sm:$0xff]
    %v2440 = vld [vmem:[#allocation13 + $0xae4] sm:$0xff]
    %v2441 = vld [vmem:[#allocation13 + $0xaec] sm:$0xf]
    %v2442 = vld [vmem:[#allocation13 + $0xaf0] sm:$0xff]
    %v2443 = vld [vmem:[#allocation13 + $0xaf8] sm:$0xff]
    %v2444 = vld [vmem:[#allocation13 + $0xb00] sm:$0xff]
    %v2445 = vld [vmem:[#allocation13 + $0xb08] sm:$0xf]
    %v2446 = vld [vmem:[#allocation13 + $0xb0c] sm:$0xff]
    %v2447 = vld [vmem:[#allocation13 + $0xb14] sm:$0xff]
    %v2448 = vld [vmem:[#allocation13 + $0xb1c] sm:$0xff]
    %v2449 = vld [vmem:[#allocation13 + $0xb24] sm:$0xf]
    %v2450 = vld [vmem:[#allocation13 + $0xb28] sm:$0xff]
    %v2451 = vld [vmem:[#allocation13 + $0xb30] sm:$0xff]
    %v2452 = vld [vmem:[#allocation13 + $0xb38] sm:$0xff]
    %v2453 = vld [vmem:[#allocation13 + $0xb40] sm:$0xf]
    %v2454 = vld [vmem:[#allocation13 + $0xb44] sm:$0xff]
    %v2455 = vld [vmem:[#allocation13 + $0xb4c] sm:$0xff]
    %v2456 = vld [vmem:[#allocation13 + $0xb54] sm:$0xff]
    %v2457 = vld [vmem:[#allocation13 + $0xb5c] sm:$0xf]
    %v2458 = vld [vmem:[#allocation13 + $0xb60] sm:$0xff]
    %v2459 = vld [vmem:[#allocation13 + $0xb68] sm:$0xff]
    %v2460 = vld [vmem:[#allocation13 + $0xb70] sm:$0xff]
    %v2461 = vld [vmem:[#allocation13 + $0xb78] sm:$0xf]
    %v2462 = vld [vmem:[#allocation13 + $0xb7c] sm:$0xff]
    %v2463 = vld [vmem:[#allocation13 + $0xb84] sm:$0xff]
    %v2464 = vld [vmem:[#allocation13 + $0xb8c] sm:$0xff]
    %v2465 = vld [vmem:[#allocation13 + $0xb94] sm:$0xf]
    %v2466 = vld [vmem:[#allocation13 + $0xb98] sm:$0xff]
    %v2467 = vld [vmem:[#allocation13 + $0xba0] sm:$0xff]
    %v2468 = vld [vmem:[#allocation13 + $0xba8] sm:$0xff]
    %v2469 = vld [vmem:[#allocation13 + $0xbb0] sm:$0xf]
    %v2470 = vld [vmem:[#allocation13 + $0xbb4] sm:$0xff]
    %v2471 = vld [vmem:[#allocation13 + $0xbbc] sm:$0xff]
    %v2472 = vld [vmem:[#allocation13 + $0xbc4] sm:$0xff]
    %v2473 = vld [vmem:[#allocation13 + $0xbcc] sm:$0xf]
    %v2474 = vld [vmem:[#allocation13 + $0xbd0] sm:$0xff]
    %v2475 = vld [vmem:[#allocation13 + $0xbd8] sm:$0xff]
    %v2476 = vld [vmem:[#allocation13 + $0xbe0] sm:$0xff]
    %v2477 = vld [vmem:[#allocation13 + $0xbe8] sm:$0xf]
    %v2478 = vld [vmem:[#allocation13 + $0xbec] sm:$0xff]
    %v2479 = vld [vmem:[#allocation13 + $0xbf4] sm:$0xff]
    %v2480 = vld [vmem:[#allocation13 + $0xbfc] sm:$0xff]
    %v2481 = vld [vmem:[#allocation13 + $0xc04] sm:$0xf]
    %v2482 = vld [vmem:[#allocation13 + $0xc08] sm:$0xff]
    %v2483 = vld [vmem:[#allocation13 + $0xc10] sm:$0xff]
    %v2484 = vld [vmem:[#allocation13 + $0xc18] sm:$0xff]
    %v2485 = vld [vmem:[#allocation13 + $0xc20] sm:$0xf]
    %v2486 = vld [vmem:[#allocation13 + $0xc24] sm:$0xff]
    %v2487 = vld [vmem:[#allocation13 + $0xc2c] sm:$0xff]
    %v2488 = vld [vmem:[#allocation13 + $0xc34] sm:$0xff]
    %v2489 = vld [vmem:[#allocation13 + $0xc3c] sm:$0xf]
    %v2490 = vld [vmem:[#allocation13 + $0xc40] sm:$0xff]
    %v2491 = vld [vmem:[#allocation13 + $0xc48] sm:$0xff]
    %v2492 = vld [vmem:[#allocation13 + $0xc50] sm:$0xff]
    %v2493 = vld [vmem:[#allocation13 + $0xc58] sm:$0xf]
    %v2494 = vld [vmem:[#allocation13 + $0xc5c] sm:$0xff]
    %v2495 = vld [vmem:[#allocation13 + $0xc64] sm:$0xff]
    %v2496 = vld [vmem:[#allocation13 + $0xc6c] sm:$0xff]
    %v2497 = vld [vmem:[#allocation13 + $0xc74] sm:$0xf]
    %v2498 = vld [vmem:[#allocation13 + $0xc78] sm:$0xff]
    %v2499 = vld [vmem:[#allocation13 + $0xc80] sm:$0xff]
    %v2500 = vld [vmem:[#allocation13 + $0xc88] sm:$0xff]
    %v2501 = vld [vmem:[#allocation13 + $0xc90] sm:$0xf]
    %v2502 = vld [vmem:[#allocation13 + $0xc94] sm:$0xff]
    %v2503 = vld [vmem:[#allocation13 + $0xc9c] sm:$0xff]
    %v2504 = vld [vmem:[#allocation13 + $0xca4] sm:$0xff]
    %v2505 = vld [vmem:[#allocation13 + $0xcac] sm:$0xf]
    %v2506 = vld [vmem:[#allocation13 + $0xcb0] sm:$0xff]
    %v2507 = vld [vmem:[#allocation13 + $0xcb8] sm:$0xff]
    %v2508 = vld [vmem:[#allocation13 + $0xcc0] sm:$0xff]
    %v2509 = vld [vmem:[#allocation13 + $0xcc8] sm:$0xf]
    %v2510 = vld [vmem:[#allocation13 + $0xccc] sm:$0xff]
    %v2511 = vld [vmem:[#allocation13 + $0xcd4] sm:$0xff]
    %v2512 = vld [vmem:[#allocation13 + $0xcdc] sm:$0xff]
    %v2513 = vld [vmem:[#allocation13 + $0xce4] sm:$0xf]
    %v2514 = vld [vmem:[#allocation13 + $0xce8] sm:$0xff]
    %v2515 = vld [vmem:[#allocation13 + $0xcf0] sm:$0xff]
    %v2516 = vld [vmem:[#allocation13 + $0xcf8] sm:$0xff]
    %v2517 = vld [vmem:[#allocation13 + $0xd00] sm:$0xf]
    %v2518 = vld [vmem:[#allocation13 + $0xd04] sm:$0xff]
    %v2519 = vld [vmem:[#allocation13 + $0xd0c] sm:$0xff]
    %v2520 = vld [vmem:[#allocation13 + $0xd14] sm:$0xff]
    %v2521 = vld [vmem:[#allocation13 + $0xd1c] sm:$0xf]
    %v2522 = vld [vmem:[#allocation13 + $0xd20] sm:$0xff]
    %v2523 = vld [vmem:[#allocation13 + $0xd28] sm:$0xff]
    %v2524 = vld [vmem:[#allocation13 + $0xd30] sm:$0xff]
    %v2525 = vld [vmem:[#allocation13 + $0xd38] sm:$0xf]
    %v2526 = vld [vmem:[#allocation13 + $0xd3c] sm:$0xff]
    %v2527 = vld [vmem:[#allocation13 + $0xd44] sm:$0xff]
    %v2528 = vld [vmem:[#allocation13 + $0xd4c] sm:$0xff]
    %v2529 = vld [vmem:[#allocation13 + $0xd54] sm:$0xf]
    %v2530 = vld [vmem:[#allocation13 + $0xd58] sm:$0xff]
    %v2531 = vld [vmem:[#allocation13 + $0xd60] sm:$0xff]
    %v2532 = vld [vmem:[#allocation13 + $0xd68] sm:$0xff]
    %v2533 = vld [vmem:[#allocation13 + $0xd70] sm:$0xf]
    %v2534 = vld [vmem:[#allocation13 + $0xd74] sm:$0xff]
    %v2535 = vld [vmem:[#allocation13 + $0xd7c] sm:$0xff]
    %v2536 = vld [vmem:[#allocation13 + $0xd84] sm:$0xff]
    %v2537 = vld [vmem:[#allocation13 + $0xd8c] sm:$0xf]
    %v2538 = vld [vmem:[#allocation13 + $0xd90] sm:$0xff]
    %v2539 = vld [vmem:[#allocation13 + $0xd98] sm:$0xff]
    %v2540 = vld [vmem:[#allocation13 + $0xda0] sm:$0xff]
    %v2541 = vld [vmem:[#allocation13 + $0xda8] sm:$0xf]
    %v2542 = vld [vmem:[#allocation13 + $0xdac] sm:$0xff]
    %v2543 = vld [vmem:[#allocation13 + $0xdb4] sm:$0xff]
    %v2544 = vld [vmem:[#allocation13 + $0xdbc] sm:$0xff]
    %v2545 = vld [vmem:[#allocation13 + $0xdc4] sm:$0xf]
    %v2546 = vld [vmem:[#allocation13 + $0xdc8] sm:$0xff]
    %v2547 = vld [vmem:[#allocation13 + $0xdd0] sm:$0xff]
    %v2548 = vld [vmem:[#allocation13 + $0xdd8] sm:$0xff]
    %v2549 = vld [vmem:[#allocation13 + $0xde0] sm:$0xf]
    %v2550 = vld [vmem:[#allocation13 + $0xde4] sm:$0xff]
    %v2551 = vld [vmem:[#allocation13 + $0xdec] sm:$0xff]
    %v2552 = vld [vmem:[#allocation13 + $0xdf4] sm:$0xff]
    %v2553 = vld [vmem:[#allocation13 + $0xdfc] sm:$0xf]
    %v2554 = vunpack.c.l.bf16 %v2042
    %v2555 = vunpack.c.h.bf16 %v2042
    %v2556 = vunpack.c.l.bf16 %v2043
    %v2557 = vunpack.c.h.bf16 %v2043
    %v2558 = vunpack.c.l.bf16 %v2044
    %v2559 = vunpack.c.h.bf16 %v2044
    %v2560 = vunpack.c.l.bf16 %v2045
    %v2561 = vunpack.c.l.bf16 %v2046
    %v2562 = vunpack.c.h.bf16 %v2046
    %v2563 = vunpack.c.l.bf16 %v2047
    %v2564 = vunpack.c.h.bf16 %v2047
    %v2565 = vunpack.c.l.bf16 %v2048
    %v2566 = vunpack.c.h.bf16 %v2048
    %v2567 = vunpack.c.l.bf16 %v2049
    %v2568 = vunpack.c.l.bf16 %v2050
    %v2569 = vunpack.c.h.bf16 %v2050
    %v2570 = vunpack.c.l.bf16 %v2051
    %v2571 = vunpack.c.h.bf16 %v2051
    %v2572 = vunpack.c.l.bf16 %v2052
    %v2573 = vunpack.c.h.bf16 %v2052
    %v2574 = vunpack.c.l.bf16 %v2053
    %v2575 = vunpack.c.l.bf16 %v2054
    %v2576 = vunpack.c.h.bf16 %v2054
    %v2577 = vunpack.c.l.bf16 %v2055
    %v2578 = vunpack.c.h.bf16 %v2055
    %v2579 = vunpack.c.l.bf16 %v2056
    %v2580 = vunpack.c.h.bf16 %v2056
    %v2581 = vunpack.c.l.bf16 %v2057
    %v2582 = vunpack.c.l.bf16 %v2058
    %v2583 = vunpack.c.h.bf16 %v2058
    %v2584 = vunpack.c.l.bf16 %v2059
    %v2585 = vunpack.c.h.bf16 %v2059
    %v2586 = vunpack.c.l.bf16 %v2060
    %v2587 = vunpack.c.h.bf16 %v2060
    %v2588 = vunpack.c.l.bf16 %v2061
    %v2589 = vunpack.c.l.bf16 %v2062
    %v2590 = vunpack.c.h.bf16 %v2062
    %v2591 = vunpack.c.l.bf16 %v2063
    %v2592 = vunpack.c.h.bf16 %v2063
    %v2593 = vunpack.c.l.bf16 %v2064
    %v2594 = vunpack.c.h.bf16 %v2064
    %v2595 = vunpack.c.l.bf16 %v2065
    %v2596 = vunpack.c.l.bf16 %v2066
    %v2597 = vunpack.c.h.bf16 %v2066
    %v2598 = vunpack.c.l.bf16 %v2067
    %v2599 = vunpack.c.h.bf16 %v2067
    %v2600 = vunpack.c.l.bf16 %v2068
    %v2601 = vunpack.c.h.bf16 %v2068
    %v2602 = vunpack.c.l.bf16 %v2069
    %v2603 = vunpack.c.l.bf16 %v2070
    %v2604 = vunpack.c.h.bf16 %v2070
    %v2605 = vunpack.c.l.bf16 %v2071
    %v2606 = vunpack.c.h.bf16 %v2071
    %v2607 = vunpack.c.l.bf16 %v2072
    %v2608 = vunpack.c.h.bf16 %v2072
    %v2609 = vunpack.c.l.bf16 %v2073
    %v2610 = vunpack.c.l.bf16 %v2074
    %v2611 = vunpack.c.h.bf16 %v2074
    %v2612 = vunpack.c.l.bf16 %v2075
    %v2613 = vunpack.c.h.bf16 %v2075
    %v2614 = vunpack.c.l.bf16 %v2076
    %v2615 = vunpack.c.h.bf16 %v2076
    %v2616 = vunpack.c.l.bf16 %v2077
    %v2617 = vunpack.c.l.bf16 %v2078
    %v2618 = vunpack.c.h.bf16 %v2078
    %v2619 = vunpack.c.l.bf16 %v2079
    %v2620 = vunpack.c.h.bf16 %v2079
    %v2621 = vunpack.c.l.bf16 %v2080
    %v2622 = vunpack.c.h.bf16 %v2080
    %v2623 = vunpack.c.l.bf16 %v2081
    %v2624 = vunpack.c.l.bf16 %v2082
    %v2625 = vunpack.c.h.bf16 %v2082
    %v2626 = vunpack.c.l.bf16 %v2083
    %v2627 = vunpack.c.h.bf16 %v2083
    %v2628 = vunpack.c.l.bf16 %v2084
    %v2629 = vunpack.c.h.bf16 %v2084
    %v2630 = vunpack.c.l.bf16 %v2085
    %v2631 = vunpack.c.l.bf16 %v2086
    %v2632 = vunpack.c.h.bf16 %v2086
    %v2633 = vunpack.c.l.bf16 %v2087
    %v2634 = vunpack.c.h.bf16 %v2087
    %v2635 = vunpack.c.l.bf16 %v2088
    %v2636 = vunpack.c.h.bf16 %v2088
    %v2637 = vunpack.c.l.bf16 %v2089
    %v2638 = vunpack.c.l.bf16 %v2090
    %v2639 = vunpack.c.h.bf16 %v2090
    %v2640 = vunpack.c.l.bf16 %v2091
    %v2641 = vunpack.c.h.bf16 %v2091
    %v2642 = vunpack.c.l.bf16 %v2092
    %v2643 = vunpack.c.h.bf16 %v2092
    %v2644 = vunpack.c.l.bf16 %v2093
    %v2645 = vunpack.c.l.bf16 %v2094
    %v2646 = vunpack.c.h.bf16 %v2094
    %v2647 = vunpack.c.l.bf16 %v2095
    %v2648 = vunpack.c.h.bf16 %v2095
    %v2649 = vunpack.c.l.bf16 %v2096
    %v2650 = vunpack.c.h.bf16 %v2096
    %v2651 = vunpack.c.l.bf16 %v2097
    %v2652 = vunpack.c.l.bf16 %v2098
    %v2653 = vunpack.c.h.bf16 %v2098
    %v2654 = vunpack.c.l.bf16 %v2099
    %v2655 = vunpack.c.h.bf16 %v2099
    %v2656 = vunpack.c.l.bf16 %v2100
    %v2657 = vunpack.c.h.bf16 %v2100
    %v2658 = vunpack.c.l.bf16 %v2101
    %v2659 = vunpack.c.l.bf16 %v2102
    %v2660 = vunpack.c.h.bf16 %v2102
    %v2661 = vunpack.c.l.bf16 %v2103
    %v2662 = vunpack.c.h.bf16 %v2103
    %v2663 = vunpack.c.l.bf16 %v2104
    %v2664 = vunpack.c.h.bf16 %v2104
    %v2665 = vunpack.c.l.bf16 %v2105
    %v2666 = vunpack.c.l.bf16 %v2106
    %v2667 = vunpack.c.h.bf16 %v2106
    %v2668 = vunpack.c.l.bf16 %v2107
    %v2669 = vunpack.c.h.bf16 %v2107
    %v2670 = vunpack.c.l.bf16 %v2108
    %v2671 = vunpack.c.h.bf16 %v2108
    %v2672 = vunpack.c.l.bf16 %v2109
    %v2673 = vunpack.c.l.bf16 %v2110
    %v2674 = vunpack.c.h.bf16 %v2110
    %v2675 = vunpack.c.l.bf16 %v2111
    %v2676 = vunpack.c.h.bf16 %v2111
    %v2677 = vunpack.c.l.bf16 %v2112
    %v2678 = vunpack.c.h.bf16 %v2112
    %v2679 = vunpack.c.l.bf16 %v2113
    %v2680 = vunpack.c.l.bf16 %v2114
    %v2681 = vunpack.c.h.bf16 %v2114
    %v2682 = vunpack.c.l.bf16 %v2115
    %v2683 = vunpack.c.h.bf16 %v2115
    %v2684 = vunpack.c.l.bf16 %v2116
    %v2685 = vunpack.c.h.bf16 %v2116
    %v2686 = vunpack.c.l.bf16 %v2117
    %v2687 = vunpack.c.l.bf16 %v2118
    %v2688 = vunpack.c.h.bf16 %v2118
    %v2689 = vunpack.c.l.bf16 %v2119
    %v2690 = vunpack.c.h.bf16 %v2119
    %v2691 = vunpack.c.l.bf16 %v2120
    %v2692 = vunpack.c.h.bf16 %v2120
    %v2693 = vunpack.c.l.bf16 %v2121
    %v2694 = vunpack.c.l.bf16 %v2122
    %v2695 = vunpack.c.h.bf16 %v2122
    %v2696 = vunpack.c.l.bf16 %v2123
    %v2697 = vunpack.c.h.bf16 %v2123
    %v2698 = vunpack.c.l.bf16 %v2124
    %v2699 = vunpack.c.h.bf16 %v2124
    %v2700 = vunpack.c.l.bf16 %v2125
    %v2701 = vunpack.c.l.bf16 %v2126
    %v2702 = vunpack.c.h.bf16 %v2126
    %v2703 = vunpack.c.l.bf16 %v2127
    %v2704 = vunpack.c.h.bf16 %v2127
    %v2705 = vunpack.c.l.bf16 %v2128
    %v2706 = vunpack.c.h.bf16 %v2128
    %v2707 = vunpack.c.l.bf16 %v2129
    %v2708 = vunpack.c.l.bf16 %v2130
    %v2709 = vunpack.c.h.bf16 %v2130
    %v2710 = vunpack.c.l.bf16 %v2131
    %v2711 = vunpack.c.h.bf16 %v2131
    %v2712 = vunpack.c.l.bf16 %v2132
    %v2713 = vunpack.c.h.bf16 %v2132
    %v2714 = vunpack.c.l.bf16 %v2133
    %v2715 = vunpack.c.l.bf16 %v2134
    %v2716 = vunpack.c.h.bf16 %v2134
    %v2717 = vunpack.c.l.bf16 %v2135
    %v2718 = vunpack.c.h.bf16 %v2135
    %v2719 = vunpack.c.l.bf16 %v2136
    %v2720 = vunpack.c.h.bf16 %v2136
    %v2721 = vunpack.c.l.bf16 %v2137
    %v2722 = vunpack.c.l.bf16 %v2138
    %v2723 = vunpack.c.h.bf16 %v2138
    %v2724 = vunpack.c.l.bf16 %v2139
    %v2725 = vunpack.c.h.bf16 %v2139
    %v2726 = vunpack.c.l.bf16 %v2140
    %v2727 = vunpack.c.h.bf16 %v2140
    %v2728 = vunpack.c.l.bf16 %v2141
    %v2729 = vunpack.c.l.bf16 %v2142
    %v2730 = vunpack.c.h.bf16 %v2142
    %v2731 = vunpack.c.l.bf16 %v2143
    %v2732 = vunpack.c.h.bf16 %v2143
    %v2733 = vunpack.c.l.bf16 %v2144
    %v2734 = vunpack.c.h.bf16 %v2144
    %v2735 = vunpack.c.l.bf16 %v2145
    %v2736 = vunpack.c.l.bf16 %v2146
    %v2737 = vunpack.c.h.bf16 %v2146
    %v2738 = vunpack.c.l.bf16 %v2147
    %v2739 = vunpack.c.h.bf16 %v2147
    %v2740 = vunpack.c.l.bf16 %v2148
    %v2741 = vunpack.c.h.bf16 %v2148
    %v2742 = vunpack.c.l.bf16 %v2149
    %v2743 = vunpack.c.l.bf16 %v2150
    %v2744 = vunpack.c.h.bf16 %v2150
    %v2745 = vunpack.c.l.bf16 %v2151
    %v2746 = vunpack.c.h.bf16 %v2151
    %v2747 = vunpack.c.l.bf16 %v2152
    %v2748 = vunpack.c.h.bf16 %v2152
    %v2749 = vunpack.c.l.bf16 %v2153
    %v2750 = vunpack.c.l.bf16 %v2154
    %v2751 = vunpack.c.h.bf16 %v2154
    %v2752 = vunpack.c.l.bf16 %v2155
    %v2753 = vunpack.c.h.bf16 %v2155
    %v2754 = vunpack.c.l.bf16 %v2156
    %v2755 = vunpack.c.h.bf16 %v2156
    %v2756 = vunpack.c.l.bf16 %v2157
    %v2757 = vunpack.c.l.bf16 %v2158
    %v2758 = vunpack.c.h.bf16 %v2158
    %v2759 = vunpack.c.l.bf16 %v2159
    %v2760 = vunpack.c.h.bf16 %v2159
    %v2761 = vunpack.c.l.bf16 %v2160
    %v2762 = vunpack.c.h.bf16 %v2160
    %v2763 = vunpack.c.l.bf16 %v2161
    %v2764 = vunpack.c.l.bf16 %v2162
    %v2765 = vunpack.c.h.bf16 %v2162
    %v2766 = vunpack.c.l.bf16 %v2163
    %v2767 = vunpack.c.h.bf16 %v2163
    %v2768 = vunpack.c.l.bf16 %v2164
    %v2769 = vunpack.c.h.bf16 %v2164
    %v2770 = vunpack.c.l.bf16 %v2165
    %v2771 = vunpack.c.l.bf16 %v2166
    %v2772 = vunpack.c.h.bf16 %v2166
    %v2773 = vunpack.c.l.bf16 %v2167
    %v2774 = vunpack.c.h.bf16 %v2167
    %v2775 = vunpack.c.l.bf16 %v2168
    %v2776 = vunpack.c.h.bf16 %v2168
    %v2777 = vunpack.c.l.bf16 %v2169
    %v2778 = vunpack.c.l.bf16 %v2170
    %v2779 = vunpack.c.h.bf16 %v2170
    %v2780 = vunpack.c.l.bf16 %v2171
    %v2781 = vunpack.c.h.bf16 %v2171
    %v2782 = vunpack.c.l.bf16 %v2172
    %v2783 = vunpack.c.h.bf16 %v2172
    %v2784 = vunpack.c.l.bf16 %v2173
    %v2785 = vunpack.c.l.bf16 %v2174
    %v2786 = vunpack.c.h.bf16 %v2174
    %v2787 = vunpack.c.l.bf16 %v2175
    %v2788 = vunpack.c.h.bf16 %v2175
    %v2789 = vunpack.c.l.bf16 %v2176
    %v2790 = vunpack.c.h.bf16 %v2176
    %v2791 = vunpack.c.l.bf16 %v2177
    %v2792 = vunpack.c.l.bf16 %v2178
    %v2793 = vunpack.c.h.bf16 %v2178
    %v2794 = vunpack.c.l.bf16 %v2179
    %v2795 = vunpack.c.h.bf16 %v2179
    %v2796 = vunpack.c.l.bf16 %v2180
    %v2797 = vunpack.c.h.bf16 %v2180
    %v2798 = vunpack.c.l.bf16 %v2181
    %v2799 = vunpack.c.l.bf16 %v2182
    %v2800 = vunpack.c.h.bf16 %v2182
    %v2801 = vunpack.c.l.bf16 %v2183
    %v2802 = vunpack.c.h.bf16 %v2183
    %v2803 = vunpack.c.l.bf16 %v2184
    %v2804 = vunpack.c.h.bf16 %v2184
    %v2805 = vunpack.c.l.bf16 %v2185
    %v2806 = vunpack.c.l.bf16 %v2186
    %v2807 = vunpack.c.h.bf16 %v2186
    %v2808 = vunpack.c.l.bf16 %v2187
    %v2809 = vunpack.c.h.bf16 %v2187
    %v2810 = vunpack.c.l.bf16 %v2188
    %v2811 = vunpack.c.h.bf16 %v2188
    %v2812 = vunpack.c.l.bf16 %v2189
    %v2813 = vunpack.c.l.bf16 %v2190
    %v2814 = vunpack.c.h.bf16 %v2190
    %v2815 = vunpack.c.l.bf16 %v2191
    %v2816 = vunpack.c.h.bf16 %v2191
    %v2817 = vunpack.c.l.bf16 %v2192
    %v2818 = vunpack.c.h.bf16 %v2192
    %v2819 = vunpack.c.l.bf16 %v2193
    %v2820 = vunpack.c.l.bf16 %v2194
    %v2821 = vunpack.c.h.bf16 %v2194
    %v2822 = vunpack.c.l.bf16 %v2195
    %v2823 = vunpack.c.h.bf16 %v2195
    %v2824 = vunpack.c.l.bf16 %v2196
    %v2825 = vunpack.c.h.bf16 %v2196
    %v2826 = vunpack.c.l.bf16 %v2197
    %v2827 = vunpack.c.l.bf16 %v2198
    %v2828 = vunpack.c.h.bf16 %v2198
    %v2829 = vunpack.c.l.bf16 %v2199
    %v2830 = vunpack.c.h.bf16 %v2199
    %v2831 = vunpack.c.l.bf16 %v2200
    %v2832 = vunpack.c.h.bf16 %v2200
    %v2833 = vunpack.c.l.bf16 %v2201
    %v2834 = vunpack.c.l.bf16 %v2202
    %v2835 = vunpack.c.h.bf16 %v2202
    %v2836 = vunpack.c.l.bf16 %v2203
    %v2837 = vunpack.c.h.bf16 %v2203
    %v2838 = vunpack.c.l.bf16 %v2204
    %v2839 = vunpack.c.h.bf16 %v2204
    %v2840 = vunpack.c.l.bf16 %v2205
    %v2841 = vunpack.c.l.bf16 %v2206
    %v2842 = vunpack.c.h.bf16 %v2206
    %v2843 = vunpack.c.l.bf16 %v2207
    %v2844 = vunpack.c.h.bf16 %v2207
    %v2845 = vunpack.c.l.bf16 %v2208
    %v2846 = vunpack.c.h.bf16 %v2208
    %v2847 = vunpack.c.l.bf16 %v2209
    %v2848 = vunpack.c.l.bf16 %v2210
    %v2849 = vunpack.c.h.bf16 %v2210
    %v2850 = vunpack.c.l.bf16 %v2211
    %v2851 = vunpack.c.h.bf16 %v2211
    %v2852 = vunpack.c.l.bf16 %v2212
    %v2853 = vunpack.c.h.bf16 %v2212
    %v2854 = vunpack.c.l.bf16 %v2213
    %v2855 = vunpack.c.l.bf16 %v2214
    %v2856 = vunpack.c.h.bf16 %v2214
    %v2857 = vunpack.c.l.bf16 %v2215
    %v2858 = vunpack.c.h.bf16 %v2215
    %v2859 = vunpack.c.l.bf16 %v2216
    %v2860 = vunpack.c.h.bf16 %v2216
    %v2861 = vunpack.c.l.bf16 %v2217
    %v2862 = vunpack.c.l.bf16 %v2218
    %v2863 = vunpack.c.h.bf16 %v2218
    %v2864 = vunpack.c.l.bf16 %v2219
    %v2865 = vunpack.c.h.bf16 %v2219
    %v2866 = vunpack.c.l.bf16 %v2220
    %v2867 = vunpack.c.h.bf16 %v2220
    %v2868 = vunpack.c.l.bf16 %v2221
    %v2869 = vunpack.c.l.bf16 %v2222
    %v2870 = vunpack.c.h.bf16 %v2222
    %v2871 = vunpack.c.l.bf16 %v2223
    %v2872 = vunpack.c.h.bf16 %v2223
    %v2873 = vunpack.c.l.bf16 %v2224
    %v2874 = vunpack.c.h.bf16 %v2224
    %v2875 = vunpack.c.l.bf16 %v2225
    %v2876 = vunpack.c.l.bf16 %v2226
    %v2877 = vunpack.c.h.bf16 %v2226
    %v2878 = vunpack.c.l.bf16 %v2227
    %v2879 = vunpack.c.h.bf16 %v2227
    %v2880 = vunpack.c.l.bf16 %v2228
    %v2881 = vunpack.c.h.bf16 %v2228
    %v2882 = vunpack.c.l.bf16 %v2229
    %v2883 = vunpack.c.l.bf16 %v2230
    %v2884 = vunpack.c.h.bf16 %v2230
    %v2885 = vunpack.c.l.bf16 %v2231
    %v2886 = vunpack.c.h.bf16 %v2231
    %v2887 = vunpack.c.l.bf16 %v2232
    %v2888 = vunpack.c.h.bf16 %v2232
    %v2889 = vunpack.c.l.bf16 %v2233
    %v2890 = vunpack.c.l.bf16 %v2234
    %v2891 = vunpack.c.h.bf16 %v2234
    %v2892 = vunpack.c.l.bf16 %v2235
    %v2893 = vunpack.c.h.bf16 %v2235
    %v2894 = vunpack.c.l.bf16 %v2236
    %v2895 = vunpack.c.h.bf16 %v2236
    %v2896 = vunpack.c.l.bf16 %v2237
    %v2897 = vunpack.c.l.bf16 %v2238
    %v2898 = vunpack.c.h.bf16 %v2238
    %v2899 = vunpack.c.l.bf16 %v2239
    %v2900 = vunpack.c.h.bf16 %v2239
    %v2901 = vunpack.c.l.bf16 %v2240
    %v2902 = vunpack.c.h.bf16 %v2240
    %v2903 = vunpack.c.l.bf16 %v2241
    %v2904 = vunpack.c.l.bf16 %v2242
    %v2905 = vunpack.c.h.bf16 %v2242
    %v2906 = vunpack.c.l.bf16 %v2243
    %v2907 = vunpack.c.h.bf16 %v2243
    %v2908 = vunpack.c.l.bf16 %v2244
    %v2909 = vunpack.c.h.bf16 %v2244
    %v2910 = vunpack.c.l.bf16 %v2245
    %v2911 = vunpack.c.l.bf16 %v2246
    %v2912 = vunpack.c.h.bf16 %v2246
    %v2913 = vunpack.c.l.bf16 %v2247
    %v2914 = vunpack.c.h.bf16 %v2247
    %v2915 = vunpack.c.l.bf16 %v2248
    %v2916 = vunpack.c.h.bf16 %v2248
    %v2917 = vunpack.c.l.bf16 %v2249
    %v2918 = vunpack.c.l.bf16 %v2250
    %v2919 = vunpack.c.h.bf16 %v2250
    %v2920 = vunpack.c.l.bf16 %v2251
    %v2921 = vunpack.c.h.bf16 %v2251
    %v2922 = vunpack.c.l.bf16 %v2252
    %v2923 = vunpack.c.h.bf16 %v2252
    %v2924 = vunpack.c.l.bf16 %v2253
    %v2925 = vunpack.c.l.bf16 %v2254
    %v2926 = vunpack.c.h.bf16 %v2254
    %v2927 = vunpack.c.l.bf16 %v2255
    %v2928 = vunpack.c.h.bf16 %v2255
    %v2929 = vunpack.c.l.bf16 %v2256
    %v2930 = vunpack.c.h.bf16 %v2256
    %v2931 = vunpack.c.l.bf16 %v2257
    %v2932 = vunpack.c.l.bf16 %v2258
    %v2933 = vunpack.c.h.bf16 %v2258
    %v2934 = vunpack.c.l.bf16 %v2259
    %v2935 = vunpack.c.h.bf16 %v2259
    %v2936 = vunpack.c.l.bf16 %v2260
    %v2937 = vunpack.c.h.bf16 %v2260
    %v2938 = vunpack.c.l.bf16 %v2261
    %v2939 = vunpack.c.l.bf16 %v2262
    %v2940 = vunpack.c.h.bf16 %v2262
    %v2941 = vunpack.c.l.bf16 %v2263
    %v2942 = vunpack.c.h.bf16 %v2263
    %v2943 = vunpack.c.l.bf16 %v2264
    %v2944 = vunpack.c.h.bf16 %v2264
    %v2945 = vunpack.c.l.bf16 %v2265
    %v2946 = vunpack.c.l.bf16 %v2266
    %v2947 = vunpack.c.h.bf16 %v2266
    %v2948 = vunpack.c.l.bf16 %v2267
    %v2949 = vunpack.c.h.bf16 %v2267
    %v2950 = vunpack.c.l.bf16 %v2268
    %v2951 = vunpack.c.h.bf16 %v2268
    %v2952 = vunpack.c.l.bf16 %v2269
    %v2953 = vunpack.c.l.bf16 %v2270
    %v2954 = vunpack.c.h.bf16 %v2270
    %v2955 = vunpack.c.l.bf16 %v2271
    %v2956 = vunpack.c.h.bf16 %v2271
    %v2957 = vunpack.c.l.bf16 %v2272
    %v2958 = vunpack.c.h.bf16 %v2272
    %v2959 = vunpack.c.l.bf16 %v2273
    %v2960 = vunpack.c.l.bf16 %v2274
    %v2961 = vunpack.c.h.bf16 %v2274
    %v2962 = vunpack.c.l.bf16 %v2275
    %v2963 = vunpack.c.h.bf16 %v2275
    %v2964 = vunpack.c.l.bf16 %v2276
    %v2965 = vunpack.c.h.bf16 %v2276
    %v2966 = vunpack.c.l.bf16 %v2277
    %v2967 = vunpack.c.l.bf16 %v2278
    %v2968 = vunpack.c.h.bf16 %v2278
    %v2969 = vunpack.c.l.bf16 %v2279
    %v2970 = vunpack.c.h.bf16 %v2279
    %v2971 = vunpack.c.l.bf16 %v2280
    %v2972 = vunpack.c.h.bf16 %v2280
    %v2973 = vunpack.c.l.bf16 %v2281
    %v2974 = vunpack.c.l.bf16 %v2282
    %v2975 = vunpack.c.h.bf16 %v2282
    %v2976 = vunpack.c.l.bf16 %v2283
    %v2977 = vunpack.c.h.bf16 %v2283
    %v2978 = vunpack.c.l.bf16 %v2284
    %v2979 = vunpack.c.h.bf16 %v2284
    %v2980 = vunpack.c.l.bf16 %v2285
    %v2981 = vunpack.c.l.bf16 %v2286
    %v2982 = vunpack.c.h.bf16 %v2286
    %v2983 = vunpack.c.l.bf16 %v2287
    %v2984 = vunpack.c.h.bf16 %v2287
    %v2985 = vunpack.c.l.bf16 %v2288
    %v2986 = vunpack.c.h.bf16 %v2288
    %v2987 = vunpack.c.l.bf16 %v2289
    %v2988 = vunpack.c.l.bf16 %v2290
    %v2989 = vunpack.c.h.bf16 %v2290
    %v2990 = vunpack.c.l.bf16 %v2291
    %v2991 = vunpack.c.h.bf16 %v2291
    %v2992 = vunpack.c.l.bf16 %v2292
    %v2993 = vunpack.c.h.bf16 %v2292
    %v2994 = vunpack.c.l.bf16 %v2293
    %v2995 = vunpack.c.l.bf16 %v2294
    %v2996 = vunpack.c.h.bf16 %v2294
    %v2997 = vunpack.c.l.bf16 %v2295
    %v2998 = vunpack.c.h.bf16 %v2295
    %v2999 = vunpack.c.l.bf16 %v2296
    %v3000 = vunpack.c.h.bf16 %v2296
    %v3001 = vunpack.c.l.bf16 %v2297
    %v3002 = vunpack.c.l.bf16 %v2298
    %v3003 = vunpack.c.h.bf16 %v2298
    %v3004 = vunpack.c.l.bf16 %v2299
    %v3005 = vunpack.c.h.bf16 %v2299
    %v3006 = vunpack.c.l.bf16 %v2300
    %v3007 = vunpack.c.h.bf16 %v2300
    %v3008 = vunpack.c.l.bf16 %v2301
    %v3009 = vunpack.c.l.bf16 %v2302
    %v3010 = vunpack.c.h.bf16 %v2302
    %v3011 = vunpack.c.l.bf16 %v2303
    %v3012 = vunpack.c.h.bf16 %v2303
    %v3013 = vunpack.c.l.bf16 %v2304
    %v3014 = vunpack.c.h.bf16 %v2304
    %v3015 = vunpack.c.l.bf16 %v2305
    %v3016 = vunpack.c.l.bf16 %v2306
    %v3017 = vunpack.c.h.bf16 %v2306
    %v3018 = vunpack.c.l.bf16 %v2307
    %v3019 = vunpack.c.h.bf16 %v2307
    %v3020 = vunpack.c.l.bf16 %v2308
    %v3021 = vunpack.c.h.bf16 %v2308
    %v3022 = vunpack.c.l.bf16 %v2309
    %v3023 = vunpack.c.l.bf16 %v2310
    %v3024 = vunpack.c.h.bf16 %v2310
    %v3025 = vunpack.c.l.bf16 %v2311
    %v3026 = vunpack.c.h.bf16 %v2311
    %v3027 = vunpack.c.l.bf16 %v2312
    %v3028 = vunpack.c.h.bf16 %v2312
    %v3029 = vunpack.c.l.bf16 %v2313
    %v3030 = vunpack.c.l.bf16 %v2314
    %v3031 = vunpack.c.h.bf16 %v2314
    %v3032 = vunpack.c.l.bf16 %v2315
    %v3033 = vunpack.c.h.bf16 %v2315
    %v3034 = vunpack.c.l.bf16 %v2316
    %v3035 = vunpack.c.h.bf16 %v2316
    %v3036 = vunpack.c.l.bf16 %v2317
    %v3037 = vunpack.c.l.bf16 %v2318
    %v3038 = vunpack.c.h.bf16 %v2318
    %v3039 = vunpack.c.l.bf16 %v2319
    %v3040 = vunpack.c.h.bf16 %v2319
    %v3041 = vunpack.c.l.bf16 %v2320
    %v3042 = vunpack.c.h.bf16 %v2320
    %v3043 = vunpack.c.l.bf16 %v2321
    %v3044 = vunpack.c.l.bf16 %v2322
    %v3045 = vunpack.c.h.bf16 %v2322
    %v3046 = vunpack.c.l.bf16 %v2323
    %v3047 = vunpack.c.h.bf16 %v2323
    %v3048 = vunpack.c.l.bf16 %v2324
    %v3049 = vunpack.c.h.bf16 %v2324
    %v3050 = vunpack.c.l.bf16 %v2325
    %v3051 = vunpack.c.l.bf16 %v2326
    %v3052 = vunpack.c.h.bf16 %v2326
    %v3053 = vunpack.c.l.bf16 %v2327
    %v3054 = vunpack.c.h.bf16 %v2327
    %v3055 = vunpack.c.l.bf16 %v2328
    %v3056 = vunpack.c.h.bf16 %v2328
    %v3057 = vunpack.c.l.bf16 %v2329
    %v3058 = vunpack.c.l.bf16 %v2330
    %v3059 = vunpack.c.h.bf16 %v2330
    %v3060 = vunpack.c.l.bf16 %v2331
    %v3061 = vunpack.c.h.bf16 %v2331
    %v3062 = vunpack.c.l.bf16 %v2332
    %v3063 = vunpack.c.h.bf16 %v2332
    %v3064 = vunpack.c.l.bf16 %v2333
    %v3065 = vunpack.c.l.bf16 %v2334
    %v3066 = vunpack.c.h.bf16 %v2334
    %v3067 = vunpack.c.l.bf16 %v2335
    %v3068 = vunpack.c.h.bf16 %v2335
    %v3069 = vunpack.c.l.bf16 %v2336
    %v3070 = vunpack.c.h.bf16 %v2336
    %v3071 = vunpack.c.l.bf16 %v2337
    %v3072 = vunpack.c.l.bf16 %v2338
    %v3073 = vunpack.c.h.bf16 %v2338
    %v3074 = vunpack.c.l.bf16 %v2339
    %v3075 = vunpack.c.h.bf16 %v2339
    %v3076 = vunpack.c.l.bf16 %v2340
    %v3077 = vunpack.c.h.bf16 %v2340
    %v3078 = vunpack.c.l.bf16 %v2341
    %v3079 = vunpack.c.l.bf16 %v2342
    %v3080 = vunpack.c.h.bf16 %v2342
    %v3081 = vunpack.c.l.bf16 %v2343
    %v3082 = vunpack.c.h.bf16 %v2343
    %v3083 = vunpack.c.l.bf16 %v2344
    %v3084 = vunpack.c.h.bf16 %v2344
    %v3085 = vunpack.c.l.bf16 %v2345
    %v3086 = vunpack.c.l.bf16 %v2346
    %v3087 = vunpack.c.h.bf16 %v2346
    %v3088 = vunpack.c.l.bf16 %v2347
    %v3089 = vunpack.c.h.bf16 %v2347
    %v3090 = vunpack.c.l.bf16 %v2348
    %v3091 = vunpack.c.h.bf16 %v2348
    %v3092 = vunpack.c.l.bf16 %v2349
    %v3093 = vunpack.c.l.bf16 %v2350
    %v3094 = vunpack.c.h.bf16 %v2350
    %v3095 = vunpack.c.l.bf16 %v2351
    %v3096 = vunpack.c.h.bf16 %v2351
    %v3097 = vunpack.c.l.bf16 %v2352
    %v3098 = vunpack.c.h.bf16 %v2352
    %v3099 = vunpack.c.l.bf16 %v2353
    %v3100 = vunpack.c.l.bf16 %v2354
    %v3101 = vunpack.c.h.bf16 %v2354
    %v3102 = vunpack.c.l.bf16 %v2355
    %v3103 = vunpack.c.h.bf16 %v2355
    %v3104 = vunpack.c.l.bf16 %v2356
    %v3105 = vunpack.c.h.bf16 %v2356
    %v3106 = vunpack.c.l.bf16 %v2357
    %v3107 = vunpack.c.l.bf16 %v2358
    %v3108 = vunpack.c.h.bf16 %v2358
    %v3109 = vunpack.c.l.bf16 %v2359
    %v3110 = vunpack.c.h.bf16 %v2359
    %v3111 = vunpack.c.l.bf16 %v2360
    %v3112 = vunpack.c.h.bf16 %v2360
    %v3113 = vunpack.c.l.bf16 %v2361
    %v3114 = vunpack.c.l.bf16 %v2362
    %v3115 = vunpack.c.h.bf16 %v2362
    %v3116 = vunpack.c.l.bf16 %v2363
    %v3117 = vunpack.c.h.bf16 %v2363
    %v3118 = vunpack.c.l.bf16 %v2364
    %v3119 = vunpack.c.h.bf16 %v2364
    %v3120 = vunpack.c.l.bf16 %v2365
    %v3121 = vunpack.c.l.bf16 %v2366
    %v3122 = vunpack.c.h.bf16 %v2366
    %v3123 = vunpack.c.l.bf16 %v2367
    %v3124 = vunpack.c.h.bf16 %v2367
    %v3125 = vunpack.c.l.bf16 %v2368
    %v3126 = vunpack.c.h.bf16 %v2368
    %v3127 = vunpack.c.l.bf16 %v2369
    %v3128 = vunpack.c.l.bf16 %v2370
    %v3129 = vunpack.c.h.bf16 %v2370
    %v3130 = vunpack.c.l.bf16 %v2371
    %v3131 = vunpack.c.h.bf16 %v2371
    %v3132 = vunpack.c.l.bf16 %v2372
    %v3133 = vunpack.c.h.bf16 %v2372
    %v3134 = vunpack.c.l.bf16 %v2373
    %v3135 = vunpack.c.l.bf16 %v2374
    %v3136 = vunpack.c.h.bf16 %v2374
    %v3137 = vunpack.c.l.bf16 %v2375
    %v3138 = vunpack.c.h.bf16 %v2375
    %v3139 = vunpack.c.l.bf16 %v2376
    %v3140 = vunpack.c.h.bf16 %v2376
    %v3141 = vunpack.c.l.bf16 %v2377
    %v3142 = vunpack.c.l.bf16 %v2378
    %v3143 = vunpack.c.h.bf16 %v2378
    %v3144 = vunpack.c.l.bf16 %v2379
    %v3145 = vunpack.c.h.bf16 %v2379
    %v3146 = vunpack.c.l.bf16 %v2380
    %v3147 = vunpack.c.h.bf16 %v2380
    %v3148 = vunpack.c.l.bf16 %v2381
    %v3149 = vunpack.c.l.bf16 %v2382
    %v3150 = vunpack.c.h.bf16 %v2382
    %v3151 = vunpack.c.l.bf16 %v2383
    %v3152 = vunpack.c.h.bf16 %v2383
    %v3153 = vunpack.c.l.bf16 %v2384
    %v3154 = vunpack.c.h.bf16 %v2384
    %v3155 = vunpack.c.l.bf16 %v2385
    %v3156 = vunpack.c.l.bf16 %v2386
    %v3157 = vunpack.c.h.bf16 %v2386
    %v3158 = vunpack.c.l.bf16 %v2387
    %v3159 = vunpack.c.h.bf16 %v2387
    %v3160 = vunpack.c.l.bf16 %v2388
    %v3161 = vunpack.c.h.bf16 %v2388
    %v3162 = vunpack.c.l.bf16 %v2389
    %v3163 = vunpack.c.l.bf16 %v2390
    %v3164 = vunpack.c.h.bf16 %v2390
    %v3165 = vunpack.c.l.bf16 %v2391
    %v3166 = vunpack.c.h.bf16 %v2391
    %v3167 = vunpack.c.l.bf16 %v2392
    %v3168 = vunpack.c.h.bf16 %v2392
    %v3169 = vunpack.c.l.bf16 %v2393
    %v3170 = vunpack.c.l.bf16 %v2394
    %v3171 = vunpack.c.h.bf16 %v2394
    %v3172 = vunpack.c.l.bf16 %v2395
    %v3173 = vunpack.c.h.bf16 %v2395
    %v3174 = vunpack.c.l.bf16 %v2396
    %v3175 = vunpack.c.h.bf16 %v2396
    %v3176 = vunpack.c.l.bf16 %v2397
    %v3177 = vunpack.c.l.bf16 %v2398
    %v3178 = vunpack.c.h.bf16 %v2398
    %v3179 = vunpack.c.l.bf16 %v2399
    %v3180 = vunpack.c.h.bf16 %v2399
    %v3181 = vunpack.c.l.bf16 %v2400
    %v3182 = vunpack.c.h.bf16 %v2400
    %v3183 = vunpack.c.l.bf16 %v2401
    %v3184 = vunpack.c.l.bf16 %v2402
    %v3185 = vunpack.c.h.bf16 %v2402
    %v3186 = vunpack.c.l.bf16 %v2403
    %v3187 = vunpack.c.h.bf16 %v2403
    %v3188 = vunpack.c.l.bf16 %v2404
    %v3189 = vunpack.c.h.bf16 %v2404
    %v3190 = vunpack.c.l.bf16 %v2405
    %v3191 = vunpack.c.l.bf16 %v2406
    %v3192 = vunpack.c.h.bf16 %v2406
    %v3193 = vunpack.c.l.bf16 %v2407
    %v3194 = vunpack.c.h.bf16 %v2407
    %v3195 = vunpack.c.l.bf16 %v2408
    %v3196 = vunpack.c.h.bf16 %v2408
    %v3197 = vunpack.c.l.bf16 %v2409
    %v3198 = vunpack.c.l.bf16 %v2410
    %v3199 = vunpack.c.h.bf16 %v2410
    %v3200 = vunpack.c.l.bf16 %v2411
    %v3201 = vunpack.c.h.bf16 %v2411
    %v3202 = vunpack.c.l.bf16 %v2412
    %v3203 = vunpack.c.h.bf16 %v2412
    %v3204 = vunpack.c.l.bf16 %v2413
    %v3205 = vunpack.c.l.bf16 %v2414
    %v3206 = vunpack.c.h.bf16 %v2414
    %v3207 = vunpack.c.l.bf16 %v2415
    %v3208 = vunpack.c.h.bf16 %v2415
    %v3209 = vunpack.c.l.bf16 %v2416
    %v3210 = vunpack.c.h.bf16 %v2416
    %v3211 = vunpack.c.l.bf16 %v2417
    %v3212 = vunpack.c.l.bf16 %v2418
    %v3213 = vunpack.c.h.bf16 %v2418
    %v3214 = vunpack.c.l.bf16 %v2419
    %v3215 = vunpack.c.h.bf16 %v2419
    %v3216 = vunpack.c.l.bf16 %v2420
    %v3217 = vunpack.c.h.bf16 %v2420
    %v3218 = vunpack.c.l.bf16 %v2421
    %v3219 = vunpack.c.l.bf16 %v2422
    %v3220 = vunpack.c.h.bf16 %v2422
    %v3221 = vunpack.c.l.bf16 %v2423
    %v3222 = vunpack.c.h.bf16 %v2423
    %v3223 = vunpack.c.l.bf16 %v2424
    %v3224 = vunpack.c.h.bf16 %v2424
    %v3225 = vunpack.c.l.bf16 %v2425
    %v3226 = vunpack.c.l.bf16 %v2426
    %v3227 = vunpack.c.h.bf16 %v2426
    %v3228 = vunpack.c.l.bf16 %v2427
    %v3229 = vunpack.c.h.bf16 %v2427
    %v3230 = vunpack.c.l.bf16 %v2428
    %v3231 = vunpack.c.h.bf16 %v2428
    %v3232 = vunpack.c.l.bf16 %v2429
    %v3233 = vunpack.c.l.bf16 %v2430
    %v3234 = vunpack.c.h.bf16 %v2430
    %v3235 = vunpack.c.l.bf16 %v2431
    %v3236 = vunpack.c.h.bf16 %v2431
    %v3237 = vunpack.c.l.bf16 %v2432
    %v3238 = vunpack.c.h.bf16 %v2432
    %v3239 = vunpack.c.l.bf16 %v2433
    %v3240 = vunpack.c.l.bf16 %v2434
    %v3241 = vunpack.c.h.bf16 %v2434
    %v3242 = vunpack.c.l.bf16 %v2435
    %v3243 = vunpack.c.h.bf16 %v2435
    %v3244 = vunpack.c.l.bf16 %v2436
    %v3245 = vunpack.c.h.bf16 %v2436
    %v3246 = vunpack.c.l.bf16 %v2437
    %v3247 = vunpack.c.l.bf16 %v2438
    %v3248 = vunpack.c.h.bf16 %v2438
    %v3249 = vunpack.c.l.bf16 %v2439
    %v3250 = vunpack.c.h.bf16 %v2439
    %v3251 = vunpack.c.l.bf16 %v2440
    %v3252 = vunpack.c.h.bf16 %v2440
    %v3253 = vunpack.c.l.bf16 %v2441
    %v3254 = vunpack.c.l.bf16 %v2442
    %v3255 = vunpack.c.h.bf16 %v2442
    %v3256 = vunpack.c.l.bf16 %v2443
    %v3257 = vunpack.c.h.bf16 %v2443
    %v3258 = vunpack.c.l.bf16 %v2444
    %v3259 = vunpack.c.h.bf16 %v2444
    %v3260 = vunpack.c.l.bf16 %v2445
    %v3261 = vunpack.c.l.bf16 %v2446
    %v3262 = vunpack.c.h.bf16 %v2446
    %v3263 = vunpack.c.l.bf16 %v2447
    %v3264 = vunpack.c.h.bf16 %v2447
    %v3265 = vunpack.c.l.bf16 %v2448
    %v3266 = vunpack.c.h.bf16 %v2448
    %v3267 = vunpack.c.l.bf16 %v2449
    %v3268 = vunpack.c.l.bf16 %v2450
    %v3269 = vunpack.c.h.bf16 %v2450
    %v3270 = vunpack.c.l.bf16 %v2451
    %v3271 = vunpack.c.h.bf16 %v2451
    %v3272 = vunpack.c.l.bf16 %v2452
    %v3273 = vunpack.c.h.bf16 %v2452
    %v3274 = vunpack.c.l.bf16 %v2453
    %v3275 = vunpack.c.l.bf16 %v2454
    %v3276 = vunpack.c.h.bf16 %v2454
    %v3277 = vunpack.c.l.bf16 %v2455
    %v3278 = vunpack.c.h.bf16 %v2455
    %v3279 = vunpack.c.l.bf16 %v2456
    %v3280 = vunpack.c.h.bf16 %v2456
    %v3281 = vunpack.c.l.bf16 %v2457
    %v3282 = vunpack.c.l.bf16 %v2458
    %v3283 = vunpack.c.h.bf16 %v2458
    %v3284 = vunpack.c.l.bf16 %v2459
    %v3285 = vunpack.c.h.bf16 %v2459
    %v3286 = vunpack.c.l.bf16 %v2460
    %v3287 = vunpack.c.h.bf16 %v2460
    %v3288 = vunpack.c.l.bf16 %v2461
    %v3289 = vunpack.c.l.bf16 %v2462
    %v3290 = vunpack.c.h.bf16 %v2462
    %v3291 = vunpack.c.l.bf16 %v2463
    %v3292 = vunpack.c.h.bf16 %v2463
    %v3293 = vunpack.c.l.bf16 %v2464
    %v3294 = vunpack.c.h.bf16 %v2464
    %v3295 = vunpack.c.l.bf16 %v2465
    %v3296 = vunpack.c.l.bf16 %v2466
    %v3297 = vunpack.c.h.bf16 %v2466
    %v3298 = vunpack.c.l.bf16 %v2467
    %v3299 = vunpack.c.h.bf16 %v2467
    %v3300 = vunpack.c.l.bf16 %v2468
    %v3301 = vunpack.c.h.bf16 %v2468
    %v3302 = vunpack.c.l.bf16 %v2469
    %v3303 = vunpack.c.l.bf16 %v2470
    %v3304 = vunpack.c.h.bf16 %v2470
    %v3305 = vunpack.c.l.bf16 %v2471
    %v3306 = vunpack.c.h.bf16 %v2471
    %v3307 = vunpack.c.l.bf16 %v2472
    %v3308 = vunpack.c.h.bf16 %v2472
    %v3309 = vunpack.c.l.bf16 %v2473
    %v3310 = vunpack.c.l.bf16 %v2474
    %v3311 = vunpack.c.h.bf16 %v2474
    %v3312 = vunpack.c.l.bf16 %v2475
    %v3313 = vunpack.c.h.bf16 %v2475
    %v3314 = vunpack.c.l.bf16 %v2476
    %v3315 = vunpack.c.h.bf16 %v2476
    %v3316 = vunpack.c.l.bf16 %v2477
    %v3317 = vunpack.c.l.bf16 %v2478
    %v3318 = vunpack.c.h.bf16 %v2478
    %v3319 = vunpack.c.l.bf16 %v2479
    %v3320 = vunpack.c.h.bf16 %v2479
    %v3321 = vunpack.c.l.bf16 %v2480
    %v3322 = vunpack.c.h.bf16 %v2480
    %v3323 = vunpack.c.l.bf16 %v2481
    %v3324 = vunpack.c.l.bf16 %v2482
    %v3325 = vunpack.c.h.bf16 %v2482
    %v3326 = vunpack.c.l.bf16 %v2483
    %v3327 = vunpack.c.h.bf16 %v2483
    %v3328 = vunpack.c.l.bf16 %v2484
    %v3329 = vunpack.c.h.bf16 %v2484
    %v3330 = vunpack.c.l.bf16 %v2485
    %v3331 = vunpack.c.l.bf16 %v2486
    %v3332 = vunpack.c.h.bf16 %v2486
    %v3333 = vunpack.c.l.bf16 %v2487
    %v3334 = vunpack.c.h.bf16 %v2487
    %v3335 = vunpack.c.l.bf16 %v2488
    %v3336 = vunpack.c.h.bf16 %v2488
    %v3337 = vunpack.c.l.bf16 %v2489
    %v3338 = vunpack.c.l.bf16 %v2490
    %v3339 = vunpack.c.h.bf16 %v2490
    %v3340 = vunpack.c.l.bf16 %v2491
    %v3341 = vunpack.c.h.bf16 %v2491
    %v3342 = vunpack.c.l.bf16 %v2492
    %v3343 = vunpack.c.h.bf16 %v2492
    %v3344 = vunpack.c.l.bf16 %v2493
    %v3345 = vunpack.c.l.bf16 %v2494
    %v3346 = vunpack.c.h.bf16 %v2494
    %v3347 = vunpack.c.l.bf16 %v2495
    %v3348 = vunpack.c.h.bf16 %v2495
    %v3349 = vunpack.c.l.bf16 %v2496
    %v3350 = vunpack.c.h.bf16 %v2496
    %v3351 = vunpack.c.l.bf16 %v2497
    %v3352 = vunpack.c.l.bf16 %v2498
    %v3353 = vunpack.c.h.bf16 %v2498
    %v3354 = vunpack.c.l.bf16 %v2499
    %v3355 = vunpack.c.h.bf16 %v2499
    %v3356 = vunpack.c.l.bf16 %v2500
    %v3357 = vunpack.c.h.bf16 %v2500
    %v3358 = vunpack.c.l.bf16 %v2501
    %v3359 = vunpack.c.l.bf16 %v2502
    %v3360 = vunpack.c.h.bf16 %v2502
    %v3361 = vunpack.c.l.bf16 %v2503
    %v3362 = vunpack.c.h.bf16 %v2503
    %v3363 = vunpack.c.l.bf16 %v2504
    %v3364 = vunpack.c.h.bf16 %v2504
    %v3365 = vunpack.c.l.bf16 %v2505
    %v3366 = vunpack.c.l.bf16 %v2506
    %v3367 = vunpack.c.h.bf16 %v2506
    %v3368 = vunpack.c.l.bf16 %v2507
    %v3369 = vunpack.c.h.bf16 %v2507
    %v3370 = vunpack.c.l.bf16 %v2508
    %v3371 = vunpack.c.h.bf16 %v2508
    %v3372 = vunpack.c.l.bf16 %v2509
    %v3373 = vunpack.c.l.bf16 %v2510
    %v3374 = vunpack.c.h.bf16 %v2510
    %v3375 = vunpack.c.l.bf16 %v2511
    %v3376 = vunpack.c.h.bf16 %v2511
    %v3377 = vunpack.c.l.bf16 %v2512
    %v3378 = vunpack.c.h.bf16 %v2512
    %v3379 = vunpack.c.l.bf16 %v2513
    %v3380 = vunpack.c.l.bf16 %v2514
    %v3381 = vunpack.c.h.bf16 %v2514
    %v3382 = vunpack.c.l.bf16 %v2515
    %v3383 = vunpack.c.h.bf16 %v2515
    %v3384 = vunpack.c.l.bf16 %v2516
    %v3385 = vunpack.c.h.bf16 %v2516
    %v3386 = vunpack.c.l.bf16 %v2517
    %v3387 = vunpack.c.l.bf16 %v2518
    %v3388 = vunpack.c.h.bf16 %v2518
    %v3389 = vunpack.c.l.bf16 %v2519
    %v3390 = vunpack.c.h.bf16 %v2519
    %v3391 = vunpack.c.l.bf16 %v2520
    %v3392 = vunpack.c.h.bf16 %v2520
    %v3393 = vunpack.c.l.bf16 %v2521
    %v3394 = vunpack.c.l.bf16 %v2522
    %v3395 = vunpack.c.h.bf16 %v2522
    %v3396 = vunpack.c.l.bf16 %v2523
    %v3397 = vunpack.c.h.bf16 %v2523
    %v3398 = vunpack.c.l.bf16 %v2524
    %v3399 = vunpack.c.h.bf16 %v2524
    %v3400 = vunpack.c.l.bf16 %v2525
    %v3401 = vunpack.c.l.bf16 %v2526
    %v3402 = vunpack.c.h.bf16 %v2526
    %v3403 = vunpack.c.l.bf16 %v2527
    %v3404 = vunpack.c.h.bf16 %v2527
    %v3405 = vunpack.c.l.bf16 %v2528
    %v3406 = vunpack.c.h.bf16 %v2528
    %v3407 = vunpack.c.l.bf16 %v2529
    %v3408 = vunpack.c.l.bf16 %v2530
    %v3409 = vunpack.c.h.bf16 %v2530
    %v3410 = vunpack.c.l.bf16 %v2531
    %v3411 = vunpack.c.h.bf16 %v2531
    %v3412 = vunpack.c.l.bf16 %v2532
    %v3413 = vunpack.c.h.bf16 %v2532
    %v3414 = vunpack.c.l.bf16 %v2533
    %v3415 = vunpack.c.l.bf16 %v2534
    %v3416 = vunpack.c.h.bf16 %v2534
    %v3417 = vunpack.c.l.bf16 %v2535
    %v3418 = vunpack.c.h.bf16 %v2535
    %v3419 = vunpack.c.l.bf16 %v2536
    %v3420 = vunpack.c.h.bf16 %v2536
    %v3421 = vunpack.c.l.bf16 %v2537
    %v3422 = vunpack.c.l.bf16 %v2538
    %v3423 = vunpack.c.h.bf16 %v2538
    %v3424 = vunpack.c.l.bf16 %v2539
    %v3425 = vunpack.c.h.bf16 %v2539
    %v3426 = vunpack.c.l.bf16 %v2540
    %v3427 = vunpack.c.h.bf16 %v2540
    %v3428 = vunpack.c.l.bf16 %v2541
    %v3429 = vunpack.c.l.bf16 %v2542
    %v3430 = vunpack.c.h.bf16 %v2542
    %v3431 = vunpack.c.l.bf16 %v2543
    %v3432 = vunpack.c.h.bf16 %v2543
    %v3433 = vunpack.c.l.bf16 %v2544
    %v3434 = vunpack.c.h.bf16 %v2544
    %v3435 = vunpack.c.l.bf16 %v2545
    %v3436 = vunpack.c.l.bf16 %v2546
    %v3437 = vunpack.c.h.bf16 %v2546
    %v3438 = vunpack.c.l.bf16 %v2547
    %v3439 = vunpack.c.h.bf16 %v2547
    %v3440 = vunpack.c.l.bf16 %v2548
    %v3441 = vunpack.c.h.bf16 %v2548
    %v3442 = vunpack.c.l.bf16 %v2549
    %v3443 = vunpack.c.l.bf16 %v2550
    %v3444 = vunpack.c.h.bf16 %v2550
    %v3445 = vunpack.c.l.bf16 %v2551
    %v3446 = vunpack.c.h.bf16 %v2551
    %v3447 = vunpack.c.l.bf16 %v2552
    %v3448 = vunpack.c.h.bf16 %v2552
    %v3449 = vunpack.c.l.bf16 %v2553
    %v3450 = vld [vmem:[#allocation14] sm:$0xff]
    %v3452 = vlaneseq
    %v3453 = vshrl.u32 %v3452, 7
    %v3454 = vsub.s32 0, %v3453
    %v3455 = vrot.slane %v3450, %v3454
    %v3456 = vlaneseq
    %v3457 = vshrl.u32 %v3456, 7
    %v3458 = vsub.s32 1, %v3457
    %v3459 = vrot.slane %v3450, %v3458
    %v3460 = vlaneseq
    %v3461 = vshrl.u32 %v3460, 7
    %v3462 = vsub.s32 2, %v3461
    %v3463 = vrot.slane %v3450, %v3462
    %v3464 = vlaneseq
    %v3465 = vshrl.u32 %v3464, 7
    %v3466 = vsub.s32 3, %v3465
    %v3467 = vrot.slane %v3450, %v3466
    %v3468 = vlaneseq
    %v3469 = vshrl.u32 %v3468, 7
    %v3470 = vsub.s32 4, %v3469
    %v3471 = vrot.slane %v3450, %v3470
    %v3472 = vlaneseq
    %v3473 = vshrl.u32 %v3472, 7
    %v3474 = vsub.s32 5, %v3473
    %v3475 = vrot.slane %v3450, %v3474
    %v3476 = vlaneseq
    %v3477 = vshrl.u32 %v3476, 7
    %v3478 = vsub.s32 6, %v3477
    %v3479 = vrot.slane %v3450, %v3478
    %3487 = vmatprep.subr.mxu0 %v2555
    %3488 = vmatpush1.msra.mxu0 %v2554
    %3489 = vmatprep.subr.mxu0 %v2562
    %3490 = vmatpush1.msra.mxu0 %v2561
    %3491 = vmatprep.subr.mxu0 %v2569
    %3492 = vmatpush1.msra.mxu0 %v2568
    %3493 = vmatprep.subr.mxu0 %v2576
    %3494 = vmatpush1.msra.mxu0 %v2575
    %3495 = vmatprep.subr.mxu0 %v2583
    %3496 = vmatpush1.msra.mxu0 %v2582
    %3497 = vmatprep.subr.mxu0 %v2590
    %3498 = vmatpush1.msra.mxu0 %v2589
    %3499 = vmatprep.subr.mxu0 %v2597
    %3500 = vmatpush1.msra.mxu0 %v2596
    %3501 = vmatprep.subr.mxu0 %v2604
    %3502 = vmatpush1.msra.mxu0 %v2603
    %3503 = vmatprep.subr.mxu0 %v2611
    %3504 = vmatpush1.msra.mxu0 %v2610
    %3505 = vmatprep.subr.mxu0 %v2618
    %3506 = vmatpush1.msra.mxu0 %v2617
    %3507 = vmatprep.subr.mxu0 %v2625
    %3508 = vmatpush1.msra.mxu0 %v2624
    %3509 = vmatprep.subr.mxu0 %v2632
    %3510 = vmatpush1.msra.mxu0 %v2631
    %3511 = vmatprep.subr.mxu0 %v2639
    %3512 = vmatpush1.msra.mxu0 %v2638
    %3513 = vmatprep.subr.mxu0 %v2646
    %3514 = vmatpush1.msra.mxu0 %v2645
    %3515 = vmatprep.subr.mxu0 %v2653
    %3516 = vmatpush1.msra.mxu0 %v2652
    %3517 = vmatprep.subr.mxu0 %v2660
    %3518 = vmatpush1.msra.mxu0 %v2659
    %3519 = vmatprep.subr.mxu0 %v2667
    %3520 = vmatpush1.msra.mxu0 %v2666
    %3521 = vmatprep.subr.mxu0 %v2674
    %3522 = vmatpush1.msra.mxu0 %v2673
    %3523 = vmatprep.subr.mxu0 %v2681
    %3524 = vmatpush1.msra.mxu0 %v2680
    %3525 = vmatprep.subr.mxu0 %v2688
    %3526 = vmatpush1.msra.mxu0 %v2687
    %3527 = vmatprep.subr.mxu0 %v2695
    %3528 = vmatpush1.msra.mxu0 %v2694
    %3529 = vmatprep.subr.mxu0 %v2702
    %3530 = vmatpush1.msra.mxu0 %v2701
    %3531 = vmatprep.subr.mxu0 %v2709
    %3532 = vmatpush1.msra.mxu0 %v2708
    %3533 = vmatprep.subr.mxu0 %v2716
    %3534 = vmatpush1.msra.mxu0 %v2715
    %3535 = vmatprep.subr.mxu0 %v2723
    %3536 = vmatpush1.msra.mxu0 %v2722
    %3537 = vmatprep.subr.mxu0 %v2730
    %3538 = vmatpush1.msra.mxu0 %v2729
    %3539 = vmatprep.subr.mxu0 %v2737
    %3540 = vmatpush1.msra.mxu0 %v2736
    %3541 = vmatprep.subr.mxu0 %v2744
    %3542 = vmatpush1.msra.mxu0 %v2743
    %3543 = vmatprep.subr.mxu0 %v2751
    %3544 = vmatpush1.msra.mxu0 %v2750
    %3545 = vmatprep.subr.mxu0 %v2758
    %3546 = vmatpush1.msra.mxu0 %v2757
    %3547 = vmatprep.subr.mxu0 %v2765
    %3548 = vmatpush1.msra.mxu0 %v2764
    %3549 = vmatprep.subr.mxu0 %v2772
    %3550 = vmatpush1.msra.mxu0 %v2771
    %3551 = vmatprep.mubr.f32.mxu0 %v2035
    %3552 = vmatmul.mubr.f32.gmra.mrb[0].mxu0 %v2034
    %v3553 = vpop.f32.mrb[0].mxu0
    %v3554 = vadd.f32 %v3455, %v3553
    %v3555 = vpop.f32.mrb[0].mxu0
    %v3556 = vadd.f32 %v3459, %v3555
    %3557 = vdwg.mxu0
    %3558 = vmatprep.subr.mxu0 %v2779
    %3559 = vmatpush1.msra.mxu0 %v2778
    %3560 = vmatprep.subr.mxu0 %v2786
    %3561 = vmatpush1.msra.mxu0 %v2785
    %3562 = vmatprep.subr.mxu0 %v2793
    %3563 = vmatpush1.msra.mxu0 %v2792
    %3564 = vmatprep.subr.mxu0 %v2800
    %3565 = vmatpush1.msra.mxu0 %v2799
    %3566 = vmatprep.subr.mxu0 %v2807
    %3567 = vmatpush1.msra.mxu0 %v2806
    %3568 = vmatprep.subr.mxu0 %v2814
    %3569 = vmatpush1.msra.mxu0 %v2813
    %3570 = vmatprep.subr.mxu0 %v2821
    %3571 = vmatpush1.msra.mxu0 %v2820
    %3572 = vmatprep.subr.mxu0 %v2828
    %3573 = vmatpush1.msra.mxu0 %v2827
    %3574 = vmatprep.subr.mxu0 %v2835
    %3575 = vmatpush1.msra.mxu0 %v2834
    %3576 = vmatprep.subr.mxu0 %v2842
    %3577 = vmatpush1.msra.mxu0 %v2841
    %3578 = vmatprep.subr.mxu0 %v2849
    %3579 = vmatpush1.msra.mxu0 %v2848
    %3580 = vmatprep.subr.mxu0 %v2856
    %3581 = vmatpush1.msra.mxu0 %v2855
    %3582 = vmatprep.subr.mxu0 %v2863
    %3583 = vmatpush1.msra.mxu0 %v2862
    %3584 = vmatprep.subr.mxu0 %v2870
    %3585 = vmatpush1.msra.mxu0 %v2869
    %3586 = vmatprep.subr.mxu0 %v2877
    %3587 = vmatpush1.msra.mxu0 %v2876
    %3588 = vmatprep.subr.mxu0 %v2884
    %3589 = vmatpush1.msra.mxu0 %v2883
    %3590 = vmatprep.subr.mxu0 %v2891
    %3591 = vmatpush1.msra.mxu0 %v2890
    %3592 = vmatprep.subr.mxu0 %v2898
    %3593 = vmatpush1.msra.mxu0 %v2897
    %3594 = vmatprep.subr.mxu0 %v2905
    %3595 = vmatpush1.msra.mxu0 %v2904
    %3596 = vmatprep.subr.mxu0 %v2912
    %3597 = vmatpush1.msra.mxu0 %v2911
    %3598 = vmatprep.subr.mxu0 %v2919
    %3599 = vmatpush1.msra.mxu0 %v2918
    %3600 = vmatprep.subr.mxu0 %v2926
    %3601 = vmatpush1.msra.mxu0 %v2925
    %3602 = vmatprep.subr.mxu0 %v2933
    %3603 = vmatpush1.msra.mxu0 %v2932
    %3604 = vmatprep.subr.mxu0 %v2940
    %3605 = vmatpush1.msra.mxu0 %v2939
    %3606 = vmatprep.subr.mxu0 %v2947
    %3607 = vmatpush1.msra.mxu0 %v2946
    %3608 = vmatprep.subr.mxu0 %v2954
    %3609 = vmatpush1.msra.mxu0 %v2953
    %3610 = vmatprep.subr.mxu0 %v2961
    %3611 = vmatpush1.msra.mxu0 %v2960
    %3612 = vmatprep.subr.mxu0 %v2968
    %3613 = vmatpush1.msra.mxu0 %v2967
    %3614 = vmatprep.subr.mxu0 %v2975
    %3615 = vmatpush1.msra.mxu0 %v2974
    %3616 = vmatprep.subr.mxu0 %v2982
    %3617 = vmatpush1.msra.mxu0 %v2981
    %3618 = vmatprep.subr.mxu0 %v2989
    %3619 = vmatpush1.msra.mxu0 %v2988
    %3620 = vmatprep.subr.mxu0 %v2996
    %3621 = vmatpush1.msra.mxu0 %v2995
    %3622 = vmatprep.mubr.f32.mxu0 %v2037
    %3623 = vmatmul.mubr.f32.gmra.mrb[0].mxu0 %v2036
    %v3624 = vpop.f32.mrb[0].mxu0
    %v3625 = vadd.f32 %v3554, %v3624
    %v3626 = vpop.f32.mrb[0].mxu0
    %v3627 = vadd.f32 %v3556, %v3626
    %3628 = vdwg.mxu0
    %3629 = vmatprep.subr.mxu0 %v3003
    %3630 = vmatpush1.msra.mxu0 %v3002
    %3631 = vmatprep.subr.mxu0 %v3010
    %3632 = vmatpush1.msra.mxu0 %v3009
    %3633 = vmatprep.subr.mxu0 %v3017
    %3634 = vmatpush1.msra.mxu0 %v3016
    %3635 = vmatprep.subr.mxu0 %v3024
    %3636 = vmatpush1.msra.mxu0 %v3023
    %3637 = vmatprep.subr.mxu0 %v3031
    %3638 = vmatpush1.msra.mxu0 %v3030
    %3639 = vmatprep.subr.mxu0 %v3038
    %3640 = vmatpush1.msra.mxu0 %v3037
    %3641 = vmatprep.subr.mxu0 %v3045
    %3642 = vmatpush1.msra.mxu0 %v3044
    %3643 = vmatprep.subr.mxu0 %v3052
    %3644 = vmatpush1.msra.mxu0 %v3051
    %3645 = vmatprep.subr.mxu0 %v3059
    %3646 = vmatpush1.msra.mxu0 %v3058
    %3647 = vmatprep.subr.mxu0 %v3066
    %3648 = vmatpush1.msra.mxu0 %v3065
    %3649 = vmatprep.subr.mxu0 %v3073
    %3650 = vmatpush1.msra.mxu0 %v3072
    %3651 = vmatprep.subr.mxu0 %v3080
    %3652 = vmatpush1.msra.mxu0 %v3079
    %3653 = vmatprep.subr.mxu0 %v3087
    %3654 = vmatpush1.msra.mxu0 %v3086
    %3655 = vmatprep.subr.mxu0 %v3094
    %3656 = vmatpush1.msra.mxu0 %v3093
    %3657 = vmatprep.subr.mxu0 %v3101
    %3658 = vmatpush1.msra.mxu0 %v3100
    %3659 = vmatprep.subr.mxu0 %v3108
    %3660 = vmatpush1.msra.mxu0 %v3107
    %3661 = vmatprep.subr.mxu0 %v3115
    %3662 = vmatpush1.msra.mxu0 %v3114
    %3663 = vmatprep.subr.mxu0 %v3122
    %3664 = vmatpush1.msra.mxu0 %v3121
    %3665 = vmatprep.subr.mxu0 %v3129
    %3666 = vmatpush1.msra.mxu0 %v3128
    %3667 = vmatprep.subr.mxu0 %v3136
    %3668 = vmatpush1.msra.mxu0 %v3135
    %3669 = vmatprep.subr.mxu0 %v3143
    %3670 = vmatpush1.msra.mxu0 %v3142
    %3671 = vmatprep.subr.mxu0 %v3150
    %3672 = vmatpush1.msra.mxu0 %v3149
    %3673 = vmatprep.subr.mxu0 %v3157
    %3674 = vmatpush1.msra.mxu0 %v3156
    %3675 = vmatprep.subr.mxu0 %v3164
    %3676 = vmatpush1.msra.mxu0 %v3163
    %3677 = vmatprep.subr.mxu0 %v3171
    %3678 = vmatpush1.msra.mxu0 %v3170
    %3679 = vmatprep.subr.mxu0 %v3178
    %3680 = vmatpush1.msra.mxu0 %v3177
    %3681 = vmatprep.subr.mxu0 %v3185
    %3682 = vmatpush1.msra.mxu0 %v3184
    %3683 = vmatprep.subr.mxu0 %v3192
    %3684 = vmatpush1.msra.mxu0 %v3191
    %3685 = vmatprep.subr.mxu0 %v3199
    %3686 = vmatpush1.msra.mxu0 %v3198
    %3687 = vmatprep.subr.mxu0 %v3206
    %3688 = vmatpush1.msra.mxu0 %v3205
    %3689 = vmatprep.subr.mxu0 %v3213
    %3690 = vmatpush1.msra.mxu0 %v3212
    %3691 = vmatprep.subr.mxu0 %v3220
    %3692 = vmatpush1.msra.mxu0 %v3219
    %3693 = vmatprep.mubr.f32.mxu0 %v2039
    %3694 = vmatmul.mubr.f32.gmra.mrb[0].mxu0 %v2038
    %v3695 = vpop.f32.mrb[0].mxu0
    %v3696 = vadd.f32 %v3625, %v3695
    %v3697 = vpop.f32.mrb[0].mxu0
    %v3698 = vadd.f32 %v3627, %v3697
    %3699 = vdwg.mxu0
    %3700 = vmatprep.subr.mxu0 %v3227
    %3701 = vmatpush1.msra.mxu0 %v3226
    %3702 = vmatprep.subr.mxu0 %v3234
    %3703 = vmatpush1.msra.mxu0 %v3233
    %3704 = vmatprep.subr.mxu0 %v3241
    %3705 = vmatpush1.msra.mxu0 %v3240
    %3706 = vmatprep.subr.mxu0 %v3248
    %3707 = vmatpush1.msra.mxu0 %v3247
    %3708 = vmatprep.subr.mxu0 %v3255
    %3709 = vmatpush1.msra.mxu0 %v3254
    %3710 = vmatprep.subr.mxu0 %v3262
    %3711 = vmatpush1.msra.mxu0 %v3261
    %3712 = vmatprep.subr.mxu0 %v3269
    %3713 = vmatpush1.msra.mxu0 %v3268
    %3714 = vmatprep.subr.mxu0 %v3276
    %3715 = vmatpush1.msra.mxu0 %v3275
    %3716 = vmatprep.subr.mxu0 %v3283
    %3717 = vmatpush1.msra.mxu0 %v3282
    %3718 = vmatprep.subr.mxu0 %v3290
    %3719 = vmatpush1.msra.mxu0 %v3289
    %3720 = vmatprep.subr.mxu0 %v3297
    %3721 = vmatpush1.msra.mxu0 %v3296
    %3722 = vmatprep.subr.mxu0 %v3304
    %3723 = vmatpush1.msra.mxu0 %v3303
    %3724 = vmatprep.subr.mxu0 %v3311
    %3725 = vmatpush1.msra.mxu0 %v3310
    %3726 = vmatprep.subr.mxu0 %v3318
    %3727 = vmatpush1.msra.mxu0 %v3317
    %3728 = vmatprep.subr.mxu0 %v3325
    %3729 = vmatpush1.msra.mxu0 %v3324
    %3730 = vmatprep.subr.mxu0 %v3332
    %3731 = vmatpush1.msra.mxu0 %v3331
    %3732 = vmatprep.subr.mxu0 %v3339
    %3733 = vmatpush1.msra.mxu0 %v3338
    %3734 = vmatprep.subr.mxu0 %v3346
    %3735 = vmatpush1.msra.mxu0 %v3345
    %3736 = vmatprep.subr.mxu0 %v3353
    %3737 = vmatpush1.msra.mxu0 %v3352
    %3738 = vmatprep.subr.mxu0 %v3360
    %3739 = vmatpush1.msra.mxu0 %v3359
    %3740 = vmatprep.subr.mxu0 %v3367
    %3741 = vmatpush1.msra.mxu0 %v3366
    %3742 = vmatprep.subr.mxu0 %v3374
    %3743 = vmatpush1.msra.mxu0 %v3373
    %3744 = vmatprep.subr.mxu0 %v3381
    %3745 = vmatpush1.msra.mxu0 %v3380
    %3746 = vmatprep.subr.mxu0 %v3388
    %3747 = vmatpush1.msra.mxu0 %v3387
    %3748 = vmatprep.subr.mxu0 %v3395
    %3749 = vmatpush1.msra.mxu0 %v3394
    %3750 = vmatprep.subr.mxu0 %v3402
    %3751 = vmatpush1.msra.mxu0 %v3401
    %3752 = vmatprep.subr.mxu0 %v3409
    %3753 = vmatpush1.msra.mxu0 %v3408
    %3754 = vmatprep.subr.mxu0 %v3416
    %3755 = vmatpush1.msra.mxu0 %v3415
    %3756 = vmatprep.subr.mxu0 %v3423
    %3757 = vmatpush1.msra.mxu0 %v3422
    %3758 = vmatprep.subr.mxu0 %v3430
    %3759 = vmatpush1.msra.mxu0 %v3429
    %3760 = vmatprep.subr.mxu0 %v3437
    %3761 = vmatpush1.msra.mxu0 %v3436
    %3762 = vmatprep.subr.mxu0 %v3444
    %3763 = vmatpush1.msra.mxu0 %v3443
    %3764 = vmatprep.mubr.f32.mxu0 %v2041
    %3765 = vmatmul.mubr.f32.gmra.mrb[0].mxu0 %v2040
    %v3766 = vpop.f32.mrb[0].mxu0
    %v3767 = vadd.f32 %v3696, %v3766
    %v3768 = vpop.f32.mrb[0].mxu0
    %v3769 = vadd.f32 %v3698, %v3768
    %3770 = vdwg.mxu0
    %3771 = vmatprep.subr.mxu0 %v2557
    %3772 = vmatpush1.msra.mxu0 %v2556
    %3773 = vmatprep.subr.mxu0 %v2564
    %3774 = vmatpush1.msra.mxu0 %v2563
    %3775 = vmatprep.subr.mxu0 %v2571
    %3776 = vmatpush1.msra.mxu0 %v2570
    %3777 = vmatprep.subr.mxu0 %v2578
    %3778 = vmatpush1.msra.mxu0 %v2577
    %3779 = vmatprep.subr.mxu0 %v2585
    %3780 = vmatpush1.msra.mxu0 %v2584
    %3781 = vmatprep.subr.mxu0 %v2592
    %3782 = vmatpush1.msra.mxu0 %v2591
    %3783 = vmatprep.subr.mxu0 %v2599
    %3784 = vmatpush1.msra.mxu0 %v2598
    %3785 = vmatprep.subr.mxu0 %v2606
    %3786 = vmatpush1.msra.mxu0 %v2605
    %3787 = vmatprep.subr.mxu0 %v2613
    %3788 = vmatpush1.msra.mxu0 %v2612
    %3789 = vmatprep.subr.mxu0 %v2620
    %3790 = vmatpush1.msra.mxu0 %v2619
    %3791 = vmatprep.subr.mxu0 %v2627
    %3792 = vmatpush1.msra.mxu0 %v2626
    %3793 = vmatprep.subr.mxu0 %v2634
    %3794 = vmatpush1.msra.mxu0 %v2633
    %3795 = vmatprep.subr.mxu0 %v2641
    %3796 = vmatpush1.msra.mxu0 %v2640
    %3797 = vmatprep.subr.mxu0 %v2648
    %3798 = vmatpush1.msra.mxu0 %v2647
    %3799 = vmatprep.subr.mxu0 %v2655
    %3800 = vmatpush1.msra.mxu0 %v2654
    %3801 = vmatprep.subr.mxu0 %v2662
    %3802 = vmatpush1.msra.mxu0 %v2661
    %3803 = vmatprep.subr.mxu0 %v2669
    %3804 = vmatpush1.msra.mxu0 %v2668
    %3805 = vmatprep.subr.mxu0 %v2676
    %3806 = vmatpush1.msra.mxu0 %v2675
    %3807 = vmatprep.subr.mxu0 %v2683
    %3808 = vmatpush1.msra.mxu0 %v2682
    %3809 = vmatprep.subr.mxu0 %v2690
    %3810 = vmatpush1.msra.mxu0 %v2689
    %3811 = vmatprep.subr.mxu0 %v2697
    %3812 = vmatpush1.msra.mxu0 %v2696
    %3813 = vmatprep.subr.mxu0 %v2704
    %3814 = vmatpush1.msra.mxu0 %v2703
    %3815 = vmatprep.subr.mxu0 %v2711
    %3816 = vmatpush1.msra.mxu0 %v2710
    %3817 = vmatprep.subr.mxu0 %v2718
    %3818 = vmatpush1.msra.mxu0 %v2717
    %3819 = vmatprep.subr.mxu0 %v2725
    %3820 = vmatpush1.msra.mxu0 %v2724
    %3821 = vmatprep.subr.mxu0 %v2732
    %3822 = vmatpush1.msra.mxu0 %v2731
    %3823 = vmatprep.subr.mxu0 %v2739
    %3824 = vmatpush1.msra.mxu0 %v2738
    %3825 = vmatprep.subr.mxu0 %v2746
    %3826 = vmatpush1.msra.mxu0 %v2745
    %3827 = vmatprep.subr.mxu0 %v2753
    %3828 = vmatpush1.msra.mxu0 %v2752
    %3829 = vmatprep.subr.mxu0 %v2760
    %3830 = vmatpush1.msra.mxu0 %v2759
    %3831 = vmatprep.subr.mxu0 %v2767
    %3832 = vmatpush1.msra.mxu0 %v2766
    %3833 = vmatprep.subr.mxu0 %v2774
    %3834 = vmatpush1.msra.mxu0 %v2773
    %3835 = vmatprep.mubr.f32.mxu0 %v2035
    %3836 = vmatmul.mubr.f32.gmra.mrb[0].mxu0 %v2034
    %v3837 = vpop.f32.mrb[0].mxu0
    %v3838 = vadd.f32 %v3463, %v3837
    %v3839 = vpop.f32.mrb[0].mxu0
    %v3840 = vadd.f32 %v3467, %v3839
    %3841 = vdwg.mxu0
    %3842 = vmatprep.subr.mxu0 %v2781
    %3843 = vmatpush1.msra.mxu0 %v2780
    %3844 = vmatprep.subr.mxu0 %v2788
    %3845 = vmatpush1.msra.mxu0 %v2787
    %3846 = vmatprep.subr.mxu0 %v2795
    %3847 = vmatpush1.msra.mxu0 %v2794
    %3848 = vmatprep.subr.mxu0 %v2802
    %3849 = vmatpush1.msra.mxu0 %v2801
    %3850 = vmatprep.subr.mxu0 %v2809
    %3851 = vmatpush1.msra.mxu0 %v2808
    %3852 = vmatprep.subr.mxu0 %v2816
    %3853 = vmatpush1.msra.mxu0 %v2815
    %3854 = vmatprep.subr.mxu0 %v2823
    %3855 = vmatpush1.msra.mxu0 %v2822
    %3856 = vmatprep.subr.mxu0 %v2830
    %3857 = vmatpush1.msra.mxu0 %v2829
    %3858 = vmatprep.subr.mxu0 %v2837
    %3859 = vmatpush1.msra.mxu0 %v2836
    %3860 = vmatprep.subr.mxu0 %v2844
    %3861 = vmatpush1.msra.mxu0 %v2843
    %3862 = vmatprep.subr.mxu0 %v2851
    %3863 = vmatpush1.msra.mxu0 %v2850
    %3864 = vmatprep.subr.mxu0 %v2858
    %3865 = vmatpush1.msra.mxu0 %v2857
    %3866 = vmatprep.subr.mxu0 %v2865
    %3867 = vmatpush1.msra.mxu0 %v2864
    %3868 = vmatprep.subr.mxu0 %v2872
    %3869 = vmatpush1.msra.mxu0 %v2871
    %3870 = vmatprep.subr.mxu0 %v2879
    %3871 = vmatpush1.msra.mxu0 %v2878
    %3872 = vmatprep.subr.mxu0 %v2886
    %3873 = vmatpush1.msra.mxu0 %v2885
    %3874 = vmatprep.subr.mxu0 %v2893
    %3875 = vmatpush1.msra.mxu0 %v2892
    %3876 = vmatprep.subr.mxu0 %v2900
    %3877 = vmatpush1.msra.mxu0 %v2899
    %3878 = vmatprep.subr.mxu0 %v2907
    %3879 = vmatpush1.msra.mxu0 %v2906
    %3880 = vmatprep.subr.mxu0 %v2914
    %3881 = vmatpush1.msra.mxu0 %v2913
    %3882 = vmatprep.subr.mxu0 %v2921
    %3883 = vmatpush1.msra.mxu0 %v2920
    %3884 = vmatprep.subr.mxu0 %v2928
    %3885 = vmatpush1.msra.mxu0 %v2927
    %3886 = vmatprep.subr.mxu0 %v2935
    %3887 = vmatpush1.msra.mxu0 %v2934
    %3888 = vmatprep.subr.mxu0 %v2942
    %3889 = vmatpush1.msra.mxu0 %v2941
    %3890 = vmatprep.subr.mxu0 %v2949
    %3891 = vmatpush1.msra.mxu0 %v2948
    %3892 = vmatprep.subr.mxu0 %v2956
    %3893 = vmatpush1.msra.mxu0 %v2955
    %3894 = vmatprep.subr.mxu0 %v2963
    %3895 = vmatpush1.msra.mxu0 %v2962
    %3896 = vmatprep.subr.mxu0 %v2970
    %3897 = vmatpush1.msra.mxu0 %v2969
    %3898 = vmatprep.subr.mxu0 %v2977
    %3899 = vmatpush1.msra.mxu0 %v2976
    %3900 = vmatprep.subr.mxu0 %v2984
    %3901 = vmatpush1.msra.mxu0 %v2983
    %3902 = vmatprep.subr.mxu0 %v2991
    %3903 = vmatpush1.msra.mxu0 %v2990
    %3904 = vmatprep.subr.mxu0 %v2998
    %3905 = vmatpush1.msra.mxu0 %v2997
    %3906 = vmatprep.mubr.f32.mxu0 %v2037
    %3907 = vmatmul.mubr.f32.gmra.mrb[0].mxu0 %v2036
    %v3908 = vpop.f32.mrb[0].mxu0
    %v3909 = vadd.f32 %v3838, %v3908
    %v3910 = vpop.f32.mrb[0].mxu0
    %v3911 = vadd.f32 %v3840, %v3910
    %3912 = vdwg.mxu0
    %3913 = vmatprep.subr.mxu0 %v3005
    %3914 = vmatpush1.msra.mxu0 %v3004
    %3915 = vmatprep.subr.mxu0 %v3012
    %3916 = vmatpush1.msra.mxu0 %v3011
    %3917 = vmatprep.subr.mxu0 %v3019
    %3918 = vmatpush1.msra.mxu0 %v3018
    %3919 = vmatprep.subr.mxu0 %v3026
    %3920 = vmatpush1.msra.mxu0 %v3025
    %3921 = vmatprep.subr.mxu0 %v3033
    %3922 = vmatpush1.msra.mxu0 %v3032
    %3923 = vmatprep.subr.mxu0 %v3040
    %3924 = vmatpush1.msra.mxu0 %v3039
    %3925 = vmatprep.subr.mxu0 %v3047
    %3926 = vmatpush1.msra.mxu0 %v3046
    %3927 = vmatprep.subr.mxu0 %v3054
    %3928 = vmatpush1.msra.mxu0 %v3053
    %3929 = vmatprep.subr.mxu0 %v3061
    %3930 = vmatpush1.msra.mxu0 %v3060
    %3931 = vmatprep.subr.mxu0 %v3068
    %3932 = vmatpush1.msra.mxu0 %v3067
    %3933 = vmatprep.subr.mxu0 %v3075
    %3934 = vmatpush1.msra.mxu0 %v3074
    %3935 = vmatprep.subr.mxu0 %v3082
    %3936 = vmatpush1.msra.mxu0 %v3081
    %3937 = vmatprep.subr.mxu0 %v3089
    %3938 = vmatpush1.msra.mxu0 %v3088
    %3939 = vmatprep.subr.mxu0 %v3096
    %3940 = vmatpush1.msra.mxu0 %v3095
    %3941 = vmatprep.subr.mxu0 %v3103
    %3942 = vmatpush1.msra.mxu0 %v3102
    %3943 = vmatprep.subr.mxu0 %v3110
    %3944 = vmatpush1.msra.mxu0 %v3109
    %3945 = vmatprep.subr.mxu0 %v3117
    %3946 = vmatpush1.msra.mxu0 %v3116
    %3947 = vmatprep.subr.mxu0 %v3124
    %3948 = vmatpush1.msra.mxu0 %v3123
    %3949 = vmatprep.subr.mxu0 %v3131
    %3950 = vmatpush1.msra.mxu0 %v3130
    %3951 = vmatprep.subr.mxu0 %v3138
    %3952 = vmatpush1.msra.mxu0 %v3137
    %3953 = vmatprep.subr.mxu0 %v3145
    %3954 = vmatpush1.msra.mxu0 %v3144
    %3955 = vmatprep.subr.mxu0 %v3152
    %3956 = vmatpush1.msra.mxu0 %v3151
    %3957 = vmatprep.subr.mxu0 %v3159
    %3958 = vmatpush1.msra.mxu0 %v3158
    %3959 = vmatprep.subr.mxu0 %v3166
    %3960 = vmatpush1.msra.mxu0 %v3165
    %3961 = vmatprep.subr.mxu0 %v3173
    %3962 = vmatpush1.msra.mxu0 %v3172
    %3963 = vmatprep.subr.mxu0 %v3180
    %3964 = vmatpush1.msra.mxu0 %v3179
    %3965 = vmatprep.subr.mxu0 %v3187
    %3966 = vmatpush1.msra.mxu0 %v3186
    %3967 = vmatprep.subr.mxu0 %v3194
    %3968 = vmatpush1.msra.mxu0 %v3193
    %3969 = vmatprep.subr.mxu0 %v3201
    %3970 = vmatpush1.msra.mxu0 %v3200
    %3971 = vmatprep.subr.mxu0 %v3208
    %3972 = vmatpush1.msra.mxu0 %v3207
    %3973 = vmatprep.subr.mxu0 %v3215
    %3974 = vmatpush1.msra.mxu0 %v3214
    %3975 = vmatprep.subr.mxu0 %v3222
    %3976 = vmatpush1.msra.mxu0 %v3221
    %3977 = vmatprep.mubr.f32.mxu0 %v2039
    %3978 = vmatmul.mubr.f32.gmra.mrb[0].mxu0 %v2038
    %v3979 = vpop.f32.mrb[0].mxu0
    %v3980 = vadd.f32 %v3909, %v3979
    %v3981 = vpop.f32.mrb[0].mxu0
    %v3982 = vadd.f32 %v3911, %v3981
    %3983 = vdwg.mxu0
    %3984 = vmatprep.subr.mxu0 %v3229
    %3985 = vmatpush1.msra.mxu0 %v3228
    %3986 = vmatprep.subr.mxu0 %v3236
    %3987 = vmatpush1.msra.mxu0 %v3235
    %3988 = vmatprep.subr.mxu0 %v3243
    %3989 = vmatpush1.msra.mxu0 %v3242
    %3990 = vmatprep.subr.mxu0 %v3250
    %3991 = vmatpush1.msra.mxu0 %v3249
    %3992 = vmatprep.subr.mxu0 %v3257
    %3993 = vmatpush1.msra.mxu0 %v3256
    %3994 = vmatprep.subr.mxu0 %v3264
    %3995 = vmatpush1.msra.mxu0 %v3263
    %3996 = vmatprep.subr.mxu0 %v3271
    %3997 = vmatpush1.msra.mxu0 %v3270
    %3998 = vmatprep.subr.mxu0 %v3278
    %3999 = vmatpush1.msra.mxu0 %v3277
    %4000 = vmatprep.subr.mxu0 %v3285
    %4001 = vmatpush1.msra.mxu0 %v3284
    %4002 = vmatprep.subr.mxu0 %v3292
    %4003 = vmatpush1.msra.mxu0 %v3291
    %4004 = vmatprep.subr.mxu0 %v3299
    %4005 = vmatpush1.msra.mxu0 %v3298
    %4006 = vmatprep.subr.mxu0 %v3306
    %4007 = vmatpush1.msra.mxu0 %v3305
    %4008 = vmatprep.subr.mxu0 %v3313
    %4009 = vmatpush1.msra.mxu0 %v3312
    %4010 = vmatprep.subr.mxu0 %v3320
    %4011 = vmatpush1.msra.mxu0 %v3319
    %4012 = vmatprep.subr.mxu0 %v3327
    %4013 = vmatpush1.msra.mxu0 %v3326
    %4014 = vmatprep.subr.mxu0 %v3334
    %4015 = vmatpush1.msra.mxu0 %v3333
    %4016 = vmatprep.subr.mxu0 %v3341
    %4017 = vmatpush1.msra.mxu0 %v3340
    %4018 = vmatprep.subr.mxu0 %v3348
    %4019 = vmatpush1.msra.mxu0 %v3347
    %4020 = vmatprep.subr.mxu0 %v3355
    %4021 = vmatpush1.msra.mxu0 %v3354
    %4022 = vmatprep.subr.mxu0 %v3362
    %4023 = vmatpush1.msra.mxu0 %v3361
    %4024 = vmatprep.subr.mxu0 %v3369
    %4025 = vmatpush1.msra.mxu0 %v3368
    %4026 = vmatprep.subr.mxu0 %v3376
    %4027 = vmatpush1.msra.mxu0 %v3375
    %4028 = vmatprep.subr.mxu0 %v3383
    %4029 = vmatpush1.msra.mxu0 %v3382
    %4030 = vmatprep.subr.mxu0 %v3390
    %4031 = vmatpush1.msra.mxu0 %v3389
    %4032 = vmatprep.subr.mxu0 %v3397
    %4033 = vmatpush1.msra.mxu0 %v3396
    %4034 = vmatprep.subr.mxu0 %v3404
    %4035 = vmatpush1.msra.mxu0 %v3403
    %4036 = vmatprep.subr.mxu0 %v3411
    %4037 = vmatpush1.msra.mxu0 %v3410
    %4038 = vmatprep.subr.mxu0 %v3418
    %4039 = vmatpush1.msra.mxu0 %v3417
    %4040 = vmatprep.subr.mxu0 %v3425
    %4041 = vmatpush1.msra.mxu0 %v3424
    %4042 = vmatprep.subr.mxu0 %v3432
    %4043 = vmatpush1.msra.mxu0 %v3431
    %4044 = vmatprep.subr.mxu0 %v3439
    %4045 = vmatpush1.msra.mxu0 %v3438
    %4046 = vmatprep.subr.mxu0 %v3446
    %4047 = vmatpush1.msra.mxu0 %v3445
    %4048 = vmatprep.mubr.f32.mxu0 %v2041
    %4049 = vmatmul.mubr.f32.gmra.mrb[0].mxu0 %v2040
    %v4050 = vpop.f32.mrb[0].mxu0
    %v4051 = vadd.f32 %v3980, %v4050
    %v4052 = vpop.f32.mrb[0].mxu0
    %v4053 = vadd.f32 %v3982, %v4052
    %4054 = vdwg.mxu0
    %4055 = vmatprep.subr.mxu0 %v2559
    %4056 = vmatpush1.msra.mxu0 %v2558
    %4057 = vmatprep.subr.mxu0 %v2566
    %4058 = vmatpush1.msra.mxu0 %v2565
    %4059 = vmatprep.subr.mxu0 %v2573
    %4060 = vmatpush1.msra.mxu0 %v2572
    %4061 = vmatprep.subr.mxu0 %v2580
    %4062 = vmatpush1.msra.mxu0 %v2579
    %4063 = vmatprep.subr.mxu0 %v2587
    %4064 = vmatpush1.msra.mxu0 %v2586
    %4065 = vmatprep.subr.mxu0 %v2594
    %4066 = vmatpush1.msra.mxu0 %v2593
    %4067 = vmatprep.subr.mxu0 %v2601
    %4068 = vmatpush1.msra.mxu0 %v2600
    %4069 = vmatprep.subr.mxu0 %v2608
    %4070 = vmatpush1.msra.mxu0 %v2607
    %4071 = vmatprep.subr.mxu0 %v2615
    %4072 = vmatpush1.msra.mxu0 %v2614
    %4073 = vmatprep.subr.mxu0 %v2622
    %4074 = vmatpush1.msra.mxu0 %v2621
    %4075 = vmatprep.subr.mxu0 %v2629
    %4076 = vmatpush1.msra.mxu0 %v2628
    %4077 = vmatprep.subr.mxu0 %v2636
    %4078 = vmatpush1.msra.mxu0 %v2635
    %4079 = vmatprep.subr.mxu0 %v2643
    %4080 = vmatpush1.msra.mxu0 %v2642
    %4081 = vmatprep.subr.mxu0 %v2650
    %4082 = vmatpush1.msra.mxu0 %v2649
    %4083 = vmatprep.subr.mxu0 %v2657
    %4084 = vmatpush1.msra.mxu0 %v2656
    %4085 = vmatprep.subr.mxu0 %v2664
    %4086 = vmatpush1.msra.mxu0 %v2663
    %4087 = vmatprep.subr.mxu0 %v2671
    %4088 = vmatpush1.msra.mxu0 %v2670
    %4089 = vmatprep.subr.mxu0 %v2678
    %4090 = vmatpush1.msra.mxu0 %v2677
    %4091 = vmatprep.subr.mxu0 %v2685
    %4092 = vmatpush1.msra.mxu0 %v2684
    %4093 = vmatprep.subr.mxu0 %v2692
    %4094 = vmatpush1.msra.mxu0 %v2691
    %4095 = vmatprep.subr.mxu0 %v2699
    %4096 = vmatpush1.msra.mxu0 %v2698
    %4097 = vmatprep.subr.mxu0 %v2706
    %4098 = vmatpush1.msra.mxu0 %v2705
    %4099 = vmatprep.subr.mxu0 %v2713
    %4100 = vmatpush1.msra.mxu0 %v2712
    %4101 = vmatprep.subr.mxu0 %v2720
    %4102 = vmatpush1.msra.mxu0 %v2719
    %4103 = vmatprep.subr.mxu0 %v2727
    %4104 = vmatpush1.msra.mxu0 %v2726
    %4105 = vmatprep.subr.mxu0 %v2734
    %4106 = vmatpush1.msra.mxu0 %v2733
    %4107 = vmatprep.subr.mxu0 %v2741
    %4108 = vmatpush1.msra.mxu0 %v2740
    %4109 = vmatprep.subr.mxu0 %v2748
    %4110 = vmatpush1.msra.mxu0 %v2747
    %4111 = vmatprep.subr.mxu0 %v2755
    %4112 = vmatpush1.msra.mxu0 %v2754
    %4113 = vmatprep.subr.mxu0 %v2762
    %4114 = vmatpush1.msra.mxu0 %v2761
    %4115 = vmatprep.subr.mxu0 %v2769
    %4116 = vmatpush1.msra.mxu0 %v2768
    %4117 = vmatprep.subr.mxu0 %v2776
    %4118 = vmatpush1.msra.mxu0 %v2775
    %4119 = vmatprep.mubr.f32.mxu0 %v2035
    %4120 = vmatmul.mubr.f32.gmra.mrb[0].mxu0 %v2034
    %v4121 = vpop.f32.mrb[0].mxu0
    %v4122 = vadd.f32 %v3471, %v4121
    %v4123 = vpop.f32.mrb[0].mxu0
    %v4124 = vadd.f32 %v3475, %v4123
    %4125 = vdwg.mxu0
    %4126 = vmatprep.subr.mxu0 %v2783
    %4127 = vmatpush1.msra.mxu0 %v2782
    %4128 = vmatprep.subr.mxu0 %v2790
    %4129 = vmatpush1.msra.mxu0 %v2789
    %4130 = vmatprep.subr.mxu0 %v2797
    %4131 = vmatpush1.msra.mxu0 %v2796
    %4132 = vmatprep.subr.mxu0 %v2804
    %4133 = vmatpush1.msra.mxu0 %v2803
    %4134 = vmatprep.subr.mxu0 %v2811
    %4135 = vmatpush1.msra.mxu0 %v2810
    %4136 = vmatprep.subr.mxu0 %v2818
    %4137 = vmatpush1.msra.mxu0 %v2817
    %4138 = vmatprep.subr.mxu0 %v2825
    %4139 = vmatpush1.msra.mxu0 %v2824
    %4140 = vmatprep.subr.mxu0 %v2832
    %4141 = vmatpush1.msra.mxu0 %v2831
    %4142 = vmatprep.subr.mxu0 %v2839
    %4143 = vmatpush1.msra.mxu0 %v2838
    %4144 = vmatprep.subr.mxu0 %v2846
    %4145 = vmatpush1.msra.mxu0 %v2845
    %4146 = vmatprep.subr.mxu0 %v2853
    %4147 = vmatpush1.msra.mxu0 %v2852
    %4148 = vmatprep.subr.mxu0 %v2860
    %4149 = vmatpush1.msra.mxu0 %v2859
    %4150 = vmatprep.subr.mxu0 %v2867
    %4151 = vmatpush1.msra.mxu0 %v2866
    %4152 = vmatprep.subr.mxu0 %v2874
    %4153 = vmatpush1.msra.mxu0 %v2873
    %4154 = vmatprep.subr.mxu0 %v2881
    %4155 = vmatpush1.msra.mxu0 %v2880
    %4156 = vmatprep.subr.mxu0 %v2888
    %4157 = vmatpush1.msra.mxu0 %v2887
    %4158 = vmatprep.subr.mxu0 %v2895
    %4159 = vmatpush1.msra.mxu0 %v2894
    %4160 = vmatprep.subr.mxu0 %v2902
    %4161 = vmatpush1.msra.mxu0 %v2901
    %4162 = vmatprep.subr.mxu0 %v2909
    %4163 = vmatpush1.msra.mxu0 %v2908
    %4164 = vmatprep.subr.mxu0 %v2916
    %4165 = vmatpush1.msra.mxu0 %v2915
    %4166 = vmatprep.subr.mxu0 %v2923
    %4167 = vmatpush1.msra.mxu0 %v2922
    %4168 = vmatprep.subr.mxu0 %v2930
    %4169 = vmatpush1.msra.mxu0 %v2929
    %4170 = vmatprep.subr.mxu0 %v2937
    %4171 = vmatpush1.msra.mxu0 %v2936
    %4172 = vmatprep.subr.mxu0 %v2944
    %4173 = vmatpush1.msra.mxu0 %v2943
    %4174 = vmatprep.subr.mxu0 %v2951
    %4175 = vmatpush1.msra.mxu0 %v2950
    %4176 = vmatprep.subr.mxu0 %v2958
    %4177 = vmatpush1.msra.mxu0 %v2957
    %4178 = vmatprep.subr.mxu0 %v2965
    %4179 = vmatpush1.msra.mxu0 %v2964
    %4180 = vmatprep.subr.mxu0 %v2972
    %4181 = vmatpush1.msra.mxu0 %v2971
    %4182 = vmatprep.subr.mxu0 %v2979
    %4183 = vmatpush1.msra.mxu0 %v2978
    %4184 = vmatprep.subr.mxu0 %v2986
    %4185 = vmatpush1.msra.mxu0 %v2985
    %4186 = vmatprep.subr.mxu0 %v2993
    %4187 = vmatpush1.msra.mxu0 %v2992
    %4188 = vmatprep.subr.mxu0 %v3000
    %4189 = vmatpush1.msra.mxu0 %v2999
    %4190 = vmatprep.mubr.f32.mxu0 %v2037
    %4191 = vmatmul.mubr.f32.gmra.mrb[0].mxu0 %v2036
    %v4192 = vpop.f32.mrb[0].mxu0
    %v4193 = vadd.f32 %v4122, %v4192
    %v4194 = vpop.f32.mrb[0].mxu0
    %v4195 = vadd.f32 %v4124, %v4194
    %4196 = vdwg.mxu0
    %4197 = vmatprep.subr.mxu0 %v3007
    %4198 = vmatpush1.msra.mxu0 %v3006
    %4199 = vmatprep.subr.mxu0 %v3014
    %4200 = vmatpush1.msra.mxu0 %v3013
    %4201 = vmatprep.subr.mxu0 %v3021
    %4202 = vmatpush1.msra.mxu0 %v3020
    %4203 = vmatprep.subr.mxu0 %v3028
    %4204 = vmatpush1.msra.mxu0 %v3027
    %4205 = vmatprep.subr.mxu0 %v3035
    %4206 = vmatpush1.msra.mxu0 %v3034
    %4207 = vmatprep.subr.mxu0 %v3042
    %4208 = vmatpush1.msra.mxu0 %v3041
    %4209 = vmatprep.subr.mxu0 %v3049
    %4210 = vmatpush1.msra.mxu0 %v3048
    %4211 = vmatprep.subr.mxu0 %v3056
    %4212 = vmatpush1.msra.mxu0 %v3055
    %4213 = vmatprep.subr.mxu0 %v3063
    %4214 = vmatpush1.msra.mxu0 %v3062
    %4215 = vmatprep.subr.mxu0 %v3070
    %4216 = vmatpush1.msra.mxu0 %v3069
    %4217 = vmatprep.subr.mxu0 %v3077
    %4218 = vmatpush1.msra.mxu0 %v3076
    %4219 = vmatprep.subr.mxu0 %v3084
    %4220 = vmatpush1.msra.mxu0 %v3083
    %4221 = vmatprep.subr.mxu0 %v3091
    %4222 = vmatpush1.msra.mxu0 %v3090
    %4223 = vmatprep.subr.mxu0 %v3098
    %4224 = vmatpush1.msra.mxu0 %v3097
    %4225 = vmatprep.subr.mxu0 %v3105
    %4226 = vmatpush1.msra.mxu0 %v3104
    %4227 = vmatprep.subr.mxu0 %v3112
    %4228 = vmatpush1.msra.mxu0 %v3111
    %4229 = vmatprep.subr.mxu0 %v3119
    %4230 = vmatpush1.msra.mxu0 %v3118
    %4231 = vmatprep.subr.mxu0 %v3126
    %4232 = vmatpush1.msra.mxu0 %v3125
    %4233 = vmatprep.subr.mxu0 %v3133
    %4234 = vmatpush1.msra.mxu0 %v3132
    %4235 = vmatprep.subr.mxu0 %v3140
    %4236 = vmatpush1.msra.mxu0 %v3139
    %4237 = vmatprep.subr.mxu0 %v3147
    %4238 = vmatpush1.msra.mxu0 %v3146
    %4239 = vmatprep.subr.mxu0 %v3154
    %4240 = vmatpush1.msra.mxu0 %v3153
    %4241 = vmatprep.subr.mxu0 %v3161
    %4242 = vmatpush1.msra.mxu0 %v3160
    %4243 = vmatprep.subr.mxu0 %v3168
    %4244 = vmatpush1.msra.mxu0 %v3167
    %4245 = vmatprep.subr.mxu0 %v3175
    %4246 = vmatpush1.msra.mxu0 %v3174
    %4247 = vmatprep.subr.mxu0 %v3182
    %4248 = vmatpush1.msra.mxu0 %v3181
    %4249 = vmatprep.subr.mxu0 %v3189
    %4250 = vmatpush1.msra.mxu0 %v3188
    %4251 = vmatprep.subr.mxu0 %v3196
    %4252 = vmatpush1.msra.mxu0 %v3195
    %4253 = vmatprep.subr.mxu0 %v3203
    %4254 = vmatpush1.msra.mxu0 %v3202
    %4255 = vmatprep.subr.mxu0 %v3210
    %4256 = vmatpush1.msra.mxu0 %v3209
    %4257 = vmatprep.subr.mxu0 %v3217
    %4258 = vmatpush1.msra.mxu0 %v3216
    %4259 = vmatprep.subr.mxu0 %v3224
    %4260 = vmatpush1.msra.mxu0 %v3223
    %4261 = vmatprep.mubr.f32.mxu0 %v2039
    %4262 = vmatmul.mubr.f32.gmra.mrb[0].mxu0 %v2038
    %v4263 = vpop.f32.mrb[0].mxu0
    %v4264 = vadd.f32 %v4193, %v4263
    %v4265 = vpop.f32.mrb[0].mxu0
    %v4266 = vadd.f32 %v4195, %v4265
    %4267 = vdwg.mxu0
    %4268 = vmatprep.subr.mxu0 %v3231
    %4269 = vmatpush1.msra.mxu0 %v3230
    %4270 = vmatprep.subr.mxu0 %v3238
    %4271 = vmatpush1.msra.mxu0 %v3237
    %4272 = vmatprep.subr.mxu0 %v3245
    %4273 = vmatpush1.msra.mxu0 %v3244
    %4274 = vmatprep.subr.mxu0 %v3252
    %4275 = vmatpush1.msra.mxu0 %v3251
    %4276 = vmatprep.subr.mxu0 %v3259
    %4277 = vmatpush1.msra.mxu0 %v3258
    %4278 = vmatprep.subr.mxu0 %v3266
    %4279 = vmatpush1.msra.mxu0 %v3265
    %4280 = vmatprep.subr.mxu0 %v3273
    %4281 = vmatpush1.msra.mxu0 %v3272
    %4282 = vmatprep.subr.mxu0 %v3280
    %4283 = vmatpush1.msra.mxu0 %v3279
    %4284 = vmatprep.subr.mxu0 %v3287
    %4285 = vmatpush1.msra.mxu0 %v3286
    %4286 = vmatprep.subr.mxu0 %v3294
    %4287 = vmatpush1.msra.mxu0 %v3293
    %4288 = vmatprep.subr.mxu0 %v3301
    %4289 = vmatpush1.msra.mxu0 %v3300
    %4290 = vmatprep.subr.mxu0 %v3308
    %4291 = vmatpush1.msra.mxu0 %v3307
    %4292 = vmatprep.subr.mxu0 %v3315
    %4293 = vmatpush1.msra.mxu0 %v3314
    %4294 = vmatprep.subr.mxu0 %v3322
    %4295 = vmatpush1.msra.mxu0 %v3321
    %4296 = vmatprep.subr.mxu0 %v3329
    %4297 = vmatpush1.msra.mxu0 %v3328
    %4298 = vmatprep.subr.mxu0 %v3336
    %4299 = vmatpush1.msra.mxu0 %v3335
    %4300 = vmatprep.subr.mxu0 %v3343
    %4301 = vmatpush1.msra.mxu0 %v3342
    %4302 = vmatprep.subr.mxu0 %v3350
    %4303 = vmatpush1.msra.mxu0 %v3349
    %4304 = vmatprep.subr.mxu0 %v3357
    %4305 = vmatpush1.msra.mxu0 %v3356
    %4306 = vmatprep.subr.mxu0 %v3364
    %4307 = vmatpush1.msra.mxu0 %v3363
    %4308 = vmatprep.subr.mxu0 %v3371
    %4309 = vmatpush1.msra.mxu0 %v3370
    %4310 = vmatprep.subr.mxu0 %v3378
    %4311 = vmatpush1.msra.mxu0 %v3377
    %4312 = vmatprep.subr.mxu0 %v3385
    %4313 = vmatpush1.msra.mxu0 %v3384
    %4314 = vmatprep.subr.mxu0 %v3392
    %4315 = vmatpush1.msra.mxu0 %v3391
    %4316 = vmatprep.subr.mxu0 %v3399
    %4317 = vmatpush1.msra.mxu0 %v3398
    %4318 = vmatprep.subr.mxu0 %v3406
    %4319 = vmatpush1.msra.mxu0 %v3405
    %4320 = vmatprep.subr.mxu0 %v3413
    %4321 = vmatpush1.msra.mxu0 %v3412
    %4322 = vmatprep.subr.mxu0 %v3420
    %4323 = vmatpush1.msra.mxu0 %v3419
    %4324 = vmatprep.subr.mxu0 %v3427
    %4325 = vmatpush1.msra.mxu0 %v3426
    %4326 = vmatprep.subr.mxu0 %v3434
    %4327 = vmatpush1.msra.mxu0 %v3433
    %4328 = vmatprep.subr.mxu0 %v3441
    %4329 = vmatpush1.msra.mxu0 %v3440
    %4330 = vmatprep.subr.mxu0 %v3448
    %4331 = vmatpush1.msra.mxu0 %v3447
    %4332 = vmatprep.mubr.f32.mxu0 %v2041
    %4333 = vmatmul.mubr.f32.gmra.mrb[0].mxu0 %v2040
    %v4334 = vpop.f32.mrb[0].mxu0
    %v4335 = vadd.f32 %v4264, %v4334
    %v4336 = vpop.f32.mrb[0].mxu0
    %v4337 = vadd.f32 %v4266, %v4336
    %4338 = vdwg.mxu0
    %4339 = vmatprep.subr.mxu0 0.0
    %4340 = vmatpush1.msra.mxu0 %v2560
    %4341 = vmatprep.subr.mxu0 0.0
    %4342 = vmatpush1.msra.mxu0 %v2567
    %4343 = vmatprep.subr.mxu0 0.0
    %4344 = vmatpush1.msra.mxu0 %v2574
    %4345 = vmatprep.subr.mxu0 0.0
    %4346 = vmatpush1.msra.mxu0 %v2581
    %4347 = vmatprep.subr.mxu0 0.0
    %4348 = vmatpush1.msra.mxu0 %v2588
    %4349 = vmatprep.subr.mxu0 0.0
    %4350 = vmatpush1.msra.mxu0 %v2595
    %4351 = vmatprep.subr.mxu0 0.0
    %4352 = vmatpush1.msra.mxu0 %v2602
    %4353 = vmatprep.subr.mxu0 0.0
    %4354 = vmatpush1.msra.mxu0 %v2609
    %4355 = vmatprep.subr.mxu0 0.0
    %4356 = vmatpush1.msra.mxu0 %v2616
    %4357 = vmatprep.subr.mxu0 0.0
    %4358 = vmatpush1.msra.mxu0 %v2623
    %4359 = vmatprep.subr.mxu0 0.0
    %4360 = vmatpush1.msra.mxu0 %v2630
    %4361 = vmatprep.subr.mxu0 0.0
    %4362 = vmatpush1.msra.mxu0 %v2637
    %4363 = vmatprep.subr.mxu0 0.0
    %4364 = vmatpush1.msra.mxu0 %v2644
    %4365 = vmatprep.subr.mxu0 0.0
    %4366 = vmatpush1.msra.mxu0 %v2651
    %4367 = vmatprep.subr.mxu0 0.0
    %4368 = vmatpush1.msra.mxu0 %v2658
    %4369 = vmatprep.subr.mxu0 0.0
    %4370 = vmatpush1.msra.mxu0 %v2665
    %4371 = vmatprep.subr.mxu0 0.0
    %4372 = vmatpush1.msra.mxu0 %v2672
    %4373 = vmatprep.subr.mxu0 0.0
    %4374 = vmatpush1.msra.mxu0 %v2679
    %4375 = vmatprep.subr.mxu0 0.0
    %4376 = vmatpush1.msra.mxu0 %v2686
    %4377 = vmatprep.subr.mxu0 0.0
    %4378 = vmatpush1.msra.mxu0 %v2693
    %4379 = vmatprep.subr.mxu0 0.0
    %4380 = vmatpush1.msra.mxu0 %v2700
    %4381 = vmatprep.subr.mxu0 0.0
    %4382 = vmatpush1.msra.mxu0 %v2707
    %4383 = vmatprep.subr.mxu0 0.0
    %4384 = vmatpush1.msra.mxu0 %v2714
    %4385 = vmatprep.subr.mxu0 0.0
    %4386 = vmatpush1.msra.mxu0 %v2721
    %4387 = vmatprep.subr.mxu0 0.0
    %4388 = vmatpush1.msra.mxu0 %v2728
    %4389 = vmatprep.subr.mxu0 0.0
    %4390 = vmatpush1.msra.mxu0 %v2735
    %4391 = vmatprep.subr.mxu0 0.0
    %4392 = vmatpush1.msra.mxu0 %v2742
    %4393 = vmatprep.subr.mxu0 0.0
    %4394 = vmatpush1.msra.mxu0 %v2749
    %4395 = vmatprep.subr.mxu0 0.0
    %4396 = vmatpush1.msra.mxu0 %v2756
    %4397 = vmatprep.subr.mxu0 0.0
    %4398 = vmatpush1.msra.mxu0 %v2763
    %4399 = vmatprep.subr.mxu0 0.0
    %4400 = vmatpush1.msra.mxu0 %v2770
    %4401 = vmatprep.subr.mxu0 0.0
    %4402 = vmatpush1.msra.mxu0 %v2777
    %4403 = vmatprep.mubr.f32.mxu0 %v2035
    %4404 = vmatmul.mubr.f32.gmra.mrb[0].mxu0 %v2034
    %v4405 = vpop.f32.mrb[0].mxu0
    %v4406 = vadd.f32 %v3479, %v4405
    %v4407 = vpop.f32.mrb[0].mxu0
    %4408 = vdwg.mxu0
    %4409 = vmatprep.subr.mxu0 0.0
    %4410 = vmatpush1.msra.mxu0 %v2784
    %4411 = vmatprep.subr.mxu0 0.0
    %4412 = vmatpush1.msra.mxu0 %v2791
    %4413 = vmatprep.subr.mxu0 0.0
    %4414 = vmatpush1.msra.mxu0 %v2798
    %4415 = vmatprep.subr.mxu0 0.0
    %4416 = vmatpush1.msra.mxu0 %v2805
    %4417 = vmatprep.subr.mxu0 0.0
    %4418 = vmatpush1.msra.mxu0 %v2812
    %4419 = vmatprep.subr.mxu0 0.0
    %4420 = vmatpush1.msra.mxu0 %v2819
    %4421 = vmatprep.subr.mxu0 0.0
    %4422 = vmatpush1.msra.mxu0 %v2826
    %4423 = vmatprep.subr.mxu0 0.0
    %4424 = vmatpush1.msra.mxu0 %v2833
    %4425 = vmatprep.subr.mxu0 0.0
    %4426 = vmatpush1.msra.mxu0 %v2840
    %4427 = vmatprep.subr.mxu0 0.0
    %4428 = vmatpush1.msra.mxu0 %v2847
    %4429 = vmatprep.subr.mxu0 0.0
    %4430 = vmatpush1.msra.mxu0 %v2854
    %4431 = vmatprep.subr.mxu0 0.0
    %4432 = vmatpush1.msra.mxu0 %v2861
    %4433 = vmatprep.subr.mxu0 0.0
    %4434 = vmatpush1.msra.mxu0 %v2868
    %4435 = vmatprep.subr.mxu0 0.0
    %4436 = vmatpush1.msra.mxu0 %v2875
    %4437 = vmatprep.subr.mxu0 0.0
    %4438 = vmatpush1.msra.mxu0 %v2882
    %4439 = vmatprep.subr.mxu0 0.0
    %4440 = vmatpush1.msra.mxu0 %v2889
    %4441 = vmatprep.subr.mxu0 0.0
    %4442 = vmatpush1.msra.mxu0 %v2896
    %4443 = vmatprep.subr.mxu0 0.0
    %4444 = vmatpush1.msra.mxu0 %v2903
    %4445 = vmatprep.subr.mxu0 0.0
    %4446 = vmatpush1.msra.mxu0 %v2910
    %4447 = vmatprep.subr.mxu0 0.0
    %4448 = vmatpush1.msra.mxu0 %v2917
    %4449 = vmatprep.subr.mxu0 0.0
    %4450 = vmatpush1.msra.mxu0 %v2924
    %4451 = vmatprep.subr.mxu0 0.0
    %4452 = vmatpush1.msra.mxu0 %v2931
    %4453 = vmatprep.subr.mxu0 0.0
    %4454 = vmatpush1.msra.mxu0 %v2938
    %4455 = vmatprep.subr.mxu0 0.0
    %4456 = vmatpush1.msra.mxu0 %v2945
    %4457 = vmatprep.subr.mxu0 0.0
    %4458 = vmatpush1.msra.mxu0 %v2952
    %4459 = vmatprep.subr.mxu0 0.0
    %4460 = vmatpush1.msra.mxu0 %v2959
    %4461 = vmatprep.subr.mxu0 0.0
    %4462 = vmatpush1.msra.mxu0 %v2966
    %4463 = vmatprep.subr.mxu0 0.0
    %4464 = vmatpush1.msra.mxu0 %v2973
    %4465 = vmatprep.subr.mxu0 0.0
    %4466 = vmatpush1.msra.mxu0 %v2980
    %4467 = vmatprep.subr.mxu0 0.0
    %4468 = vmatpush1.msra.mxu0 %v2987
    %4469 = vmatprep.subr.mxu0 0.0
    %4470 = vmatpush1.msra.mxu0 %v2994
    %4471 = vmatprep.subr.mxu0 0.0
    %4472 = vmatpush1.msra.mxu0 %v3001
    %4473 = vmatprep.mubr.f32.mxu0 %v2037
    %4474 = vmatmul.mubr.f32.gmra.mrb[0].mxu0 %v2036
    %v4475 = vpop.f32.mrb[0].mxu0
    %v4476 = vadd.f32 %v4406, %v4475
    %v4477 = vpop.f32.mrb[0].mxu0
    %4478 = vdwg.mxu0
    %4479 = vmatprep.subr.mxu0 0.0
    %4480 = vmatpush1.msra.mxu0 %v3008
    %4481 = vmatprep.subr.mxu0 0.0
    %4482 = vmatpush1.msra.mxu0 %v3015
    %4483 = vmatprep.subr.mxu0 0.0
    %4484 = vmatpush1.msra.mxu0 %v3022
    %4485 = vmatprep.subr.mxu0 0.0
    %4486 = vmatpush1.msra.mxu0 %v3029
    %4487 = vmatprep.subr.mxu0 0.0
    %4488 = vmatpush1.msra.mxu0 %v3036
    %4489 = vmatprep.subr.mxu0 0.0
    %4490 = vmatpush1.msra.mxu0 %v3043
    %4491 = vmatprep.subr.mxu0 0.0
    %4492 = vmatpush1.msra.mxu0 %v3050
    %4493 = vmatprep.subr.mxu0 0.0
    %4494 = vmatpush1.msra.mxu0 %v3057
    %4495 = vmatprep.subr.mxu0 0.0
    %4496 = vmatpush1.msra.mxu0 %v3064
    %4497 = vmatprep.subr.mxu0 0.0
    %4498 = vmatpush1.msra.mxu0 %v3071
    %4499 = vmatprep.subr.mxu0 0.0
    %4500 = vmatpush1.msra.mxu0 %v3078
    %4501 = vmatprep.subr.mxu0 0.0
    %4502 = vmatpush1.msra.mxu0 %v3085
    %4503 = vmatprep.subr.mxu0 0.0
    %4504 = vmatpush1.msra.mxu0 %v3092
    %4505 = vmatprep.subr.mxu0 0.0
    %4506 = vmatpush1.msra.mxu0 %v3099
    %4507 = vmatprep.subr.mxu0 0.0
    %4508 = vmatpush1.msra.mxu0 %v3106
    %4509 = vmatprep.subr.mxu0 0.0
    %4510 = vmatpush1.msra.mxu0 %v3113
    %4511 = vmatprep.subr.mxu0 0.0
    %4512 = vmatpush1.msra.mxu0 %v3120
    %4513 = vmatprep.subr.mxu0 0.0
    %4514 = vmatpush1.msra.mxu0 %v3127
    %4515 = vmatprep.subr.mxu0 0.0
    %4516 = vmatpush1.msra.mxu0 %v3134
    %4517 = vmatprep.subr.mxu0 0.0
    %4518 = vmatpush1.msra.mxu0 %v3141
    %4519 = vmatprep.subr.mxu0 0.0
    %4520 = vmatpush1.msra.mxu0 %v3148
    %4521 = vmatprep.subr.mxu0 0.0
    %4522 = vmatpush1.msra.mxu0 %v3155
    %4523 = vmatprep.subr.mxu0 0.0
    %4524 = vmatpush1.msra.mxu0 %v3162
    %4525 = vmatprep.subr.mxu0 0.0
    %4526 = vmatpush1.msra.mxu0 %v3169
    %4527 = vmatprep.subr.mxu0 0.0
    %4528 = vmatpush1.msra.mxu0 %v3176
    %4529 = vmatprep.subr.mxu0 0.0
    %4530 = vmatpush1.msra.mxu0 %v3183
    %4531 = vmatprep.subr.mxu0 0.0
    %4532 = vmatpush1.msra.mxu0 %v3190
    %4533 = vmatprep.subr.mxu0 0.0
    %4534 = vmatpush1.msra.mxu0 %v3197
    %4535 = vmatprep.subr.mxu0 0.0
    %4536 = vmatpush1.msra.mxu0 %v3204
    %4537 = vmatprep.subr.mxu0 0.0
    %4538 = vmatpush1.msra.mxu0 %v3211
    %4539 = vmatprep.subr.mxu0 0.0
    %4540 = vmatpush1.msra.mxu0 %v3218
    %4541 = vmatprep.subr.mxu0 0.0
    %4542 = vmatpush1.msra.mxu0 %v3225
    %4543 = vmatprep.mubr.f32.mxu0 %v2039
    %4544 = vmatmul.mubr.f32.gmra.mrb[0].mxu0 %v2038
    %v4545 = vpop.f32.mrb[0].mxu0
    %v4546 = vadd.f32 %v4476, %v4545
    %v4547 = vpop.f32.mrb[0].mxu0
    %4548 = vdwg.mxu0
    %4549 = vmatprep.subr.mxu0 0.0
    %4550 = vmatpush1.msra.mxu0 %v3232
    %4551 = vmatprep.subr.mxu0 0.0
    %4552 = vmatpush1.msra.mxu0 %v3239
    %4553 = vmatprep.subr.mxu0 0.0
    %4554 = vmatpush1.msra.mxu0 %v3246
    %4555 = vmatprep.subr.mxu0 0.0
    %4556 = vmatpush1.msra.mxu0 %v3253
    %4557 = vmatprep.subr.mxu0 0.0
    %4558 = vmatpush1.msra.mxu0 %v3260
    %4559 = vmatprep.subr.mxu0 0.0
    %4560 = vmatpush1.msra.mxu0 %v3267
    %4561 = vmatprep.subr.mxu0 0.0
    %4562 = vmatpush1.msra.mxu0 %v3274
    %4563 = vmatprep.subr.mxu0 0.0
    %4564 = vmatpush1.msra.mxu0 %v3281
    %4565 = vmatprep.subr.mxu0 0.0
    %4566 = vmatpush1.msra.mxu0 %v3288
    %4567 = vmatprep.subr.mxu0 0.0
    %4568 = vmatpush1.msra.mxu0 %v3295
    %4569 = vmatprep.subr.mxu0 0.0
    %4570 = vmatpush1.msra.mxu0 %v3302
    %4571 = vmatprep.subr.mxu0 0.0
    %4572 = vmatpush1.msra.mxu0 %v3309
    %4573 = vmatprep.subr.mxu0 0.0
    %4574 = vmatpush1.msra.mxu0 %v3316
    %4575 = vmatprep.subr.mxu0 0.0
    %4576 = vmatpush1.msra.mxu0 %v3323
    %4577 = vmatprep.subr.mxu0 0.0
    %4578 = vmatpush1.msra.mxu0 %v3330
    %4579 = vmatprep.subr.mxu0 0.0
    %4580 = vmatpush1.msra.mxu0 %v3337
    %4581 = vmatprep.subr.mxu0 0.0
    %4582 = vmatpush1.msra.mxu0 %v3344
    %4583 = vmatprep.subr.mxu0 0.0
    %4584 = vmatpush1.msra.mxu0 %v3351
    %4585 = vmatprep.subr.mxu0 0.0
    %4586 = vmatpush1.msra.mxu0 %v3358
    %4587 = vmatprep.subr.mxu0 0.0
    %4588 = vmatpush1.msra.mxu0 %v3365
    %4589 = vmatprep.subr.mxu0 0.0
    %4590 = vmatpush1.msra.mxu0 %v3372
    %4591 = vmatprep.subr.mxu0 0.0
    %4592 = vmatpush1.msra.mxu0 %v3379
    %4593 = vmatprep.subr.mxu0 0.0
    %4594 = vmatpush1.msra.mxu0 %v3386
    %4595 = vmatprep.subr.mxu0 0.0
    %4596 = vmatpush1.msra.mxu0 %v3393
    %4597 = vmatprep.subr.mxu0 0.0
    %4598 = vmatpush1.msra.mxu0 %v3400
    %4599 = vmatprep.subr.mxu0 0.0
    %4600 = vmatpush1.msra.mxu0 %v3407
    %4601 = vmatprep.subr.mxu0 0.0
    %4602 = vmatpush1.msra.mxu0 %v3414
    %4603 = vmatprep.subr.mxu0 0.0
    %4604 = vmatpush1.msra.mxu0 %v3421
    %4605 = vmatprep.subr.mxu0 0.0
    %4606 = vmatpush1.msra.mxu0 %v3428
    %4607 = vmatprep.subr.mxu0 0.0
    %4608 = vmatpush1.msra.mxu0 %v3435
    %4609 = vmatprep.subr.mxu0 0.0
    %4610 = vmatpush1.msra.mxu0 %v3442
    %4611 = vmatprep.subr.mxu0 0.0
    %4612 = vmatpush1.msra.mxu0 %v3449
    %4613 = vmatprep.mubr.f32.mxu0 %v2041
    %4614 = vmatmul.mubr.f32.gmra.mrb[0].mxu0 %v2040
    %v4615 = vpop.f32.mrb[0].mxu0
    %v4616 = vadd.f32 %v4546, %v4615
    %v4617 = vpop.f32.mrb[0].mxu0
    %4618 = vdwg.mxu0
    %v4619 = vtanh.pop %v3767
    %v4620 = vtanh.pop %v3769
    %v4621 = vtanh.pop %v4051
    %v4622 = vtanh.pop %v4053
    %v4623 = vtanh.pop %v4335
    %v4624 = vtanh.pop %v4337
    %v4625 = vtanh.pop %v4616
    %4626 = vst [vmem:[#allocation16] sm:$0xff] %v4619
    %4627 = vst [vmem:[#allocation16 + $0x8] sm:$0xff] %v4620
    %4628 = vst [vmem:[#allocation16 + $0x10] sm:$0xff] %v4621
    %4629 = vst [vmem:[#allocation16 + $0x18] sm:$0xff] %v4622
    %4630 = vst [vmem:[#allocation16 + $0x20] sm:$0xff] %v4623
    %4631 = vst [vmem:[#allocation16 + $0x28] sm:$0xff] %v4624
    %4632 = vst [vmem:[#allocation16 + $0x30] sm:$0xff] %v4625
    // Predicated region
    $region70: #{generator_forward.1} parent=1 // pred_check
      _
    $region71: #{generator_forward.1} parent=1 // pred_check_branch
      %4634 = sbr.rel (0) target = $region73
    $region72: #{generator_forward.1} parent=1 // pred_region
      %s4636 = ssub.s32 896, 896
      %4637 = vsyncadd [#allocation4], %s4636
      %s4639 = sshll.u32 [#allocation16], 4
      %s4640 = int_to_ptr.vmem [resolvable:$true] %s4639
      %4642 = dma.vmem_to_hbm [thread:$0]  %s4640, 896, %s9, [#allocation4]
    $region73: #{generator_forward.1} parent=1 // pred_fallthru
      _
    // Predicated region
    $region74: #{generator_forward.1} parent=1 // pred_check
      _
    $region75: #{generator_forward.1} parent=1 // pred_check_branch
      %4644 = sbr.rel (0) target = $region77
    $region76: #{generator_forward.1} parent=1 // pred_region
      %4645 = dma.done [#allocation4], 896
    $region77: #{generator_forward.1} parent=1 // pred_fallthru
      _
    %4646 = vsyncpa [#allocation3], 1
    %4647 = vsyncpa [#allocation6], 1
    %4648 = vsyncpa [#allocation9], 1
    %4649 = vsyncpa [#allocation12], 1
    %4650 = vsyncpa [#allocation15], 1
    %4651 = vsyncpa [#allocation4], 1

</llo_original>
